<compile_context>
chip_gen: v7x
topology: tpu7x:2x2x1
jax: 0.10.0
libtpu: 0.0.40
codegen_flags: <defaults>
</compile_context>

<pallas_src>
import jax
import jax.numpy as jnp
import numpy as np
from jax.experimental import pallas as pl
from jax.experimental.pallas import tpu as pltpu

ALPHA = 0.1          # APPNP teleport probability
BN_GAMMA = 0.9       # BatchNorm1d(1) affine weight (deterministic init)
BN_BETA = 0.05       # BatchNorm1d(1) affine bias
BN_MEAN = 0.0        # running mean
BN_VAR = 1.0         # running var
BN_EPS = 1e-5

# Fold BN (eval mode) into a single scale/shift at trace time.
_BN_SCALE = float(BN_GAMMA / np.sqrt(BN_VAR + BN_EPS))
_BN_SHIFT = float(BN_BETA - BN_MEAN * _BN_SCALE)


def _bn_relu(v):
    # acvt1: BatchNorm1d(1) eval-mode affine + ReLU + Dropout(0)  -> 2 VALU ops/elem
    return jnp.maximum(v * _BN_SCALE + _BN_SHIFT, 0.0)


def appnp_kernel(slab_ref, w1_ref, b1_ref, w2_ref, b2_ref, wc_ref, bc_ref,
                 out_ref, h1_ref, slab2_ref, h2_ref):
    a = ALPHA
    bf = jnp.bfloat16
    Kp1, tn, F = slab_ref.shape          # slot 0 = node, slots 1..K = neighbors
    K = Kp1 - 1
    H1 = w1_ref.shape[1]
    H2 = w2_ref.shape[1]

    w1 = w1_ref[...]                     # (F, H1)   bf16
    b1 = b1_ref[...]                     # (1, H1)   f32
    w2 = w2_ref[...]                     # (H1, H2)  bf16
    b2 = b2_ref[...]                     # (1, H2)   f32

    # ---- tran1 (Linear F -> H1): ONE batched MXU stream over node + K neighbors ----
    sl = slab_ref[...].reshape(Kp1 * tn, F)                      # leading-dim collapse
    h1_ref[...] = jnp.dot(sl, w1, preferred_element_type=jnp.float32) + b1

    # ---- streaming pass A over neighbor slots (app1 / acvt1 / app2 neighbor side) ----
    agg = jnp.zeros((tn, H1), jnp.float32)      # sum_k tran1(neighbor_k)
    agg_a = jnp.zeros((tn, H1), jnp.float32)    # sum_k bn_relu(tran1(neighbor_k))
    for k in range(K):
        nh_k = h1_ref[(k + 1) * tn:(k + 2) * tn, :]              # (tn, H1) f32
        r = _bn_relu(nh_k)
        agg = agg + nh_k
        agg_a = agg_a + r
        # neighbor input to tran2: (1-a)*acvt(n) + a*n   (bf16, feeds the bf16 dot)
        slab2_ref[(k + 1) * tn:(k + 2) * tn, :] = ((1.0 - a) * r + a * nh_k).astype(bf)

    # ---- node path, propagation round 1 ----
    h = h1_ref[0:tn, :]                                           # tran1(x)
    x1 = (1.0 - a) * (h + agg) + a * h                            # app1
    x2 = (1.0 - a) * (_bn_relu(x1) + agg_a) + a * h               # acvt1 + app2
    slab2_ref[0:tn, :] = x2.astype(bf)

    # ---- tran2 (Linear H1 -> H2): ONE batched MXU stream ----
    h2_ref[...] = jnp.dot(slab2_ref[...], w2,
                          preferred_element_type=jnp.float32) + b2

    # ---- streaming pass B over neighbor slots ----
    agg2 = jnp.zeros((tn, H2), jnp.float32)     # sum_k tran2(...)
    agg2a = jnp.zeros((tn, H2), jnp.float32)    # sum_k bn_relu(tran2(...))
    for k in range(K):
        nh2_k = h2_ref[(k + 1) * tn:(k + 2) * tn, :]              # (tn, H2) f32
        agg2 = agg2 + nh2_k
        agg2a = agg2a + _bn_relu(nh2_k)

    # ---- node path, propagation round 2 ----
    h2 = h2_ref[0:tn, :]                                          # tran2(x2)
    x3 = (1.0 - a) * (h2 + agg2) + a * h2                         # app1
    x4 = (1.0 - a) * (_bn_relu(x3) + agg2a) + a * h2              # acvt1 + app2

    # x[isnan(x)] = 0
    x4 = jnp.where(jnp.isnan(x4), 0.0, x4)

    # ---- classifier (Linear H2 -> C_pad), lane-dense bf16 store ----
    out = jnp.dot(x4.astype(bf), wc_ref[...],
                  preferred_element_type=jnp.float32) + bc_ref[...]
    out_ref[...] = out.astype(out_ref.dtype)


def appnp_forward(x, neighbor, params, *, tn=128):
    """x: (N, F) f32, neighbor: (N, K, F) f32 -> logits (N, C) f32."""
    N, F = x.shape
    K = neighbor.shape[1]
    w1, b1, w2, b2, wc, bc = params
    H1, H2, C = w1.shape[1], w2.shape[1], wc.shape[1]

    tn = min(tn, N)
    assert N % tn == 0, "N must be divisible by the node tile"
    assert tn % 8 == 0, "node tile must be sublane-aligned"

    # Lane-dense classifier output: zero-pad C up to a multiple of 128.
    C_pad = max(128, ((C + 127) // 128) * 128)
    wc_pad = jnp.zeros((H2, C_pad), jnp.bfloat16).at[:, :C].set(wc.astype(jnp.bfloat16))
    bc_pad = jnp.zeros((1, C_pad), jnp.float32).at[:, :C].set(bc.astype(jnp.float32))

    # Slot-major slab: slot 0 = node features, slots 1..K = neighbors.  Each grid step
    # then streams K+1 contiguous (tn, F) tiles from one input and the node x needs no
    # separate DMA; per-node segment-sums are plain VPU adds.
    nb = jnp.transpose(neighbor, (1, 0, 2))                    # (K, N, F)
    slab = jnp.concatenate([x[None, :, :], nb], axis=0).astype(jnp.bfloat16)

    w1b, w2b = w1.astype(jnp.bfloat16), w2.astype(jnp.bfloat16)
    b1f, b2f = b1.astype(jnp.float32), b2.astype(jnp.float32)

    Kp1 = K + 1
    out_pad = pl.pallas_call(
        appnp_kernel,
        out_shape=jax.ShapeDtypeStruct((N, C_pad), jnp.bfloat16),
        grid_spec=pltpu.PrefetchScalarGridSpec(
            num_scalar_prefetch=0,
            grid=(N // tn,),
            in_specs=[
                pl.BlockSpec((Kp1, tn, F), lambda i: (0, i, 0)),  # node+neighbor slab
                pl.BlockSpec((F, H1), lambda i: (0, 0)),          # W1 (resident)
                pl.BlockSpec((1, H1), lambda i: (0, 0)),          # b1
                pl.BlockSpec((H1, H2), lambda i: (0, 0)),         # W2 (resident)
                pl.BlockSpec((1, H2), lambda i: (0, 0)),          # b2
                pl.BlockSpec((H2, C_pad), lambda i: (0, 0)),      # Wc (padded, resident)
                pl.BlockSpec((1, C_pad), lambda i: (0, 0)),       # bc (padded)
            ],
            out_specs=pl.BlockSpec((tn, C_pad), lambda i: (i, 0)),
            scratch_shapes=[
                pltpu.VMEM((Kp1 * tn, H1), jnp.float32),    # tran1 output (all slots)
                pltpu.VMEM((Kp1 * tn, H1), jnp.bfloat16),   # tran2 input slab
                pltpu.VMEM((Kp1 * tn, H2), jnp.float32),    # tran2 output (all slots)
            ],
        ),
        compiler_params=pltpu.CompilerParams(
            dimension_semantics=("parallel",),
        ),
    )(slab, w1b, b1f, w2b, b2f, wc_pad, bc_pad)

    return out_pad[:, :C].astype(jnp.float32)


def appnp_reference(x, nb, params):
    """Pure-JAX reference mirroring the kernel (bf16 matmul inputs, f32 accumulation,
    bf16 final store)."""
    w1, b1, w2, b2, wc, bc = params
    a = ALPHA
    bf = jnp.bfloat16
    h = jnp.dot(x.astype(bf), w1.astype(bf), preferred_element_type=jnp.float32) + b1
    nh = jnp.einsum("nkf,fh->nkh", nb.astype(bf), w1.astype(bf),
                    preferred_element_type=jnp.float32) + b1
    x1 = (1 - a) * (h + nh.sum(axis=1)) + a * h
    x1a, nha = _bn_relu(x1), _bn_relu(nh)
    x2 = (1 - a) * (x1a + nha.sum(axis=1)) + a * h
    nb2 = (1 - a) * nha + a * nh
    h2 = jnp.dot(x2.astype(bf), w2.astype(bf), preferred_element_type=jnp.float32) + b2
    nh2 = jnp.einsum("nkh,hm->nkm", nb2.astype(bf), w2.astype(bf),
                     preferred_element_type=jnp.float32) + b2
    x3 = (1 - a) * (h2 + nh2.sum(axis=1)) + a * h2
    x3a, nh2a = _bn_relu(x3), _bn_relu(nh2)
    x4 = (1 - a) * (x3a + nh2a.sum(axis=1)) + a * h2
    x4 = jnp.where(jnp.isnan(x4), 0.0, x4)
    out = jnp.dot(x4.astype(bf), wc.astype(bf), preferred_element_type=jnp.float32) + bc
    return out.astype(jnp.bfloat16).astype(jnp.float32)


if __name__ == "__main__":
    N, K, F = 512, 4, 16         # nodes, neighbors per node, feat_len
    H1, H2, C = 64, 32, 8        # hidden=[64, 32], num_class=8
    TN = 128                     # node tile -> grid of 4 (>= 2 steps per TensorCore)

    key = jax.random.PRNGKey(0)
    ks = jax.random.split(key, 8)
    x = jax.random.normal(ks[0], (N, F), jnp.float32)
    neighbor = jax.random.normal(ks[1], (N, K, F), jnp.float32)
    w1 = jax.random.normal(ks[2], (F, H1), jnp.float32) * (1.0 / np.sqrt(F))
    b1 = jax.random.normal(ks[3], (1, H1), jnp.float32) * 0.1
    w2 = jax.random.normal(ks[4], (H1, H2), jnp.float32) * (1.0 / np.sqrt(H1))
    b2 = jax.random.normal(ks[5], (1, H2), jnp.float32) * 0.1
    wc = jax.random.normal(ks[6], (H2, C), jnp.float32) * (1.0 / np.sqrt(H2))
    bc = jax.random.normal(ks[7], (1, C), jnp.float32) * 0.1
    params = (w1, b1, w2, b2, wc, bc)

    out = appnp_forward(x, neighbor, params, tn=TN)
    jax.block_until_ready(out)

    ref = appnp_reference(x, neighbor, params)
    np.testing.assert_allclose(np.asarray(out), np.asarray(ref),
                               rtol=1e-2, atol=2e-2)
    print("KERNEL_OK")
</pallas_src>

<mosaic_0001>
module attributes {stable_mosaic.version = 11 : i64} {
  func.func @appnp_kernel(%arg0: i32, %arg1: memref<5x128x16xbf16, #tpu.memory_space<vmem>>, %arg2: memref<16x64xbf16, #tpu.memory_space<vmem>>, %arg3: memref<1x64xf32, #tpu.memory_space<vmem>>, %arg4: memref<64x32xbf16, #tpu.memory_space<vmem>>, %arg5: memref<1x32xf32, #tpu.memory_space<vmem>>, %arg6: memref<32x128xbf16, #tpu.memory_space<vmem>>, %arg7: memref<1x128xf32, #tpu.memory_space<vmem>>, %arg8: memref<128x128xbf16, #tpu.memory_space<vmem>>, %arg9: memref<640x64xf32, #tpu.memory_space<vmem>>, %arg10: memref<640x64xbf16, #tpu.memory_space<vmem>>, %arg11: memref<640x32xf32, #tpu.memory_space<vmem>>) attributes {dimension_semantics = [#tpu.dimension_semantics<parallel>], iteration_bounds = array<i64: 4>, scalar_prefetch = 0 : i64, scratch_operands = 3 : i64, tpu.core_type = #tpu.core_type<tc>, window_params = [{transform_indices = @transform_0, window_bounds = array<i64: 5, 128, 16>}, {pipeline_mode = #tpu.pipeline_mode<synchronous>, transform_indices = @transform_1, window_bounds = array<i64: 16, 64>}, {pipeline_mode = #tpu.pipeline_mode<synchronous>, transform_indices = @transform_2, window_bounds = array<i64: 1, 64>}, {pipeline_mode = #tpu.pipeline_mode<synchronous>, transform_indices = @transform_3, window_bounds = array<i64: 64, 32>}, {pipeline_mode = #tpu.pipeline_mode<synchronous>, transform_indices = @transform_4, window_bounds = array<i64: 1, 32>}, {pipeline_mode = #tpu.pipeline_mode<synchronous>, transform_indices = @transform_5, window_bounds = array<i64: 32, 128>}, {pipeline_mode = #tpu.pipeline_mode<synchronous>, transform_indices = @transform_6, window_bounds = array<i64: 1, 128>}, {transform_indices = @transform_7, window_bounds = array<i64: 128, 128>}]} {
    %c0 = arith.constant 0 : index
    %c0_0 = arith.constant 0 : index
    %0 = vector.load %arg2[%c0, %c0_0] : memref<16x64xbf16, #tpu.memory_space<vmem>>, vector<16x64xbf16>
    %c0_1 = arith.constant 0 : index
    %c0_2 = arith.constant 0 : index
    %1 = vector.load %arg3[%c0_1, %c0_2] : memref<1x64xf32, #tpu.memory_space<vmem>>, vector<1x64xf32>
    %c0_3 = arith.constant 0 : index
    %c0_4 = arith.constant 0 : index
    %2 = vector.load %arg4[%c0_3, %c0_4] : memref<64x32xbf16, #tpu.memory_space<vmem>>, vector<64x32xbf16>
    %c0_5 = arith.constant 0 : index
    %c0_6 = arith.constant 0 : index
    %3 = vector.load %arg5[%c0_5, %c0_6] : memref<1x32xf32, #tpu.memory_space<vmem>>, vector<1x32xf32>
    %c0_7 = arith.constant 0 : index
    %c0_8 = arith.constant 0 : index
    %c0_9 = arith.constant 0 : index
    %4 = vector.load %arg1[%c0_7, %c0_8, %c0_9] : memref<5x128x16xbf16, #tpu.memory_space<vmem>>, vector<5x128x16xbf16>
    %5 = vector.shape_cast %4 : vector<5x128x16xbf16> to vector<640x16xbf16>
    %cst = arith.constant dense<0.000000e+00> : vector<640x64xf32>
    %6 = tpu.matmul %5, %0, %cst {dimension_numbers = #tpu.dot_dimension_numbers<[1], [0], [0], [1], [0, 0, 1, 1], [], []>} : vector<640x16xbf16>, vector<16x64xbf16>, vector<640x64xf32> -> vector<640x64xf32>
    %7 = vector.broadcast %1 : vector<1x64xf32> to vector<640x64xf32>
    %8 = arith.addf %6, %7 : vector<640x64xf32>
    %c0_10 = arith.constant 0 : index
    %c0_11 = arith.constant 0 : index
    %9 = vector.load %arg9[%c0_10, %c0_11] : memref<640x64xf32, #tpu.memory_space<vmem>>, vector<640x64xf32>
    tpu.vector_store %arg9[%c0_10, %c0_11], %8 {strides = array<i32>} : memref<640x64xf32, #tpu.memory_space<vmem>>, vector<640x64xf32>,
    %cst_12 = arith.constant 0.000000e+00 : f32
    %10 = vector.broadcast %cst_12 : f32 to vector<128x64xf32>
    %cst_13 = arith.constant 0.000000e+00 : f32
    %11 = vector.broadcast %cst_13 : f32 to vector<128x64xf32>
    %c128 = arith.constant 128 : index
    %c0_14 = arith.constant 0 : index
    %12 = vector.load %arg9[%c128, %c0_14] : memref<640x64xf32, #tpu.memory_space<vmem>>, vector<128x64xf32>
    %cst_15 = arith.constant 0.899995505 : f32
    %13 = vector.broadcast %cst_15 : f32 to vector<128x64xf32>
    %14 = arith.mulf %12, %13 : vector<128x64xf32>
    %cst_16 = arith.constant 5.000000e-02 : f32
    %15 = vector.broadcast %cst_16 : f32 to vector<128x64xf32>
    %16 = arith.addf %14, %15 : vector<128x64xf32>
    %cst_17 = arith.constant 0.000000e+00 : f32
    %17 = vector.broadcast %cst_17 : f32 to vector<128x64xf32>
    %18 = arith.maximumf %16, %17 : vector<128x64xf32>
    %19 = arith.addf %10, %12 : vector<128x64xf32>
    %20 = arith.addf %11, %18 : vector<128x64xf32>
    %cst_18 = arith.constant 0.899999976 : f32
    %21 = vector.broadcast %cst_18 : f32 to vector<128x64xf32>
    %22 = arith.mulf %21, %18 : vector<128x64xf32>
    %cst_19 = arith.constant 1.000000e-01 : f32
    %23 = vector.broadcast %cst_19 : f32 to vector<128x64xf32>
    %24 = arith.mulf %23, %12 : vector<128x64xf32>
    %25 = arith.addf %22, %24 : vector<128x64xf32>
    %26 = arith.truncf %25 : vector<128x64xf32> to vector<128x64xbf16>
    %c128_20 = arith.constant 128 : index
    %c0_21 = arith.constant 0 : index
    %27 = vector.load %arg10[%c128_20, %c0_21] : memref<640x64xbf16, #tpu.memory_space<vmem>>, vector<128x64xbf16>
    tpu.vector_store %arg10[%c128_20, %c0_21], %26 {strides = array<i32>} : memref<640x64xbf16, #tpu.memory_space<vmem>>, vector<128x64xbf16>,
    %c256 = arith.constant 256 : index
    %c0_22 = arith.constant 0 : index
    %28 = vector.load %arg9[%c256, %c0_22] : memref<640x64xf32, #tpu.memory_space<vmem>>, vector<128x64xf32>
    %cst_23 = arith.constant 0.899995505 : f32
    %29 = vector.broadcast %cst_23 : f32 to vector<128x64xf32>
    %30 = arith.mulf %28, %29 : vector<128x64xf32>
    %cst_24 = arith.constant 5.000000e-02 : f32
    %31 = vector.broadcast %cst_24 : f32 to vector<128x64xf32>
    %32 = arith.addf %30, %31 : vector<128x64xf32>
    %cst_25 = arith.constant 0.000000e+00 : f32
    %33 = vector.broadcast %cst_25 : f32 to vector<128x64xf32>
    %34 = arith.maximumf %32, %33 : vector<128x64xf32>
    %35 = arith.addf %19, %28 : vector<128x64xf32>
    %36 = arith.addf %20, %34 : vector<128x64xf32>
    %cst_26 = arith.constant 0.899999976 : f32
    %37 = vector.broadcast %cst_26 : f32 to vector<128x64xf32>
    %38 = arith.mulf %37, %34 : vector<128x64xf32>
    %cst_27 = arith.constant 1.000000e-01 : f32
    %39 = vector.broadcast %cst_27 : f32 to vector<128x64xf32>
    %40 = arith.mulf %39, %28 : vector<128x64xf32>
    %41 = arith.addf %38, %40 : vector<128x64xf32>
    %42 = arith.truncf %41 : vector<128x64xf32> to vector<128x64xbf16>
    %c256_28 = arith.constant 256 : index
    %c0_29 = arith.constant 0 : index
    %43 = vector.load %arg10[%c256_28, %c0_29] : memref<640x64xbf16, #tpu.memory_space<vmem>>, vector<128x64xbf16>
    tpu.vector_store %arg10[%c256_28, %c0_29], %42 {strides = array<i32>} : memref<640x64xbf16, #tpu.memory_space<vmem>>, vector<128x64xbf16>,
    %c384 = arith.constant 384 : index
    %c0_30 = arith.constant 0 : index
    %44 = vector.load %arg9[%c384, %c0_30] : memref<640x64xf32, #tpu.memory_space<vmem>>, vector<128x64xf32>
    %cst_31 = arith.constant 0.899995505 : f32
    %45 = vector.broadcast %cst_31 : f32 to vector<128x64xf32>
    %46 = arith.mulf %44, %45 : vector<128x64xf32>
    %cst_32 = arith.constant 5.000000e-02 : f32
    %47 = vector.broadcast %cst_32 : f32 to vector<128x64xf32>
    %48 = arith.addf %46, %47 : vector<128x64xf32>
    %cst_33 = arith.constant 0.000000e+00 : f32
    %49 = vector.broadcast %cst_33 : f32 to vector<128x64xf32>
    %50 = arith.maximumf %48, %49 : vector<128x64xf32>
    %51 = arith.addf %35, %44 : vector<128x64xf32>
    %52 = arith.addf %36, %50 : vector<128x64xf32>
    %cst_34 = arith.constant 0.899999976 : f32
    %53 = vector.broadcast %cst_34 : f32 to vector<128x64xf32>
    %54 = arith.mulf %53, %50 : vector<128x64xf32>
    %cst_35 = arith.constant 1.000000e-01 : f32
    %55 = vector.broadcast %cst_35 : f32 to vector<128x64xf32>
    %56 = arith.mulf %55, %44 : vector<128x64xf32>
    %57 = arith.addf %54, %56 : vector<128x64xf32>
    %58 = arith.truncf %57 : vector<128x64xf32> to vector<128x64xbf16>
    %c384_36 = arith.constant 384 : index
    %c0_37 = arith.constant 0 : index
    %59 = vector.load %arg10[%c384_36, %c0_37] : memref<640x64xbf16, #tpu.memory_space<vmem>>, vector<128x64xbf16>
    tpu.vector_store %arg10[%c384_36, %c0_37], %58 {strides = array<i32>} : memref<640x64xbf16, #tpu.memory_space<vmem>>, vector<128x64xbf16>,
    %c512 = arith.constant 512 : index
    %c0_38 = arith.constant 0 : index
    %60 = vector.load %arg9[%c512, %c0_38] : memref<640x64xf32, #tpu.memory_space<vmem>>, vector<128x64xf32>
    %cst_39 = arith.constant 0.899995505 : f32
    %61 = vector.broadcast %cst_39 : f32 to vector<128x64xf32>
    %62 = arith.mulf %60, %61 : vector<128x64xf32>
    %cst_40 = arith.constant 5.000000e-02 : f32
    %63 = vector.broadcast %cst_40 : f32 to vector<128x64xf32>
    %64 = arith.addf %62, %63 : vector<128x64xf32>
    %cst_41 = arith.constant 0.000000e+00 : f32
    %65 = vector.broadcast %cst_41 : f32 to vector<128x64xf32>
    %66 = arith.maximumf %64, %65 : vector<128x64xf32>
    %67 = arith.addf %51, %60 : vector<128x64xf32>
    %68 = arith.addf %52, %66 : vector<128x64xf32>
    %cst_42 = arith.constant 0.899999976 : f32
    %69 = vector.broadcast %cst_42 : f32 to vector<128x64xf32>
    %70 = arith.mulf %69, %66 : vector<128x64xf32>
    %cst_43 = arith.constant 1.000000e-01 : f32
    %71 = vector.broadcast %cst_43 : f32 to vector<128x64xf32>
    %72 = arith.mulf %71, %60 : vector<128x64xf32>
    %73 = arith.addf %70, %72 : vector<128x64xf32>
    %74 = arith.truncf %73 : vector<128x64xf32> to vector<128x64xbf16>
    %c512_44 = arith.constant 512 : index
    %c0_45 = arith.constant 0 : index
    %75 = vector.load %arg10[%c512_44, %c0_45] : memref<640x64xbf16, #tpu.memory_space<vmem>>, vector<128x64xbf16>
    tpu.vector_store %arg10[%c512_44, %c0_45], %74 {strides = array<i32>} : memref<640x64xbf16, #tpu.memory_space<vmem>>, vector<128x64xbf16>,
    %c0_46 = arith.constant 0 : index
    %c0_47 = arith.constant 0 : index
    %76 = vector.load %arg9[%c0_46, %c0_47] : memref<640x64xf32, #tpu.memory_space<vmem>>, vector<128x64xf32>
    %77 = arith.addf %76, %67 : vector<128x64xf32>
    %cst_48 = arith.constant 0.899999976 : f32
    %78 = vector.broadcast %cst_48 : f32 to vector<128x64xf32>
    %79 = arith.mulf %78, %77 : vector<128x64xf32>
    %cst_49 = arith.constant 1.000000e-01 : f32
    %80 = vector.broadcast %cst_49 : f32 to vector<128x64xf32>
    %81 = arith.mulf %80, %76 : vector<128x64xf32>
    %82 = arith.addf %79, %81 : vector<128x64xf32>
    %cst_50 = arith.constant 0.899995505 : f32
    %83 = vector.broadcast %cst_50 : f32 to vector<128x64xf32>
    %84 = arith.mulf %82, %83 : vector<128x64xf32>
    %cst_51 = arith.constant 5.000000e-02 : f32
    %85 = vector.broadcast %cst_51 : f32 to vector<128x64xf32>
    %86 = arith.addf %84, %85 : vector<128x64xf32>
    %cst_52 = arith.constant 0.000000e+00 : f32
    %87 = vector.broadcast %cst_52 : f32 to vector<128x64xf32>
    %88 = arith.maximumf %86, %87 : vector<128x64xf32>
    %89 = arith.addf %88, %68 : vector<128x64xf32>
    %cst_53 = arith.constant 0.899999976 : f32
    %90 = vector.broadcast %cst_53 : f32 to vector<128x64xf32>
    %91 = arith.mulf %90, %89 : vector<128x64xf32>
    %cst_54 = arith.constant 1.000000e-01 : f32
    %92 = vector.broadcast %cst_54 : f32 to vector<128x64xf32>
    %93 = arith.mulf %92, %76 : vector<128x64xf32>
    %94 = arith.addf %91, %93 : vector<128x64xf32>
    %95 = arith.truncf %94 : vector<128x64xf32> to vector<128x64xbf16>
    %c0_55 = arith.constant 0 : index
    %c0_56 = arith.constant 0 : index
    %96 = vector.load %arg10[%c0_55, %c0_56] : memref<640x64xbf16, #tpu.memory_space<vmem>>, vector<128x64xbf16>
    tpu.vector_store %arg10[%c0_55, %c0_56], %95 {strides = array<i32>} : memref<640x64xbf16, #tpu.memory_space<vmem>>, vector<128x64xbf16>,
    %c0_57 = arith.constant 0 : index
    %c0_58 = arith.constant 0 : index
    %97 = vector.load %arg10[%c0_57, %c0_58] : memref<640x64xbf16, #tpu.memory_space<vmem>>, vector<640x64xbf16>
    %cst_59 = arith.constant dense<0.000000e+00> : vector<640x32xf32>
    %98 = tpu.matmul %97, %2, %cst_59 {dimension_numbers = #tpu.dot_dimension_numbers<[1], [0], [0], [1], [0, 0, 1, 1], [], []>} : vector<640x64xbf16>, vector<64x32xbf16>, vector<640x32xf32> -> vector<640x32xf32>
    %99 = vector.broadcast %3 : vector<1x32xf32> to vector<640x32xf32>
    %100 = arith.addf %98, %99 : vector<640x32xf32>
    %c0_60 = arith.constant 0 : index
    %c0_61 = arith.constant 0 : index
    %101 = vector.load %arg11[%c0_60, %c0_61] : memref<640x32xf32, #tpu.memory_space<vmem>>, vector<640x32xf32>
    tpu.vector_store %arg11[%c0_60, %c0_61], %100 {strides = array<i32>} : memref<640x32xf32, #tpu.memory_space<vmem>>, vector<640x32xf32>,
    %cst_62 = arith.constant 0.000000e+00 : f32
    %102 = vector.broadcast %cst_62 : f32 to vector<128x32xf32>
    %cst_63 = arith.constant 0.000000e+00 : f32
    %103 = vector.broadcast %cst_63 : f32 to vector<128x32xf32>
    %c128_64 = arith.constant 128 : index
    %c0_65 = arith.constant 0 : index
    %104 = vector.load %arg11[%c128_64, %c0_65] : memref<640x32xf32, #tpu.memory_space<vmem>>, vector<128x32xf32>
    %105 = arith.addf %102, %104 : vector<128x32xf32>
    %cst_66 = arith.constant 0.899995505 : f32
    %106 = vector.broadcast %cst_66 : f32 to vector<128x32xf32>
    %107 = arith.mulf %104, %106 : vector<128x32xf32>
    %cst_67 = arith.constant 5.000000e-02 : f32
    %108 = vector.broadcast %cst_67 : f32 to vector<128x32xf32>
    %109 = arith.addf %107, %108 : vector<128x32xf32>
    %cst_68 = arith.constant 0.000000e+00 : f32
    %110 = vector.broadcast %cst_68 : f32 to vector<128x32xf32>
    %111 = arith.maximumf %109, %110 : vector<128x32xf32>
    %112 = arith.addf %103, %111 : vector<128x32xf32>
    %c256_69 = arith.constant 256 : index
    %c0_70 = arith.constant 0 : index
    %113 = vector.load %arg11[%c256_69, %c0_70] : memref<640x32xf32, #tpu.memory_space<vmem>>, vector<128x32xf32>
    %114 = arith.addf %105, %113 : vector<128x32xf32>
    %cst_71 = arith.constant 0.899995505 : f32
    %115 = vector.broadcast %cst_71 : f32 to vector<128x32xf32>
    %116 = arith.mulf %113, %115 : vector<128x32xf32>
    %cst_72 = arith.constant 5.000000e-02 : f32
    %117 = vector.broadcast %cst_72 : f32 to vector<128x32xf32>
    %118 = arith.addf %116, %117 : vector<128x32xf32>
    %cst_73 = arith.constant 0.000000e+00 : f32
    %119 = vector.broadcast %cst_73 : f32 to vector<128x32xf32>
    %120 = arith.maximumf %118, %119 : vector<128x32xf32>
    %121 = arith.addf %112, %120 : vector<128x32xf32>
    %c384_74 = arith.constant 384 : index
    %c0_75 = arith.constant 0 : index
    %122 = vector.load %arg11[%c384_74, %c0_75] : memref<640x32xf32, #tpu.memory_space<vmem>>, vector<128x32xf32>
    %123 = arith.addf %114, %122 : vector<128x32xf32>
    %cst_76 = arith.constant 0.899995505 : f32
    %124 = vector.broadcast %cst_76 : f32 to vector<128x32xf32>
    %125 = arith.mulf %122, %124 : vector<128x32xf32>
    %cst_77 = arith.constant 5.000000e-02 : f32
    %126 = vector.broadcast %cst_77 : f32 to vector<128x32xf32>
    %127 = arith.addf %125, %126 : vector<128x32xf32>
    %cst_78 = arith.constant 0.000000e+00 : f32
    %128 = vector.broadcast %cst_78 : f32 to vector<128x32xf32>
    %129 = arith.maximumf %127, %128 : vector<128x32xf32>
    %130 = arith.addf %121, %129 : vector<128x32xf32>
    %c512_79 = arith.constant 512 : index
    %c0_80 = arith.constant 0 : index
    %131 = vector.load %arg11[%c512_79, %c0_80] : memref<640x32xf32, #tpu.memory_space<vmem>>, vector<128x32xf32>
    %132 = arith.addf %123, %131 : vector<128x32xf32>
    %cst_81 = arith.constant 0.899995505 : f32
    %133 = vector.broadcast %cst_81 : f32 to vector<128x32xf32>
    %134 = arith.mulf %131, %133 : vector<128x32xf32>
    %cst_82 = arith.constant 5.000000e-02 : f32
    %135 = vector.broadcast %cst_82 : f32 to vector<128x32xf32>
    %136 = arith.addf %134, %135 : vector<128x32xf32>
    %cst_83 = arith.constant 0.000000e+00 : f32
    %137 = vector.broadcast %cst_83 : f32 to vector<128x32xf32>
    %138 = arith.maximumf %136, %137 : vector<128x32xf32>
    %139 = arith.addf %130, %138 : vector<128x32xf32>
    %c0_84 = arith.constant 0 : index
    %c0_85 = arith.constant 0 : index
    %140 = vector.load %arg11[%c0_84, %c0_85] : memref<640x32xf32, #tpu.memory_space<vmem>>, vector<128x32xf32>
    %141 = arith.addf %140, %132 : vector<128x32xf32>
    %cst_86 = arith.constant 0.899999976 : f32
    %142 = vector.broadcast %cst_86 : f32 to vector<128x32xf32>
    %143 = arith.mulf %142, %141 : vector<128x32xf32>
    %cst_87 = arith.constant 1.000000e-01 : f32
    %144 = vector.broadcast %cst_87 : f32 to vector<128x32xf32>
    %145 = arith.mulf %144, %140 : vector<128x32xf32>
    %146 = arith.addf %143, %145 : vector<128x32xf32>
    %cst_88 = arith.constant 0.899995505 : f32
    %147 = vector.broadcast %cst_88 : f32 to vector<128x32xf32>
    %148 = arith.mulf %146, %147 : vector<128x32xf32>
    %cst_89 = arith.constant 5.000000e-02 : f32
    %149 = vector.broadcast %cst_89 : f32 to vector<128x32xf32>
    %150 = arith.addf %148, %149 : vector<128x32xf32>
    %cst_90 = arith.constant 0.000000e+00 : f32
    %151 = vector.broadcast %cst_90 : f32 to vector<128x32xf32>
    %152 = arith.maximumf %150, %151 : vector<128x32xf32>
    %153 = arith.addf %152, %139 : vector<128x32xf32>
    %cst_91 = arith.constant 0.899999976 : f32
    %154 = vector.broadcast %cst_91 : f32 to vector<128x32xf32>
    %155 = arith.mulf %154, %153 : vector<128x32xf32>
    %cst_92 = arith.constant 1.000000e-01 : f32
    %156 = vector.broadcast %cst_92 : f32 to vector<128x32xf32>
    %157 = arith.mulf %156, %140 : vector<128x32xf32>
    %158 = arith.addf %155, %157 : vector<128x32xf32>
    %159 = arith.cmpf one, %158, %158 : vector<128x32xf32>
    %cst_93 = arith.constant 0.000000e+00 : f32
    %160 = vector.broadcast %cst_93 : f32 to vector<128x32xf32>
    %161 = arith.select %159, %160, %158 : vector<128x32xi1>, vector<128x32xf32>
    %162 = arith.truncf %161 : vector<128x32xf32> to vector<128x32xbf16>
    %c0_94 = arith.constant 0 : index
    %c0_95 = arith.constant 0 : index
    %163 = vector.load %arg6[%c0_94, %c0_95] : memref<32x128xbf16, #tpu.memory_space<vmem>>, vector<32x128xbf16>
    %cst_96 = arith.constant dense<0.000000e+00> : vector<128x128xf32>
    %164 = tpu.matmul %162, %163, %cst_96 {dimension_numbers = #tpu.dot_dimension_numbers<[1], [0], [0], [1], [0, 0, 1, 1], [], []>} : vector<128x32xbf16>, vector<32x128xbf16>, vector<128x128xf32> -> vector<128x128xf32>
    %c0_97 = arith.constant 0 : index
    %c0_98 = arith.constant 0 : index
    %165 = vector.load %arg7[%c0_97, %c0_98] : memref<1x128xf32, #tpu.memory_space<vmem>>, vector<1x128xf32>
    %166 = vector.broadcast %165 : vector<1x128xf32> to vector<128x128xf32>
    %167 = arith.addf %164, %166 : vector<128x128xf32>
    %168 = arith.truncf %167 : vector<128x128xf32> to vector<128x128xbf16>
    %c0_99 = arith.constant 0 : index
    %c0_100 = arith.constant 0 : index
    %169 = vector.load %arg8[%c0_99, %c0_100] : memref<128x128xbf16, #tpu.memory_space<vmem>>, vector<128x128xbf16>
    tpu.vector_store %arg8[%c0_99, %c0_100], %168 {strides = array<i32>} : memref<128x128xbf16, #tpu.memory_space<vmem>>, vector<128x128xbf16>,
    return
  }
  func.func @transform_0(%arg0: i32) -> (i32, i32, i32) {
    %c0_i32 = arith.constant 0 : i32
    %c0_i32_0 = arith.constant 0 : i32
    %c0_i32_1 = arith.constant 0 : i32
    return %c0_i32, %arg0, %c0_i32_0 : i32, i32, i32
  }
  func.func @transform_1(%arg0: i32) -> (i32, i32) {
    %c0_i32 = arith.constant 0 : i32
    %c0_i32_0 = arith.constant 0 : i32
    %c0_i32_1 = arith.constant 0 : i32
    return %c0_i32, %c0_i32_0 : i32, i32
  }
  func.func @transform_2(%arg0: i32) -> (i32, i32) {
    %c0_i32 = arith.constant 0 : i32
    %c0_i32_0 = arith.constant 0 : i32
    %c0_i32_1 = arith.constant 0 : i32
    return %c0_i32, %c0_i32_0 : i32, i32
  }
  func.func @transform_3(%arg0: i32) -> (i32, i32) {
    %c0_i32 = arith.constant 0 : i32
    %c0_i32_0 = arith.constant 0 : i32
    %c0_i32_1 = arith.constant 0 : i32
    return %c0_i32, %c0_i32_0 : i32, i32
  }
  func.func @transform_4(%arg0: i32) -> (i32, i32) {
    %c0_i32 = arith.constant 0 : i32
    %c0_i32_0 = arith.constant 0 : i32
    %c0_i32_1 = arith.constant 0 : i32
    return %c0_i32, %c0_i32_0 : i32, i32
  }
  func.func @transform_5(%arg0: i32) -> (i32, i32) {
    %c0_i32 = arith.constant 0 : i32
    %c0_i32_0 = arith.constant 0 : i32
    %c0_i32_1 = arith.constant 0 : i32
    return %c0_i32, %c0_i32_0 : i32, i32
  }
  func.func @transform_6(%arg0: i32) -> (i32, i32) {
    %c0_i32 = arith.constant 0 : i32
    %c0_i32_0 = arith.constant 0 : i32
    %c0_i32_1 = arith.constant 0 : i32
    return %c0_i32, %c0_i32_0 : i32, i32
  }
  func.func @transform_7(%arg0: i32) -> (i32, i32) {
    %c0_i32 = arith.constant 0 : i32
    %c0_i32_0 = arith.constant 0 : i32
    return %arg0, %c0_i32 : i32, i32
  }
}

</mosaic_0001>

<llo_original>
// kernel: tpu_custom_call.1
$region0: #{tpu_custom_call.1}
  #allocation0 [shape = 'u32[]', space=smem, size = 0x4, offset = 0x4, fixed_abs, tag = 'smem constant byte address 0x4 - core index']
  #allocation1 [shape = 'u32[144,128]{1,0:T(1,128)}', space=vmem, size = 0x12000, scoped, tag = 'internal scratch']
  #allocation2 [shape = 'f32[640,64]{1,0:T(8,128)}', space=vmem, size = 0x50000, scoped, tag = 'scratch operand']
  #allocation3 [shape = 'bf16[640,64]{1,0:T(16,128)(2,1)}', space=vmem, size = 0x28000, scoped, tag = 'scratch operand']
  #allocation4 [shape = 'f32[640,32]{1,0:T(8,128)}', space=vmem, size = 0x50000, scoped, tag = 'scratch operand']
  %s0 = inlined_call_operand.vmem [shape: bf16[5,512,16], index: 0, kind: input, shape index: {}]
  %s1 = inlined_call_operand.vmem [shape: bf16[16,64], index: 1, kind: input, shape index: {}]
  %s2 = inlined_call_operand.vmem [shape: f32[1,64], index: 2, kind: input, shape index: {}]
  %s3 = inlined_call_operand.vmem [shape: bf16[64,32], index: 3, kind: input, shape index: {}]
  %s4 = inlined_call_operand.vmem [shape: f32[1,32], index: 4, kind: input, shape index: {}]
  %s5 = inlined_call_operand.vmem [shape: bf16[32,128], index: 5, kind: input, shape index: {}]
  %s6 = inlined_call_operand.vmem [shape: f32[1,128], index: 6, kind: input, shape index: {}]
  %s7 = inlined_call_operand.hbm [shape: bf16[512,128], index: 7, kind: output, shape index: {}]
  %s8 = sld [smem:[#allocation0]]
  $region102: #{tpu_custom_call.1} parent=0
    _
  %s10 = ssub.s32 1, %s8
  %s11 = scalar_select 0, %s10, %s8
  $region1: #{tpu_custom_call.1} parent=0
    #allocation5 [shape = 'u8[327680]{0}', space=vmem, size = 0x50000, scoped, tag = 'input window, operand 0']
    #allocation6 [shape = 'u8[65536]{0}', space=vmem, size = 0x10000, scoped, tag = 'output window, operand 0']
    #allocation7 [shape = 's32[2]{0}', space=sflag, size = 0x8, scoped, tag = 'scoped memory for tpu_custom_call.1']
    %12 = vsyncpa [#allocation7], 0
    %s13 = scalar_lea.sflag [#allocation7], 1
    %14 = vsyncpa %s13, 0
    loop: start=0, step=1, limit=6
    $region2: #{tpu_custom_call.1} parent=1 // loop_pre_header
      _
    $region3: #{tpu_custom_call.1} parent=1 // loop_header
      %s16 = sphi 0, %s20
      %p17 = scmp.ge.s32.totalorder %s16, 6
      %s26 = sphi 0, %s28
      %s29 = sphi 0, %s26
      %s30 = sphi 0, %s29
      %s46 = sphi 0, %s30
      %s50 = sphi 0, %s50
      %s52 = sphi 0, %s50
      %s53 = sphi 0, %s52
      %s67 = sphi 0, %s53
      %s71 = sphi 0, %s71
      %s73 = sphi 0, %s71
      %s74 = sphi 0, %s73
      %s88 = sphi 0, %s74
      %s92 = sphi 0, %s92
      %s94 = sphi 0, %s92
      %s95 = sphi 0, %s94
      %s109 = sphi 0, %s95
      %s113 = sphi 0, %s113
      %s115 = sphi 0, %s113
      %s116 = sphi 0, %s115
      %s130 = sphi 0, %s116
      %s134 = sphi 0, %s134
      %s136 = sphi 0, %s134
      %s137 = sphi 0, %s136
      %s151 = sphi 0, %s137
      %s155 = sphi 0, %s155
      %s157 = sphi 0, %s155
      %s158 = sphi 0, %s157
      %s172 = sphi 0, %s158
      %s178 = sphi 0, %s180
      %s181 = sphi 0, %s178
      %s182 = sphi 0, %s181
      %s198 = sphi 0, %s182
    $region4: #{tpu_custom_call.1} parent=1 // loop_header_branch
      %19 = sbr.rel (%p17) target = $region8
    $region5: #{tpu_custom_call.1} parent=1 // loop_body
      %s21 = ssub.s32 %s16, 1
      %s22 = ssub.s32 %s16, 2
      %s23 = sadd.s32 %s16, 1
      %s24 = ssub.s32 %s16, %s23
      %p25 = scmp.eq.s32.totalorder %s24, 0
      %s27 = sadd.s32 %s26, 1
      %s28 = scalar_select %p25, %s26, %s27
      %p31 = pneg %p25
      %p32 = scmp.eq.s32.totalorder %s16, 3
      %p33 = por %p31, %p32
      %p34 = scmp.ne.s32.totalorder %s26, %s29
      %p35 = scmp.eq.s32.totalorder %s16, 0
      %p36 = por %p34, %p35
      %p37 = scmp.ne.s32.totalorder %s26, %s29
      %p38 = scmp.eq.s32.totalorder %s21, 3
      %p39 = por %p37, %p38
      %p40 = scmp.ne.s32.totalorder %s29, %s30
      %p41 = scmp.eq.s32.totalorder %s21, 0
      %p42 = por %p40, %p41
      %p43 = scmp.ne.s32.totalorder %s29, %s30
      %p44 = scmp.eq.s32.totalorder %s22, 3
      %p45 = por %p43, %p44
      %p47 = scmp.ne.s32.totalorder %s30, %s46
      %p48 = scmp.eq.s32.totalorder %s22, 0
      %p49 = por %p47, %p48
      %s51 = sadd.s32 %s50, 1
      %p54 = scmp.eq.s32.totalorder %s16, 3
      %p55 = scmp.ne.s32.totalorder %s50, %s52
      %p56 = scmp.eq.s32.totalorder %s16, 0
      %p57 = por %p55, %p56
      %p58 = scmp.ne.s32.totalorder %s50, %s52
      %p59 = scmp.eq.s32.totalorder %s21, 3
      %p60 = por %p58, %p59
      %p61 = scmp.ne.s32.totalorder %s52, %s53
      %p62 = scmp.eq.s32.totalorder %s21, 0
      %p63 = por %p61, %p62
      %p64 = scmp.ne.s32.totalorder %s52, %s53
      %p65 = scmp.eq.s32.totalorder %s22, 3
      %p66 = por %p64, %p65
      %p68 = scmp.ne.s32.totalorder %s53, %s67
      %p69 = scmp.eq.s32.totalorder %s22, 0
      %p70 = por %p68, %p69
      %s72 = sadd.s32 %s71, 1
      %p75 = scmp.eq.s32.totalorder %s16, 3
      %p76 = scmp.ne.s32.totalorder %s71, %s73
      %p77 = scmp.eq.s32.totalorder %s16, 0
      %p78 = por %p76, %p77
      %p79 = scmp.ne.s32.totalorder %s71, %s73
      %p80 = scmp.eq.s32.totalorder %s21, 3
      %p81 = por %p79, %p80
      %p82 = scmp.ne.s32.totalorder %s73, %s74
      %p83 = scmp.eq.s32.totalorder %s21, 0
      %p84 = por %p82, %p83
      %p85 = scmp.ne.s32.totalorder %s73, %s74
      %p86 = scmp.eq.s32.totalorder %s22, 3
      %p87 = por %p85, %p86
      %p89 = scmp.ne.s32.totalorder %s74, %s88
      %p90 = scmp.eq.s32.totalorder %s22, 0
      %p91 = por %p89, %p90
      %s93 = sadd.s32 %s92, 1
      %p96 = scmp.eq.s32.totalorder %s16, 3
      %p97 = scmp.ne.s32.totalorder %s92, %s94
      %p98 = scmp.eq.s32.totalorder %s16, 0
      %p99 = por %p97, %p98
      %p100 = scmp.ne.s32.totalorder %s92, %s94
      %p101 = scmp.eq.s32.totalorder %s21, 3
      %p102 = por %p100, %p101
      %p103 = scmp.ne.s32.totalorder %s94, %s95
      %p104 = scmp.eq.s32.totalorder %s21, 0
      %p105 = por %p103, %p104
      %p106 = scmp.ne.s32.totalorder %s94, %s95
      %p107 = scmp.eq.s32.totalorder %s22, 3
      %p108 = por %p106, %p107
      %p110 = scmp.ne.s32.totalorder %s95, %s109
      %p111 = scmp.eq.s32.totalorder %s22, 0
      %p112 = por %p110, %p111
      %s114 = sadd.s32 %s113, 1
      %p117 = scmp.eq.s32.totalorder %s16, 3
      %p118 = scmp.ne.s32.totalorder %s113, %s115
      %p119 = scmp.eq.s32.totalorder %s16, 0
      %p120 = por %p118, %p119
      %p121 = scmp.ne.s32.totalorder %s113, %s115
      %p122 = scmp.eq.s32.totalorder %s21, 3
      %p123 = por %p121, %p122
      %p124 = scmp.ne.s32.totalorder %s115, %s116
      %p125 = scmp.eq.s32.totalorder %s21, 0
      %p126 = por %p124, %p125
      %p127 = scmp.ne.s32.totalorder %s115, %s116
      %p128 = scmp.eq.s32.totalorder %s22, 3
      %p129 = por %p127, %p128
      %p131 = scmp.ne.s32.totalorder %s116, %s130
      %p132 = scmp.eq.s32.totalorder %s22, 0
      %p133 = por %p131, %p132
      %s135 = sadd.s32 %s134, 1
      %p138 = scmp.eq.s32.totalorder %s16, 3
      %p139 = scmp.ne.s32.totalorder %s134, %s136
      %p140 = scmp.eq.s32.totalorder %s16, 0
      %p141 = por %p139, %p140
      %p142 = scmp.ne.s32.totalorder %s134, %s136
      %p143 = scmp.eq.s32.totalorder %s21, 3
      %p144 = por %p142, %p143
      %p145 = scmp.ne.s32.totalorder %s136, %s137
      %p146 = scmp.eq.s32.totalorder %s21, 0
      %p147 = por %p145, %p146
      %p148 = scmp.ne.s32.totalorder %s136, %s137
      %p149 = scmp.eq.s32.totalorder %s22, 3
      %p150 = por %p148, %p149
      %p152 = scmp.ne.s32.totalorder %s137, %s151
      %p153 = scmp.eq.s32.totalorder %s22, 0
      %p154 = por %p152, %p153
      %s156 = sadd.s32 %s155, 1
      %p159 = scmp.eq.s32.totalorder %s16, 3
      %p160 = scmp.ne.s32.totalorder %s155, %s157
      %p161 = scmp.eq.s32.totalorder %s16, 0
      %p162 = por %p160, %p161
      %p163 = scmp.ne.s32.totalorder %s155, %s157
      %p164 = scmp.eq.s32.totalorder %s21, 3
      %p165 = por %p163, %p164
      %p166 = scmp.ne.s32.totalorder %s157, %s158
      %p167 = scmp.eq.s32.totalorder %s21, 0
      %p168 = por %p166, %p167
      %p169 = scmp.ne.s32.totalorder %s157, %s158
      %p170 = scmp.eq.s32.totalorder %s22, 3
      %p171 = por %p169, %p170
      %p173 = scmp.ne.s32.totalorder %s158, %s172
      %p174 = scmp.eq.s32.totalorder %s22, 0
      %p175 = por %p173, %p174
      %s176 = ssub.s32 %s16, %s23
      %p177 = scmp.eq.s32.totalorder %s176, 0
      %s179 = sadd.s32 %s178, 1
      %s180 = scalar_select %p177, %s178, %s179
      %p183 = pneg %p177
      %p184 = scmp.eq.s32.totalorder %s16, 3
      %p185 = por %p183, %p184
      %p186 = scmp.ne.s32.totalorder %s178, %s181
      %p187 = scmp.eq.s32.totalorder %s16, 0
      %p188 = por %p186, %p187
      %p189 = scmp.ne.s32.totalorder %s178, %s181
      %p190 = scmp.eq.s32.totalorder %s21, 3
      %p191 = por %p189, %p190
      %p192 = scmp.ne.s32.totalorder %s181, %s182
      %p193 = scmp.eq.s32.totalorder %s21, 0
      %p194 = por %p192, %p193
      %p195 = scmp.ne.s32.totalorder %s181, %s182
      %p196 = scmp.eq.s32.totalorder %s22, 3
      %p197 = por %p195, %p196
      %p199 = scmp.ne.s32.totalorder %s182, %s198
      %p200 = scmp.eq.s32.totalorder %s22, 0
      %p201 = por %p199, %p200
      %p202 = scmp.le.s32.totalorder 1, %s16
      %p203 = scmp.lt.s32.totalorder %s16, 5
      %p204 = pnand %p202, %p203
      %p205 = pneg %p204
      // Predicated region
      $region9: #{tpu_custom_call.1} parent=5 // pred_check
        _
      $region10: #{tpu_custom_call.1} parent=5 // pred_check_branch
        %207 = sbr.rel (%p204) target = $region12
      $region11: #{tpu_custom_call.1} parent=5 // pred_region
        %s208 = ssub.s32 %s16, 1
        // Predicated region
        $region13: #{tpu_custom_call.1} parent=11 // pred_check
          %p209 = pneg %p63
        $region14: #{tpu_custom_call.1} parent=11 // pred_check_branch
          %211 = sbr.rel (%p209) target = $region16
        $region15: #{tpu_custom_call.1} parent=11 // pred_region
          _
        $region16: #{tpu_custom_call.1} parent=11 // pred_fallthru
          _
        // Predicated region
        $region17: #{tpu_custom_call.1} parent=11 // pred_check
          %p212 = pneg %p84
        $region18: #{tpu_custom_call.1} parent=11 // pred_check_branch
          %214 = sbr.rel (%p212) target = $region20
        $region19: #{tpu_custom_call.1} parent=11 // pred_region
          _
        $region20: #{tpu_custom_call.1} parent=11 // pred_fallthru
          _
        // Predicated region
        $region21: #{tpu_custom_call.1} parent=11 // pred_check
          %p215 = pneg %p105
        $region22: #{tpu_custom_call.1} parent=11 // pred_check_branch
          %217 = sbr.rel (%p215) target = $region24
        $region23: #{tpu_custom_call.1} parent=11 // pred_region
          _
        $region24: #{tpu_custom_call.1} parent=11 // pred_fallthru
          _
        // Predicated region
        $region25: #{tpu_custom_call.1} parent=11 // pred_check
          %p218 = pneg %p126
        $region26: #{tpu_custom_call.1} parent=11 // pred_check_branch
          %220 = sbr.rel (%p218) target = $region28
        $region27: #{tpu_custom_call.1} parent=11 // pred_region
          _
        $region28: #{tpu_custom_call.1} parent=11 // pred_fallthru
          _
        // Predicated region
        $region29: #{tpu_custom_call.1} parent=11 // pred_check
          %p221 = pneg %p147
        $region30: #{tpu_custom_call.1} parent=11 // pred_check_branch
          %223 = sbr.rel (%p221) target = $region32
        $region31: #{tpu_custom_call.1} parent=11 // pred_region
          _
        $region32: #{tpu_custom_call.1} parent=11 // pred_fallthru
          _
        // Predicated region
        $region33: #{tpu_custom_call.1} parent=11 // pred_check
          %p224 = pneg %p168
        $region34: #{tpu_custom_call.1} parent=11 // pred_check_branch
          %226 = sbr.rel (%p224) target = $region36
        $region35: #{tpu_custom_call.1} parent=11 // pred_region
          _
        $region36: #{tpu_custom_call.1} parent=11 // pred_fallthru
          _
      $region12: #{tpu_custom_call.1} parent=5 // pred_fallthru
        _
      %p227 = scmp.lt.s32.totalorder %s16, 4
      // Predicated region
      $region37: #{tpu_custom_call.1} parent=5 // pred_check
        %p228 = pneg %p227
      $region38: #{tpu_custom_call.1} parent=5 // pred_check_branch
        %230 = sbr.rel (%p228) target = $region40
      $region39: #{tpu_custom_call.1} parent=5 // pred_region
        // Predicated region
        $region41: #{tpu_custom_call.1} parent=39 // pred_check
          %p231 = pneg %p36
        $region42: #{tpu_custom_call.1} parent=39 // pred_check_branch
          %233 = sbr.rel (%p231) target = $region44
        $region43: #{tpu_custom_call.1} parent=39 // pred_region
          %s234 = sand.u32 %s26, 1
          %s235 = sand.u32 %s26, 1
          %s236 = smul.addr %s235, 320
          %s237 = scalar_lea.vmem [#allocation5], %s236
          %s238 = smul.u32 16, %s16
          %s239 = smul.addr %s238, 4
          %s240 = scalar_lea.vmem %s0, %s239
          // Predicated region
          $region45: #{tpu_custom_call.1} parent=43 // pred_check
            _
          $region46: #{tpu_custom_call.1} parent=43 // pred_check_branch
            %242 = sbr.rel (0) target = $region48
          $region47: #{tpu_custom_call.1} parent=43 // pred_region
            // Predicated region
            $region49: #{tpu_custom_call.1} parent=47 // pred_check
              _
            $region50: #{tpu_custom_call.1} parent=47 // pred_check_branch
              %244 = sbr.rel target = $region52
            $region51: #{tpu_custom_call.1} parent=47 // pred_region
              // Predicated region
              $region64: #{tpu_custom_call.1} parent=51 // pred_check
                _
              $region65: #{tpu_custom_call.1} parent=51 // pred_check_branch
                %417 = sbr.rel (0) target = $region67
              $region66: #{tpu_custom_call.1} parent=51 // pred_region
                loop: start=0, step=1, limit=1
                $region68: #{tpu_custom_call.1} parent=66 // loop_pre_header
                  _
                $region69: #{tpu_custom_call.1} parent=66 // loop_header
                  %s419 = sphi 0, %s423
                  %p420 = scmp.ge.s32.totalorder %s419, 1
                  %s424 = sphi %s240, %s240
                  %s425 = sphi %s237, %s237
                $region70: #{tpu_custom_call.1} parent=66 // loop_header_branch
                  %422 = sbr.rel (%p420) target = $region74
                $region71: #{tpu_custom_call.1} parent=66 // loop_body
                  _
                $region72: #{tpu_custom_call.1} parent=66 // loop_footer
                  %s423 = sadd.s32 1, %s419
                $region73: #{tpu_custom_call.1} parent=66 // loop_footer_branch
                  %418 = sbr.rel target = $region69
                $region74: #{tpu_custom_call.1} parent=66 // loop_exit
                  _
                loop: start=0, step=1, limit=1
                $region75: #{tpu_custom_call.1} parent=66 // loop_pre_header
                  _
                $region76: #{tpu_custom_call.1} parent=66 // loop_header
                  %s428 = sphi 0, %s432
                  %p429 = scmp.ge.s32.totalorder %s428, 1
                  %s433 = sphi %s240, %s240
                  %s434 = sphi %s237, %s237
                $region77: #{tpu_custom_call.1} parent=66 // loop_header_branch
                  %431 = sbr.rel (%p429) target = $region81
                $region78: #{tpu_custom_call.1} parent=66 // loop_body
                  %v435 = vld [vmem:[%s433] sm:$0xf]
                  %436 = vst [vmem:[%s434] sm:$0xf] %v435
                  %v437 = vld [vmem:[%s433 + $0x4] sm:$0xf]
                  %438 = vst [vmem:[%s434 + $0x4] sm:$0xf] %v437
                  %v439 = vld [vmem:[%s433 + $0x8] sm:$0xf]
                  %440 = vst [vmem:[%s434 + $0x8] sm:$0xf] %v439
                  %v441 = vld [vmem:[%s433 + $0xc] sm:$0xf]
                  %442 = vst [vmem:[%s434 + $0xc] sm:$0xf] %v441
                  %v443 = vld [vmem:[%s433 + $0x10] sm:$0xf]
                  %444 = vst [vmem:[%s434 + $0x10] sm:$0xf] %v443
                  %v445 = vld [vmem:[%s433 + $0x14] sm:$0xf]
                  %446 = vst [vmem:[%s434 + $0x14] sm:$0xf] %v445
                  %v447 = vld [vmem:[%s433 + $0x18] sm:$0xf]
                  %448 = vst [vmem:[%s434 + $0x18] sm:$0xf] %v447
                  %v449 = vld [vmem:[%s433 + $0x1c] sm:$0xf]
                  %450 = vst [vmem:[%s434 + $0x1c] sm:$0xf] %v449
                  %v451 = vld [vmem:[%s433 + $0x20] sm:$0xf]
                  %452 = vst [vmem:[%s434 + $0x20] sm:$0xf] %v451
                  %v453 = vld [vmem:[%s433 + $0x24] sm:$0xf]
                  %454 = vst [vmem:[%s434 + $0x24] sm:$0xf] %v453
                  %v455 = vld [vmem:[%s433 + $0x28] sm:$0xf]
                  %456 = vst [vmem:[%s434 + $0x28] sm:$0xf] %v455
                  %v457 = vld [vmem:[%s433 + $0x2c] sm:$0xf]
                  %458 = vst [vmem:[%s434 + $0x2c] sm:$0xf] %v457
                  %v459 = vld [vmem:[%s433 + $0x30] sm:$0xf]
                  %460 = vst [vmem:[%s434 + $0x30] sm:$0xf] %v459
                  %v461 = vld [vmem:[%s433 + $0x34] sm:$0xf]
                  %462 = vst [vmem:[%s434 + $0x34] sm:$0xf] %v461
                  %v463 = vld [vmem:[%s433 + $0x38] sm:$0xf]
                  %464 = vst [vmem:[%s434 + $0x38] sm:$0xf] %v463
                  %v465 = vld [vmem:[%s433 + $0x3c] sm:$0xf]
                  %466 = vst [vmem:[%s434 + $0x3c] sm:$0xf] %v465
                  %v467 = vld [vmem:[%s433 + $0x100] sm:$0xf]
                  %468 = vst [vmem:[%s434 + $0x40] sm:$0xf] %v467
                  %v469 = vld [vmem:[%s433 + $0x104] sm:$0xf]
                  %470 = vst [vmem:[%s434 + $0x44] sm:$0xf] %v469
                  %v471 = vld [vmem:[%s433 + $0x108] sm:$0xf]
                  %472 = vst [vmem:[%s434 + $0x48] sm:$0xf] %v471
                  %v473 = vld [vmem:[%s433 + $0x10c] sm:$0xf]
                  %474 = vst [vmem:[%s434 + $0x4c] sm:$0xf] %v473
                  %v475 = vld [vmem:[%s433 + $0x110] sm:$0xf]
                  %476 = vst [vmem:[%s434 + $0x50] sm:$0xf] %v475
                  %v477 = vld [vmem:[%s433 + $0x114] sm:$0xf]
                  %478 = vst [vmem:[%s434 + $0x54] sm:$0xf] %v477
                  %v479 = vld [vmem:[%s433 + $0x118] sm:$0xf]
                  %480 = vst [vmem:[%s434 + $0x58] sm:$0xf] %v479
                  %v481 = vld [vmem:[%s433 + $0x11c] sm:$0xf]
                  %482 = vst [vmem:[%s434 + $0x5c] sm:$0xf] %v481
                  %v483 = vld [vmem:[%s433 + $0x120] sm:$0xf]
                  %484 = vst [vmem:[%s434 + $0x60] sm:$0xf] %v483
                  %v485 = vld [vmem:[%s433 + $0x124] sm:$0xf]
                  %486 = vst [vmem:[%s434 + $0x64] sm:$0xf] %v485
                  %v487 = vld [vmem:[%s433 + $0x128] sm:$0xf]
                  %488 = vst [vmem:[%s434 + $0x68] sm:$0xf] %v487
                  %v489 = vld [vmem:[%s433 + $0x12c] sm:$0xf]
                  %490 = vst [vmem:[%s434 + $0x6c] sm:$0xf] %v489
                  %v491 = vld [vmem:[%s433 + $0x130] sm:$0xf]
                  %492 = vst [vmem:[%s434 + $0x70] sm:$0xf] %v491
                  %v493 = vld [vmem:[%s433 + $0x134] sm:$0xf]
                  %494 = vst [vmem:[%s434 + $0x74] sm:$0xf] %v493
                  %v495 = vld [vmem:[%s433 + $0x138] sm:$0xf]
                  %496 = vst [vmem:[%s434 + $0x78] sm:$0xf] %v495
                  %v497 = vld [vmem:[%s433 + $0x13c] sm:$0xf]
                  %498 = vst [vmem:[%s434 + $0x7c] sm:$0xf] %v497
                  %v499 = vld [vmem:[%s433 + $0x200] sm:$0xf]
                  %500 = vst [vmem:[%s434 + $0x80] sm:$0xf] %v499
                  %v501 = vld [vmem:[%s433 + $0x204] sm:$0xf]
                  %502 = vst [vmem:[%s434 + $0x84] sm:$0xf] %v501
                  %v503 = vld [vmem:[%s433 + $0x208] sm:$0xf]
                  %504 = vst [vmem:[%s434 + $0x88] sm:$0xf] %v503
                  %v505 = vld [vmem:[%s433 + $0x20c] sm:$0xf]
                  %506 = vst [vmem:[%s434 + $0x8c] sm:$0xf] %v505
                  %v507 = vld [vmem:[%s433 + $0x210] sm:$0xf]
                  %508 = vst [vmem:[%s434 + $0x90] sm:$0xf] %v507
                  %v509 = vld [vmem:[%s433 + $0x214] sm:$0xf]
                  %510 = vst [vmem:[%s434 + $0x94] sm:$0xf] %v509
                  %v511 = vld [vmem:[%s433 + $0x218] sm:$0xf]
                  %512 = vst [vmem:[%s434 + $0x98] sm:$0xf] %v511
                  %v513 = vld [vmem:[%s433 + $0x21c] sm:$0xf]
                  %514 = vst [vmem:[%s434 + $0x9c] sm:$0xf] %v513
                  %v515 = vld [vmem:[%s433 + $0x220] sm:$0xf]
                  %516 = vst [vmem:[%s434 + $0xa0] sm:$0xf] %v515
                  %v517 = vld [vmem:[%s433 + $0x224] sm:$0xf]
                  %518 = vst [vmem:[%s434 + $0xa4] sm:$0xf] %v517
                  %v519 = vld [vmem:[%s433 + $0x228] sm:$0xf]
                  %520 = vst [vmem:[%s434 + $0xa8] sm:$0xf] %v519
                  %v521 = vld [vmem:[%s433 + $0x22c] sm:$0xf]
                  %522 = vst [vmem:[%s434 + $0xac] sm:$0xf] %v521
                  %v523 = vld [vmem:[%s433 + $0x230] sm:$0xf]
                  %524 = vst [vmem:[%s434 + $0xb0] sm:$0xf] %v523
                  %v525 = vld [vmem:[%s433 + $0x234] sm:$0xf]
                  %526 = vst [vmem:[%s434 + $0xb4] sm:$0xf] %v525
                  %v527 = vld [vmem:[%s433 + $0x238] sm:$0xf]
                  %528 = vst [vmem:[%s434 + $0xb8] sm:$0xf] %v527
                  %v529 = vld [vmem:[%s433 + $0x23c] sm:$0xf]
                  %530 = vst [vmem:[%s434 + $0xbc] sm:$0xf] %v529
                  %v531 = vld [vmem:[%s433 + $0x300] sm:$0xf]
                  %532 = vst [vmem:[%s434 + $0xc0] sm:$0xf] %v531
                  %v533 = vld [vmem:[%s433 + $0x304] sm:$0xf]
                  %534 = vst [vmem:[%s434 + $0xc4] sm:$0xf] %v533
                  %v535 = vld [vmem:[%s433 + $0x308] sm:$0xf]
                  %536 = vst [vmem:[%s434 + $0xc8] sm:$0xf] %v535
                  %v537 = vld [vmem:[%s433 + $0x30c] sm:$0xf]
                  %538 = vst [vmem:[%s434 + $0xcc] sm:$0xf] %v537
                  %v539 = vld [vmem:[%s433 + $0x310] sm:$0xf]
                  %540 = vst [vmem:[%s434 + $0xd0] sm:$0xf] %v539
                  %v541 = vld [vmem:[%s433 + $0x314] sm:$0xf]
                  %542 = vst [vmem:[%s434 + $0xd4] sm:$0xf] %v541
                  %v543 = vld [vmem:[%s433 + $0x318] sm:$0xf]
                  %544 = vst [vmem:[%s434 + $0xd8] sm:$0xf] %v543
                  %v545 = vld [vmem:[%s433 + $0x31c] sm:$0xf]
                  %546 = vst [vmem:[%s434 + $0xdc] sm:$0xf] %v545
                  %v547 = vld [vmem:[%s433 + $0x320] sm:$0xf]
                  %548 = vst [vmem:[%s434 + $0xe0] sm:$0xf] %v547
                  %v549 = vld [vmem:[%s433 + $0x324] sm:$0xf]
                  %550 = vst [vmem:[%s434 + $0xe4] sm:$0xf] %v549
                  %v551 = vld [vmem:[%s433 + $0x328] sm:$0xf]
                  %552 = vst [vmem:[%s434 + $0xe8] sm:$0xf] %v551
                  %v553 = vld [vmem:[%s433 + $0x32c] sm:$0xf]
                  %554 = vst [vmem:[%s434 + $0xec] sm:$0xf] %v553
                  %v555 = vld [vmem:[%s433 + $0x330] sm:$0xf]
                  %556 = vst [vmem:[%s434 + $0xf0] sm:$0xf] %v555
                  %v557 = vld [vmem:[%s433 + $0x334] sm:$0xf]
                  %558 = vst [vmem:[%s434 + $0xf4] sm:$0xf] %v557
                  %v559 = vld [vmem:[%s433 + $0x338] sm:$0xf]
                  %560 = vst [vmem:[%s434 + $0xf8] sm:$0xf] %v559
                  %v561 = vld [vmem:[%s433 + $0x33c] sm:$0xf]
                  %562 = vst [vmem:[%s434 + $0xfc] sm:$0xf] %v561
                  %v563 = vld [vmem:[%s433 + $0x400] sm:$0xf]
                  %564 = vst [vmem:[%s434 + $0x100] sm:$0xf] %v563
                  %v565 = vld [vmem:[%s433 + $0x404] sm:$0xf]
                  %566 = vst [vmem:[%s434 + $0x104] sm:$0xf] %v565
                  %v567 = vld [vmem:[%s433 + $0x408] sm:$0xf]
                  %568 = vst [vmem:[%s434 + $0x108] sm:$0xf] %v567
                  %v569 = vld [vmem:[%s433 + $0x40c] sm:$0xf]
                  %570 = vst [vmem:[%s434 + $0x10c] sm:$0xf] %v569
                  %v571 = vld [vmem:[%s433 + $0x410] sm:$0xf]
                  %572 = vst [vmem:[%s434 + $0x110] sm:$0xf] %v571
                  %v573 = vld [vmem:[%s433 + $0x414] sm:$0xf]
                  %574 = vst [vmem:[%s434 + $0x114] sm:$0xf] %v573
                  %v575 = vld [vmem:[%s433 + $0x418] sm:$0xf]
                  %576 = vst [vmem:[%s434 + $0x118] sm:$0xf] %v575
                  %v577 = vld [vmem:[%s433 + $0x41c] sm:$0xf]
                  %578 = vst [vmem:[%s434 + $0x11c] sm:$0xf] %v577
                  %v579 = vld [vmem:[%s433 + $0x420] sm:$0xf]
                  %580 = vst [vmem:[%s434 + $0x120] sm:$0xf] %v579
                  %v581 = vld [vmem:[%s433 + $0x424] sm:$0xf]
                  %582 = vst [vmem:[%s434 + $0x124] sm:$0xf] %v581
                  %v583 = vld [vmem:[%s433 + $0x428] sm:$0xf]
                  %584 = vst [vmem:[%s434 + $0x128] sm:$0xf] %v583
                  %v585 = vld [vmem:[%s433 + $0x42c] sm:$0xf]
                  %586 = vst [vmem:[%s434 + $0x12c] sm:$0xf] %v585
                  %v587 = vld [vmem:[%s433 + $0x430] sm:$0xf]
                  %588 = vst [vmem:[%s434 + $0x130] sm:$0xf] %v587
                  %v589 = vld [vmem:[%s433 + $0x434] sm:$0xf]
                  %590 = vst [vmem:[%s434 + $0x134] sm:$0xf] %v589
                  %v591 = vld [vmem:[%s433 + $0x438] sm:$0xf]
                  %592 = vst [vmem:[%s434 + $0x138] sm:$0xf] %v591
                  %v593 = vld [vmem:[%s433 + $0x43c] sm:$0xf]
                  %594 = vst [vmem:[%s434 + $0x13c] sm:$0xf] %v593
                $region79: #{tpu_custom_call.1} parent=66 // loop_footer
                  %s432 = sadd.s32 1, %s428
                $region80: #{tpu_custom_call.1} parent=66 // loop_footer_branch
                  %427 = sbr.rel target = $region76
                $region81: #{tpu_custom_call.1} parent=66 // loop_exit
                  _
              $region67: #{tpu_custom_call.1} parent=51 // pred_fallthru
                _
            $region52: #{tpu_custom_call.1} parent=47 // pred_fallthru
              _
            // Predicated region
            $region53: #{tpu_custom_call.1} parent=47 // pred_check
              _
            $region54: #{tpu_custom_call.1} parent=47 // pred_check_branch
              %246 = sbr.rel (0) target = $region56
            $region55: #{tpu_custom_call.1} parent=47 // pred_region
              loop: start=0, step=1, limit=1
              $region57: #{tpu_custom_call.1} parent=55 // loop_pre_header
                _
              $region58: #{tpu_custom_call.1} parent=55 // loop_header
                %s249 = sphi 0, %s253
                %p250 = scmp.ge.s32.totalorder %s249, 1
                %s254 = sphi %s240, %s240
                %s255 = sphi %s237, %s237
              $region59: #{tpu_custom_call.1} parent=55 // loop_header_branch
                %252 = sbr.rel (%p250) target = $region63
              $region60: #{tpu_custom_call.1} parent=55 // loop_body
                %v256 = vld [vmem:[%s254] sm:$0xf]
                %257 = vst [vmem:[%s255] sm:$0xf] %v256
                %v258 = vld [vmem:[%s254 + $0x4] sm:$0xf]
                %259 = vst [vmem:[%s255 + $0x4] sm:$0xf] %v258
                %v260 = vld [vmem:[%s254 + $0x8] sm:$0xf]
                %261 = vst [vmem:[%s255 + $0x8] sm:$0xf] %v260
                %v262 = vld [vmem:[%s254 + $0xc] sm:$0xf]
                %263 = vst [vmem:[%s255 + $0xc] sm:$0xf] %v262
                %v264 = vld [vmem:[%s254 + $0x10] sm:$0xf]
                %265 = vst [vmem:[%s255 + $0x10] sm:$0xf] %v264
                %v266 = vld [vmem:[%s254 + $0x14] sm:$0xf]
                %267 = vst [vmem:[%s255 + $0x14] sm:$0xf] %v266
                %v268 = vld [vmem:[%s254 + $0x18] sm:$0xf]
                %269 = vst [vmem:[%s255 + $0x18] sm:$0xf] %v268
                %v270 = vld [vmem:[%s254 + $0x1c] sm:$0xf]
                %271 = vst [vmem:[%s255 + $0x1c] sm:$0xf] %v270
                %v272 = vld [vmem:[%s254 + $0x20] sm:$0xf]
                %273 = vst [vmem:[%s255 + $0x20] sm:$0xf] %v272
                %v274 = vld [vmem:[%s254 + $0x24] sm:$0xf]
                %275 = vst [vmem:[%s255 + $0x24] sm:$0xf] %v274
                %v276 = vld [vmem:[%s254 + $0x28] sm:$0xf]
                %277 = vst [vmem:[%s255 + $0x28] sm:$0xf] %v276
                %v278 = vld [vmem:[%s254 + $0x2c] sm:$0xf]
                %279 = vst [vmem:[%s255 + $0x2c] sm:$0xf] %v278
                %v280 = vld [vmem:[%s254 + $0x30] sm:$0xf]
                %281 = vst [vmem:[%s255 + $0x30] sm:$0xf] %v280
                %v282 = vld [vmem:[%s254 + $0x34] sm:$0xf]
                %283 = vst [vmem:[%s255 + $0x34] sm:$0xf] %v282
                %v284 = vld [vmem:[%s254 + $0x38] sm:$0xf]
                %285 = vst [vmem:[%s255 + $0x38] sm:$0xf] %v284
                %v286 = vld [vmem:[%s254 + $0x3c] sm:$0xf]
                %287 = vst [vmem:[%s255 + $0x3c] sm:$0xf] %v286
                %v288 = vld [vmem:[%s254 + $0x100] sm:$0xf]
                %289 = vst [vmem:[%s255 + $0x40] sm:$0xf] %v288
                %v290 = vld [vmem:[%s254 + $0x104] sm:$0xf]
                %291 = vst [vmem:[%s255 + $0x44] sm:$0xf] %v290
                %v292 = vld [vmem:[%s254 + $0x108] sm:$0xf]
                %293 = vst [vmem:[%s255 + $0x48] sm:$0xf] %v292
                %v294 = vld [vmem:[%s254 + $0x10c] sm:$0xf]
                %295 = vst [vmem:[%s255 + $0x4c] sm:$0xf] %v294
                %v296 = vld [vmem:[%s254 + $0x110] sm:$0xf]
                %297 = vst [vmem:[%s255 + $0x50] sm:$0xf] %v296
                %v298 = vld [vmem:[%s254 + $0x114] sm:$0xf]
                %299 = vst [vmem:[%s255 + $0x54] sm:$0xf] %v298
                %v300 = vld [vmem:[%s254 + $0x118] sm:$0xf]
                %301 = vst [vmem:[%s255 + $0x58] sm:$0xf] %v300
                %v302 = vld [vmem:[%s254 + $0x11c] sm:$0xf]
                %303 = vst [vmem:[%s255 + $0x5c] sm:$0xf] %v302
                %v304 = vld [vmem:[%s254 + $0x120] sm:$0xf]
                %305 = vst [vmem:[%s255 + $0x60] sm:$0xf] %v304
                %v306 = vld [vmem:[%s254 + $0x124] sm:$0xf]
                %307 = vst [vmem:[%s255 + $0x64] sm:$0xf] %v306
                %v308 = vld [vmem:[%s254 + $0x128] sm:$0xf]
                %309 = vst [vmem:[%s255 + $0x68] sm:$0xf] %v308
                %v310 = vld [vmem:[%s254 + $0x12c] sm:$0xf]
                %311 = vst [vmem:[%s255 + $0x6c] sm:$0xf] %v310
                %v312 = vld [vmem:[%s254 + $0x130] sm:$0xf]
                %313 = vst [vmem:[%s255 + $0x70] sm:$0xf] %v312
                %v314 = vld [vmem:[%s254 + $0x134] sm:$0xf]
                %315 = vst [vmem:[%s255 + $0x74] sm:$0xf] %v314
                %v316 = vld [vmem:[%s254 + $0x138] sm:$0xf]
                %317 = vst [vmem:[%s255 + $0x78] sm:$0xf] %v316
                %v318 = vld [vmem:[%s254 + $0x13c] sm:$0xf]
                %319 = vst [vmem:[%s255 + $0x7c] sm:$0xf] %v318
                %v320 = vld [vmem:[%s254 + $0x200] sm:$0xf]
                %321 = vst [vmem:[%s255 + $0x80] sm:$0xf] %v320
                %v322 = vld [vmem:[%s254 + $0x204] sm:$0xf]
                %323 = vst [vmem:[%s255 + $0x84] sm:$0xf] %v322
                %v324 = vld [vmem:[%s254 + $0x208] sm:$0xf]
                %325 = vst [vmem:[%s255 + $0x88] sm:$0xf] %v324
                %v326 = vld [vmem:[%s254 + $0x20c] sm:$0xf]
                %327 = vst [vmem:[%s255 + $0x8c] sm:$0xf] %v326
                %v328 = vld [vmem:[%s254 + $0x210] sm:$0xf]
                %329 = vst [vmem:[%s255 + $0x90] sm:$0xf] %v328
                %v330 = vld [vmem:[%s254 + $0x214] sm:$0xf]
                %331 = vst [vmem:[%s255 + $0x94] sm:$0xf] %v330
                %v332 = vld [vmem:[%s254 + $0x218] sm:$0xf]
                %333 = vst [vmem:[%s255 + $0x98] sm:$0xf] %v332
                %v334 = vld [vmem:[%s254 + $0x21c] sm:$0xf]
                %335 = vst [vmem:[%s255 + $0x9c] sm:$0xf] %v334
                %v336 = vld [vmem:[%s254 + $0x220] sm:$0xf]
                %337 = vst [vmem:[%s255 + $0xa0] sm:$0xf] %v336
                %v338 = vld [vmem:[%s254 + $0x224] sm:$0xf]
                %339 = vst [vmem:[%s255 + $0xa4] sm:$0xf] %v338
                %v340 = vld [vmem:[%s254 + $0x228] sm:$0xf]
                %341 = vst [vmem:[%s255 + $0xa8] sm:$0xf] %v340
                %v342 = vld [vmem:[%s254 + $0x22c] sm:$0xf]
                %343 = vst [vmem:[%s255 + $0xac] sm:$0xf] %v342
                %v344 = vld [vmem:[%s254 + $0x230] sm:$0xf]
                %345 = vst [vmem:[%s255 + $0xb0] sm:$0xf] %v344
                %v346 = vld [vmem:[%s254 + $0x234] sm:$0xf]
                %347 = vst [vmem:[%s255 + $0xb4] sm:$0xf] %v346
                %v348 = vld [vmem:[%s254 + $0x238] sm:$0xf]
                %349 = vst [vmem:[%s255 + $0xb8] sm:$0xf] %v348
                %v350 = vld [vmem:[%s254 + $0x23c] sm:$0xf]
                %351 = vst [vmem:[%s255 + $0xbc] sm:$0xf] %v350
                %v352 = vld [vmem:[%s254 + $0x300] sm:$0xf]
                %353 = vst [vmem:[%s255 + $0xc0] sm:$0xf] %v352
                %v354 = vld [vmem:[%s254 + $0x304] sm:$0xf]
                %355 = vst [vmem:[%s255 + $0xc4] sm:$0xf] %v354
                %v356 = vld [vmem:[%s254 + $0x308] sm:$0xf]
                %357 = vst [vmem:[%s255 + $0xc8] sm:$0xf] %v356
                %v358 = vld [vmem:[%s254 + $0x30c] sm:$0xf]
                %359 = vst [vmem:[%s255 + $0xcc] sm:$0xf] %v358
                %v360 = vld [vmem:[%s254 + $0x310] sm:$0xf]
                %361 = vst [vmem:[%s255 + $0xd0] sm:$0xf] %v360
                %v362 = vld [vmem:[%s254 + $0x314] sm:$0xf]
                %363 = vst [vmem:[%s255 + $0xd4] sm:$0xf] %v362
                %v364 = vld [vmem:[%s254 + $0x318] sm:$0xf]
                %365 = vst [vmem:[%s255 + $0xd8] sm:$0xf] %v364
                %v366 = vld [vmem:[%s254 + $0x31c] sm:$0xf]
                %367 = vst [vmem:[%s255 + $0xdc] sm:$0xf] %v366
                %v368 = vld [vmem:[%s254 + $0x320] sm:$0xf]
                %369 = vst [vmem:[%s255 + $0xe0] sm:$0xf] %v368
                %v370 = vld [vmem:[%s254 + $0x324] sm:$0xf]
                %371 = vst [vmem:[%s255 + $0xe4] sm:$0xf] %v370
                %v372 = vld [vmem:[%s254 + $0x328] sm:$0xf]
                %373 = vst [vmem:[%s255 + $0xe8] sm:$0xf] %v372
                %v374 = vld [vmem:[%s254 + $0x32c] sm:$0xf]
                %375 = vst [vmem:[%s255 + $0xec] sm:$0xf] %v374
                %v376 = vld [vmem:[%s254 + $0x330] sm:$0xf]
                %377 = vst [vmem:[%s255 + $0xf0] sm:$0xf] %v376
                %v378 = vld [vmem:[%s254 + $0x334] sm:$0xf]
                %379 = vst [vmem:[%s255 + $0xf4] sm:$0xf] %v378
                %v380 = vld [vmem:[%s254 + $0x338] sm:$0xf]
                %381 = vst [vmem:[%s255 + $0xf8] sm:$0xf] %v380
                %v382 = vld [vmem:[%s254 + $0x33c] sm:$0xf]
                %383 = vst [vmem:[%s255 + $0xfc] sm:$0xf] %v382
                %v384 = vld [vmem:[%s254 + $0x400] sm:$0xf]
                %385 = vst [vmem:[%s255 + $0x100] sm:$0xf] %v384
                %v386 = vld [vmem:[%s254 + $0x404] sm:$0xf]
                %387 = vst [vmem:[%s255 + $0x104] sm:$0xf] %v386
                %v388 = vld [vmem:[%s254 + $0x408] sm:$0xf]
                %389 = vst [vmem:[%s255 + $0x108] sm:$0xf] %v388
                %v390 = vld [vmem:[%s254 + $0x40c] sm:$0xf]
                %391 = vst [vmem:[%s255 + $0x10c] sm:$0xf] %v390
                %v392 = vld [vmem:[%s254 + $0x410] sm:$0xf]
                %393 = vst [vmem:[%s255 + $0x110] sm:$0xf] %v392
                %v394 = vld [vmem:[%s254 + $0x414] sm:$0xf]
                %395 = vst [vmem:[%s255 + $0x114] sm:$0xf] %v394
                %v396 = vld [vmem:[%s254 + $0x418] sm:$0xf]
                %397 = vst [vmem:[%s255 + $0x118] sm:$0xf] %v396
                %v398 = vld [vmem:[%s254 + $0x41c] sm:$0xf]
                %399 = vst [vmem:[%s255 + $0x11c] sm:$0xf] %v398
                %v400 = vld [vmem:[%s254 + $0x420] sm:$0xf]
                %401 = vst [vmem:[%s255 + $0x120] sm:$0xf] %v400
                %v402 = vld [vmem:[%s254 + $0x424] sm:$0xf]
                %403 = vst [vmem:[%s255 + $0x124] sm:$0xf] %v402
                %v404 = vld [vmem:[%s254 + $0x428] sm:$0xf]
                %405 = vst [vmem:[%s255 + $0x128] sm:$0xf] %v404
                %v406 = vld [vmem:[%s254 + $0x42c] sm:$0xf]
                %407 = vst [vmem:[%s255 + $0x12c] sm:$0xf] %v406
                %v408 = vld [vmem:[%s254 + $0x430] sm:$0xf]
                %409 = vst [vmem:[%s255 + $0x130] sm:$0xf] %v408
                %v410 = vld [vmem:[%s254 + $0x434] sm:$0xf]
                %411 = vst [vmem:[%s255 + $0x134] sm:$0xf] %v410
                %v412 = vld [vmem:[%s254 + $0x438] sm:$0xf]
                %413 = vst [vmem:[%s255 + $0x138] sm:$0xf] %v412
                %v414 = vld [vmem:[%s254 + $0x43c] sm:$0xf]
                %415 = vst [vmem:[%s255 + $0x13c] sm:$0xf] %v414
              $region61: #{tpu_custom_call.1} parent=55 // loop_footer
                %s253 = sadd.s32 1, %s249
              $region62: #{tpu_custom_call.1} parent=55 // loop_footer_branch
                %248 = sbr.rel target = $region58
              $region63: #{tpu_custom_call.1} parent=55 // loop_exit
                _
            $region56: #{tpu_custom_call.1} parent=47 // pred_fallthru
              _
          $region48: #{tpu_custom_call.1} parent=43 // pred_fallthru
            _
          %595 = vnop
        $region44: #{tpu_custom_call.1} parent=39 // pred_fallthru
          _
      $region40: #{tpu_custom_call.1} parent=5 // pred_fallthru
        _
      %p596 = scmp.le.s32.totalorder 1, %s16
      %p597 = scmp.lt.s32.totalorder %s16, 5
      %p598 = pnand %p596, %p597
      %p599 = pneg %p598
      // Predicated region
      $region82: #{tpu_custom_call.1} parent=5 // pred_check
        _
      $region83: #{tpu_custom_call.1} parent=5 // pred_check_branch
        %601 = sbr.rel (%p598) target = $region85
      $region84: #{tpu_custom_call.1} parent=5 // pred_region
        %s602 = ssub.s32 %s16, 1
        %s603 = sand.u32 %s29, 1
        %s604 = sand.u32 %s29, 1
        %s605 = smul.addr %s604, 320
        %s606 = scalar_lea.vmem [#allocation5], %s605
        // Predicated region
        $region86: #{tpu_custom_call.1} parent=84 // pred_check
          %p607 = pneg %p42
        $region87: #{tpu_custom_call.1} parent=84 // pred_check_branch
          %609 = sbr.rel (%p607) target = $region89
        $region88: #{tpu_custom_call.1} parent=84 // pred_region
          _
        $region89: #{tpu_custom_call.1} parent=84 // pred_fallthru
          _
        %s610 = sand.u32 %s29, 1
        %s611 = sand.u32 %s29, 1
        %s612 = smul.addr %s611, 320
        %s613 = scalar_lea.vmem [#allocation5], %s612
        %p614 = pneg %p42
        %p615 = pneg %p39
        %p616 = pneg %p63
        %p617 = pneg %p60
        %p618 = pneg %p84
        %p619 = pneg %p81
        %p620 = pneg %p105
        %p621 = pneg %p102
        %p622 = pneg %p126
        %p623 = pneg %p123
        %p624 = pneg %p147
        %p625 = pneg %p144
        %p626 = pneg %p168
        %p627 = pneg %p165
        %p628 = pneg %p194
        %p629 = pneg %p191
        %s630 = sand.u32 %s181, 1
        %s631 = scalar_lea.sflag [#allocation7], %s630
        %s632 = sand.u32 %s181, 1
        %s633 = smul.addr %s632, 64
        %s634 = scalar_lea.vmem [#allocation6], %s633
        %s635 = smul.u32 16, %s21
        %s636 = smul.u32 16, %s21
        %v638 = vld [vmem:[%s1] sm:$0xf]
        %v639 = vld [vmem:[%s1 + $0x4] sm:$0xf]
        %v640 = vld [vmem:[%s2] sm:$0x1]
        %v641 = vld [vmem:[%s3] sm:$0xf]
        %v642 = vld [vmem:[%s3 + $0x4] sm:$0xf]
        %v643 = vld [vmem:[%s3 + $0x8] sm:$0xf]
        %v644 = vld [vmem:[%s3 + $0xc] sm:$0xf]
        %v645 = vld [vmem:[%s3 + $0x10] sm:$0xf]
        %v646 = vld [vmem:[%s3 + $0x14] sm:$0xf]
        %v647 = vld [vmem:[%s3 + $0x18] sm:$0xf]
        %v648 = vld [vmem:[%s3 + $0x1c] sm:$0xf]
        %v649 = vld [vmem:[%s4] sm:$0x1]
        %v650 = vld [vmem:[%s606] sm:$0xf]
        %v651 = vld [vmem:[%s606 + $0x4] sm:$0xf]
        %v652 = vld [vmem:[%s606 + $0x8] sm:$0xf]
        %v653 = vld [vmem:[%s606 + $0xc] sm:$0xf]
        %v654 = vld [vmem:[%s606 + $0x10] sm:$0xf]
        %v655 = vld [vmem:[%s606 + $0x14] sm:$0xf]
        %v656 = vld [vmem:[%s606 + $0x18] sm:$0xf]
        %v657 = vld [vmem:[%s606 + $0x1c] sm:$0xf]
        %v658 = vld [vmem:[%s606 + $0x20] sm:$0xf]
        %v659 = vld [vmem:[%s606 + $0x24] sm:$0xf]
        %v660 = vld [vmem:[%s606 + $0x28] sm:$0xf]
        %v661 = vld [vmem:[%s606 + $0x2c] sm:$0xf]
        %v662 = vld [vmem:[%s606 + $0x30] sm:$0xf]
        %v663 = vld [vmem:[%s606 + $0x34] sm:$0xf]
        %v664 = vld [vmem:[%s606 + $0x38] sm:$0xf]
        %v665 = vld [vmem:[%s606 + $0x3c] sm:$0xf]
        %v666 = vld [vmem:[%s606 + $0x40] sm:$0xf]
        %v667 = vld [vmem:[%s606 + $0x44] sm:$0xf]
        %v668 = vld [vmem:[%s606 + $0x48] sm:$0xf]
        %v669 = vld [vmem:[%s606 + $0x4c] sm:$0xf]
        %v670 = vld [vmem:[%s606 + $0x50] sm:$0xf]
        %v671 = vld [vmem:[%s606 + $0x54] sm:$0xf]
        %v672 = vld [vmem:[%s606 + $0x58] sm:$0xf]
        %v673 = vld [vmem:[%s606 + $0x5c] sm:$0xf]
        %v674 = vld [vmem:[%s606 + $0x60] sm:$0xf]
        %v675 = vld [vmem:[%s606 + $0x64] sm:$0xf]
        %v676 = vld [vmem:[%s606 + $0x68] sm:$0xf]
        %v677 = vld [vmem:[%s606 + $0x6c] sm:$0xf]
        %v678 = vld [vmem:[%s606 + $0x70] sm:$0xf]
        %v679 = vld [vmem:[%s606 + $0x74] sm:$0xf]
        %v680 = vld [vmem:[%s606 + $0x78] sm:$0xf]
        %v681 = vld [vmem:[%s606 + $0x7c] sm:$0xf]
        %v682 = vld [vmem:[%s606 + $0x80] sm:$0xf]
        %v683 = vld [vmem:[%s606 + $0x84] sm:$0xf]
        %v684 = vld [vmem:[%s606 + $0x88] sm:$0xf]
        %v685 = vld [vmem:[%s606 + $0x8c] sm:$0xf]
        %v686 = vld [vmem:[%s606 + $0x90] sm:$0xf]
        %v687 = vld [vmem:[%s606 + $0x94] sm:$0xf]
        %v688 = vld [vmem:[%s606 + $0x98] sm:$0xf]
        %v689 = vld [vmem:[%s606 + $0x9c] sm:$0xf]
        %v690 = vld [vmem:[%s606 + $0xa0] sm:$0xf]
        %v691 = vld [vmem:[%s606 + $0xa4] sm:$0xf]
        %v692 = vld [vmem:[%s606 + $0xa8] sm:$0xf]
        %v693 = vld [vmem:[%s606 + $0xac] sm:$0xf]
        %v694 = vld [vmem:[%s606 + $0xb0] sm:$0xf]
        %v695 = vld [vmem:[%s606 + $0xb4] sm:$0xf]
        %v696 = vld [vmem:[%s606 + $0xb8] sm:$0xf]
        %v697 = vld [vmem:[%s606 + $0xbc] sm:$0xf]
        %v698 = vld [vmem:[%s606 + $0xc0] sm:$0xf]
        %v699 = vld [vmem:[%s606 + $0xc4] sm:$0xf]
        %v700 = vld [vmem:[%s606 + $0xc8] sm:$0xf]
        %v701 = vld [vmem:[%s606 + $0xcc] sm:$0xf]
        %v702 = vld [vmem:[%s606 + $0xd0] sm:$0xf]
        %v703 = vld [vmem:[%s606 + $0xd4] sm:$0xf]
        %v704 = vld [vmem:[%s606 + $0xd8] sm:$0xf]
        %v705 = vld [vmem:[%s606 + $0xdc] sm:$0xf]
        %v706 = vld [vmem:[%s606 + $0xe0] sm:$0xf]
        %v707 = vld [vmem:[%s606 + $0xe4] sm:$0xf]
        %v708 = vld [vmem:[%s606 + $0xe8] sm:$0xf]
        %v709 = vld [vmem:[%s606 + $0xec] sm:$0xf]
        %v710 = vld [vmem:[%s606 + $0xf0] sm:$0xf]
        %v711 = vld [vmem:[%s606 + $0xf4] sm:$0xf]
        %v712 = vld [vmem:[%s606 + $0xf8] sm:$0xf]
        %v713 = vld [vmem:[%s606 + $0xfc] sm:$0xf]
        %v714 = vld [vmem:[%s606 + $0x100] sm:$0xf]
        %v715 = vld [vmem:[%s606 + $0x104] sm:$0xf]
        %v716 = vld [vmem:[%s606 + $0x108] sm:$0xf]
        %v717 = vld [vmem:[%s606 + $0x10c] sm:$0xf]
        %v718 = vld [vmem:[%s606 + $0x110] sm:$0xf]
        %v719 = vld [vmem:[%s606 + $0x114] sm:$0xf]
        %v720 = vld [vmem:[%s606 + $0x118] sm:$0xf]
        %v721 = vld [vmem:[%s606 + $0x11c] sm:$0xf]
        %v722 = vld [vmem:[%s606 + $0x120] sm:$0xf]
        %v723 = vld [vmem:[%s606 + $0x124] sm:$0xf]
        %v724 = vld [vmem:[%s606 + $0x128] sm:$0xf]
        %v725 = vld [vmem:[%s606 + $0x12c] sm:$0xf]
        %v726 = vld [vmem:[%s606 + $0x130] sm:$0xf]
        %v727 = vld [vmem:[%s606 + $0x134] sm:$0xf]
        %v728 = vld [vmem:[%s606 + $0x138] sm:$0xf]
        %v729 = vld [vmem:[%s606 + $0x13c] sm:$0xf]
        %v731 = vlaneseq
        %v732 = vshrl.u32 %v731, 7
        %v733 = vsub.s32 0, %v732
        %v734 = vrot.slane %v640, %v733
        %v816 = vunpack.c.l.b16 %v650
        %v817 = vunpack.c.l.b16 %v651
        %v818 = vunpack.c.l.b16 %v652
        %v819 = vunpack.c.l.b16 %v653
        %v820 = vunpack.c.l.b16 %v654
        %v821 = vunpack.c.l.b16 %v655
        %v822 = vunpack.c.l.b16 %v656
        %v823 = vunpack.c.l.b16 %v657
        %v824 = vunpack.c.l.b16 %v658
        %v825 = vunpack.c.l.b16 %v659
        %v826 = vunpack.c.l.b16 %v660
        %v827 = vunpack.c.l.b16 %v661
        %v828 = vunpack.c.l.b16 %v662
        %v829 = vunpack.c.l.b16 %v663
        %v830 = vunpack.c.l.b16 %v664
        %v831 = vunpack.c.l.b16 %v665
        %v832 = vunpack.c.l.b16 %v666
        %v833 = vunpack.c.l.b16 %v667
        %v834 = vunpack.c.l.b16 %v668
        %v835 = vunpack.c.l.b16 %v669
        %v836 = vunpack.c.l.b16 %v670
        %v837 = vunpack.c.l.b16 %v671
        %v838 = vunpack.c.l.b16 %v672
        %v839 = vunpack.c.l.b16 %v673
        %v840 = vunpack.c.l.b16 %v674
        %v841 = vunpack.c.l.b16 %v675
        %v842 = vunpack.c.l.b16 %v676
        %v843 = vunpack.c.l.b16 %v677
        %v844 = vunpack.c.l.b16 %v678
        %v845 = vunpack.c.l.b16 %v679
        %v846 = vunpack.c.l.b16 %v680
        %v847 = vunpack.c.l.b16 %v681
        %v848 = vunpack.c.l.b16 %v682
        %v849 = vunpack.c.l.b16 %v683
        %v850 = vunpack.c.l.b16 %v684
        %v851 = vunpack.c.l.b16 %v685
        %v852 = vunpack.c.l.b16 %v686
        %v853 = vunpack.c.l.b16 %v687
        %v854 = vunpack.c.l.b16 %v688
        %v855 = vunpack.c.l.b16 %v689
        %v856 = vunpack.c.l.b16 %v690
        %v857 = vunpack.c.l.b16 %v691
        %v858 = vunpack.c.l.b16 %v692
        %v859 = vunpack.c.l.b16 %v693
        %v860 = vunpack.c.l.b16 %v694
        %v861 = vunpack.c.l.b16 %v695
        %v862 = vunpack.c.l.b16 %v696
        %v863 = vunpack.c.l.b16 %v697
        %v864 = vunpack.c.l.b16 %v698
        %v865 = vunpack.c.l.b16 %v699
        %v866 = vunpack.c.l.b16 %v700
        %v867 = vunpack.c.l.b16 %v701
        %v868 = vunpack.c.l.b16 %v702
        %v869 = vunpack.c.l.b16 %v703
        %v870 = vunpack.c.l.b16 %v704
        %v871 = vunpack.c.l.b16 %v705
        %v872 = vunpack.c.l.b16 %v706
        %v873 = vunpack.c.l.b16 %v707
        %v874 = vunpack.c.l.b16 %v708
        %v875 = vunpack.c.l.b16 %v709
        %v876 = vunpack.c.l.b16 %v710
        %v877 = vunpack.c.l.b16 %v711
        %v878 = vunpack.c.l.b16 %v712
        %v879 = vunpack.c.l.b16 %v713
        %v880 = vunpack.c.l.b16 %v714
        %v881 = vunpack.c.l.b16 %v715
        %v882 = vunpack.c.l.b16 %v716
        %v883 = vunpack.c.l.b16 %v717
        %v884 = vunpack.c.l.b16 %v718
        %v885 = vunpack.c.l.b16 %v719
        %v886 = vunpack.c.l.b16 %v720
        %v887 = vunpack.c.l.b16 %v721
        %v888 = vunpack.c.l.b16 %v722
        %v889 = vunpack.c.l.b16 %v723
        %v890 = vunpack.c.l.b16 %v724
        %v891 = vunpack.c.l.b16 %v725
        %v892 = vunpack.c.l.b16 %v726
        %v893 = vunpack.c.l.b16 %v727
        %v894 = vunpack.c.l.b16 %v728
        %v895 = vunpack.c.l.b16 %v729
        %v896 = vpack.c.b16 %v817, %v816
        %v897 = vpack.c.b16 %v819, %v818
        %v898 = vpack.c.b16 %v821, %v820
        %v899 = vpack.c.b16 %v823, %v822
        %v900 = vpack.c.b16 %v825, %v824
        %v901 = vpack.c.b16 %v827, %v826
        %v902 = vpack.c.b16 %v829, %v828
        %v903 = vpack.c.b16 %v831, %v830
        %v904 = vpack.c.b16 %v833, %v832
        %v905 = vpack.c.b16 %v835, %v834
        %v906 = vpack.c.b16 %v837, %v836
        %v907 = vpack.c.b16 %v839, %v838
        %v908 = vpack.c.b16 %v841, %v840
        %v909 = vpack.c.b16 %v843, %v842
        %v910 = vpack.c.b16 %v845, %v844
        %v911 = vpack.c.b16 %v847, %v846
        %v912 = vpack.c.b16 %v849, %v848
        %v913 = vpack.c.b16 %v851, %v850
        %v914 = vpack.c.b16 %v853, %v852
        %v915 = vpack.c.b16 %v855, %v854
        %v916 = vpack.c.b16 %v857, %v856
        %v917 = vpack.c.b16 %v859, %v858
        %v918 = vpack.c.b16 %v861, %v860
        %v919 = vpack.c.b16 %v863, %v862
        %v920 = vpack.c.b16 %v865, %v864
        %v921 = vpack.c.b16 %v867, %v866
        %v922 = vpack.c.b16 %v869, %v868
        %v923 = vpack.c.b16 %v871, %v870
        %v924 = vpack.c.b16 %v873, %v872
        %v925 = vpack.c.b16 %v875, %v874
        %v926 = vpack.c.b16 %v877, %v876
        %v927 = vpack.c.b16 %v879, %v878
        %v928 = vpack.c.b16 %v881, %v880
        %v929 = vpack.c.b16 %v883, %v882
        %v930 = vpack.c.b16 %v885, %v884
        %v931 = vpack.c.b16 %v887, %v886
        %v932 = vpack.c.b16 %v889, %v888
        %v933 = vpack.c.b16 %v891, %v890
        %v934 = vpack.c.b16 %v893, %v892
        %v935 = vpack.c.b16 %v895, %v894
        %v938 = vunpack.c.l.b16 %v638
        %v939 = vunpack.c.l.b16 %v639
        %v940 = vpack.c.b16 %v939, %v938
        %vm942 = vcmask 130048
        %v944 = vsel %vm942, %v896, 0
        %v947 = vsel %vm942, %v897, 0
        %v950 = vsel %vm942, %v898, 0
        %v953 = vsel %vm942, %v899, 0
        %v956 = vsel %vm942, %v900, 0
        %v959 = vsel %vm942, %v901, 0
        %v962 = vsel %vm942, %v902, 0
        %v965 = vsel %vm942, %v903, 0
        %v968 = vsel %vm942, %v904, 0
        %v971 = vsel %vm942, %v905, 0
        %v974 = vsel %vm942, %v906, 0
        %v977 = vsel %vm942, %v907, 0
        %v980 = vsel %vm942, %v908, 0
        %v983 = vsel %vm942, %v909, 0
        %v986 = vsel %vm942, %v910, 0
        %v989 = vsel %vm942, %v911, 0
        %v992 = vsel %vm942, %v912, 0
        %v995 = vsel %vm942, %v913, 0
        %v998 = vsel %vm942, %v914, 0
        %v1001 = vsel %vm942, %v915, 0
        %v1004 = vsel %vm942, %v916, 0
        %v1007 = vsel %vm942, %v917, 0
        %v1010 = vsel %vm942, %v918, 0
        %v1013 = vsel %vm942, %v919, 0
        %v1016 = vsel %vm942, %v920, 0
        %v1019 = vsel %vm942, %v921, 0
        %v1022 = vsel %vm942, %v922, 0
        %v1025 = vsel %vm942, %v923, 0
        %v1028 = vsel %vm942, %v924, 0
        %v1031 = vsel %vm942, %v925, 0
        %v1034 = vsel %vm942, %v926, 0
        %v1037 = vsel %vm942, %v927, 0
        %v1040 = vsel %vm942, %v928, 0
        %v1043 = vsel %vm942, %v929, 0
        %v1046 = vsel %vm942, %v930, 0
        %v1049 = vsel %vm942, %v931, 0
        %v1052 = vsel %vm942, %v932, 0
        %v1055 = vsel %vm942, %v933, 0
        %v1058 = vsel %vm942, %v934, 0
        %v1061 = vsel %vm942, %v935, 0
        %1063 = vmatprep.subr.bf16.mxu0 0
        %1064 = vmatpush1.bf16.msra.mxu0 %v940
        %1065 = vmatprep.subr.bf16.mxu0 0
        %1066 = vmatpush1.bf16.msra.mxu0 0
        %1067 = vmatprep.subr.bf16.mxu0 0
        %1068 = vmatpush1.bf16.msra.mxu0 0
        %1069 = vmatprep.subr.bf16.mxu0 0
        %1070 = vmatpush1.bf16.msra.mxu0 0
        %1071 = vmatprep.subr.bf16.mxu0 0
        %1072 = vmatpush1.bf16.msra.mxu0 0
        %1073 = vmatprep.subr.bf16.mxu0 0
        %1074 = vmatpush1.bf16.msra.mxu0 0
        %1075 = vmatprep.subr.bf16.mxu0 0
        %1076 = vmatpush1.bf16.msra.mxu0 0
        %1077 = vmatprep.subr.bf16.mxu0 0
        %1078 = vmatpush1.bf16.msra.mxu0 0
        %1079 = vmatprep.subr.bf16.mxu0 0
        %1080 = vmatpush1.bf16.msra.mxu0 0
        %1081 = vmatprep.subr.bf16.mxu0 0
        %1082 = vmatpush1.bf16.msra.mxu0 0
        %1083 = vmatprep.subr.bf16.mxu0 0
        %1084 = vmatpush1.bf16.msra.mxu0 0
        %1085 = vmatprep.subr.bf16.mxu0 0
        %1086 = vmatpush1.bf16.msra.mxu0 0
        %1087 = vmatprep.subr.bf16.mxu0 0
        %1088 = vmatpush1.bf16.msra.mxu0 0
        %1089 = vmatprep.subr.bf16.mxu0 0
        %1090 = vmatpush1.bf16.msra.mxu0 0
        %1091 = vmatprep.subr.bf16.mxu0 0
        %1092 = vmatpush1.bf16.msra.mxu0 0
        %1093 = vmatprep.subr.bf16.mxu0 0
        %1094 = vmatpush1.bf16.msra.mxu0 0
        %1095 = vmatprep.mubr.bf16.mxu0 0
        %1096 = vmatmul.mubr.bf16.gmra.mrb[0].mxu0 %v944
        %v1097 = vpop.f32.mrb[0].mxu0
        %v1098 = vadd.f32 %v734, %v1097
        %v1099 = vpop.f32.mrb[0].mxu0
        %v1100 = vpop.f32.mrb[0].mxu0
        %v1101 = vadd.f32 %v734, %v1100
        %v1102 = vpop.f32.mrb[0].mxu0
        %1103 = vmatprep.mubr.bf16.mxu0 0
        %1104 = vmatmul.mubr.bf16.gmra.mrb[0].mxu0 %v947
        %v1105 = vpop.f32.mrb[0].mxu0
        %v1106 = vadd.f32 %v734, %v1105
        %v1107 = vpop.f32.mrb[0].mxu0
        %v1108 = vpop.f32.mrb[0].mxu0
        %v1109 = vadd.f32 %v734, %v1108
        %v1110 = vpop.f32.mrb[0].mxu0
        %1111 = vmatprep.mubr.bf16.mxu0 0
        %1112 = vmatmul.mubr.bf16.gmra.mrb[0].mxu0 %v950
        %v1113 = vpop.f32.mrb[0].mxu0
        %v1114 = vadd.f32 %v734, %v1113
        %v1115 = vpop.f32.mrb[0].mxu0
        %v1116 = vpop.f32.mrb[0].mxu0
        %v1117 = vadd.f32 %v734, %v1116
        %v1118 = vpop.f32.mrb[0].mxu0
        %1119 = vmatprep.mubr.bf16.mxu0 0
        %1120 = vmatmul.mubr.bf16.gmra.mrb[0].mxu0 %v953
        %v1121 = vpop.f32.mrb[0].mxu0
        %v1122 = vadd.f32 %v734, %v1121
        %v1123 = vpop.f32.mrb[0].mxu0
        %v1124 = vpop.f32.mrb[0].mxu0
        %v1125 = vadd.f32 %v734, %v1124
        %v1126 = vpop.f32.mrb[0].mxu0
        %1127 = vmatprep.mubr.bf16.mxu0 0
        %1128 = vmatmul.mubr.bf16.gmra.mrb[0].mxu0 %v956
        %v1129 = vpop.f32.mrb[0].mxu0
        %v1130 = vadd.f32 %v734, %v1129
        %v1131 = vpop.f32.mrb[0].mxu0
        %v1132 = vpop.f32.mrb[0].mxu0
        %v1133 = vadd.f32 %v734, %v1132
        %v1134 = vpop.f32.mrb[0].mxu0
        %1135 = vmatprep.mubr.bf16.mxu0 0
        %1136 = vmatmul.mubr.bf16.gmra.mrb[0].mxu0 %v959
        %v1137 = vpop.f32.mrb[0].mxu0
        %v1138 = vadd.f32 %v734, %v1137
        %v1139 = vpop.f32.mrb[0].mxu0
        %v1140 = vpop.f32.mrb[0].mxu0
        %v1141 = vadd.f32 %v734, %v1140
        %v1142 = vpop.f32.mrb[0].mxu0
        %1143 = vmatprep.mubr.bf16.mxu0 0
        %1144 = vmatmul.mubr.bf16.gmra.mrb[0].mxu0 %v962
        %v1145 = vpop.f32.mrb[0].mxu0
        %v1146 = vadd.f32 %v734, %v1145
        %v1147 = vpop.f32.mrb[0].mxu0
        %v1148 = vpop.f32.mrb[0].mxu0
        %v1149 = vadd.f32 %v734, %v1148
        %v1150 = vpop.f32.mrb[0].mxu0
        %1151 = vmatprep.mubr.bf16.mxu0 0
        %1152 = vmatmul.mubr.bf16.gmra.mrb[0].mxu0 %v965
        %v1153 = vpop.f32.mrb[0].mxu0
        %v1154 = vadd.f32 %v734, %v1153
        %v1155 = vpop.f32.mrb[0].mxu0
        %v1156 = vpop.f32.mrb[0].mxu0
        %v1157 = vadd.f32 %v734, %v1156
        %v1158 = vpop.f32.mrb[0].mxu0
        %1159 = vmatprep.mubr.bf16.mxu0 0
        %1160 = vmatmul.mubr.bf16.gmra.mrb[0].mxu0 %v968
        %v1161 = vpop.f32.mrb[0].mxu0
        %v1162 = vadd.f32 %v734, %v1161
        %v1163 = vpop.f32.mrb[0].mxu0
        %v1164 = vpop.f32.mrb[0].mxu0
        %v1165 = vadd.f32 %v734, %v1164
        %v1166 = vpop.f32.mrb[0].mxu0
        %1167 = vmatprep.mubr.bf16.mxu0 0
        %1168 = vmatmul.mubr.bf16.gmra.mrb[0].mxu0 %v971
        %v1169 = vpop.f32.mrb[0].mxu0
        %v1170 = vadd.f32 %v734, %v1169
        %v1171 = vpop.f32.mrb[0].mxu0
        %v1172 = vpop.f32.mrb[0].mxu0
        %v1173 = vadd.f32 %v734, %v1172
        %v1174 = vpop.f32.mrb[0].mxu0
        %1175 = vmatprep.mubr.bf16.mxu0 0
        %1176 = vmatmul.mubr.bf16.gmra.mrb[0].mxu0 %v974
        %v1177 = vpop.f32.mrb[0].mxu0
        %v1178 = vadd.f32 %v734, %v1177
        %v1179 = vpop.f32.mrb[0].mxu0
        %v1180 = vpop.f32.mrb[0].mxu0
        %v1181 = vadd.f32 %v734, %v1180
        %v1182 = vpop.f32.mrb[0].mxu0
        %1183 = vmatprep.mubr.bf16.mxu0 0
        %1184 = vmatmul.mubr.bf16.gmra.mrb[0].mxu0 %v977
        %v1185 = vpop.f32.mrb[0].mxu0
        %v1186 = vadd.f32 %v734, %v1185
        %v1187 = vpop.f32.mrb[0].mxu0
        %v1188 = vpop.f32.mrb[0].mxu0
        %v1189 = vadd.f32 %v734, %v1188
        %v1190 = vpop.f32.mrb[0].mxu0
        %1191 = vmatprep.mubr.bf16.mxu0 0
        %1192 = vmatmul.mubr.bf16.gmra.mrb[0].mxu0 %v980
        %v1193 = vpop.f32.mrb[0].mxu0
        %v1194 = vadd.f32 %v734, %v1193
        %v1195 = vpop.f32.mrb[0].mxu0
        %v1196 = vpop.f32.mrb[0].mxu0
        %v1197 = vadd.f32 %v734, %v1196
        %v1198 = vpop.f32.mrb[0].mxu0
        %1199 = vmatprep.mubr.bf16.mxu0 0
        %1200 = vmatmul.mubr.bf16.gmra.mrb[0].mxu0 %v983
        %v1201 = vpop.f32.mrb[0].mxu0
        %v1202 = vadd.f32 %v734, %v1201
        %v1203 = vpop.f32.mrb[0].mxu0
        %v1204 = vpop.f32.mrb[0].mxu0
        %v1205 = vadd.f32 %v734, %v1204
        %v1206 = vpop.f32.mrb[0].mxu0
        %1207 = vmatprep.mubr.bf16.mxu0 0
        %1208 = vmatmul.mubr.bf16.gmra.mrb[0].mxu0 %v986
        %v1209 = vpop.f32.mrb[0].mxu0
        %v1210 = vadd.f32 %v734, %v1209
        %v1211 = vpop.f32.mrb[0].mxu0
        %v1212 = vpop.f32.mrb[0].mxu0
        %v1213 = vadd.f32 %v734, %v1212
        %v1214 = vpop.f32.mrb[0].mxu0
        %1215 = vmatprep.mubr.bf16.mxu0 0
        %1216 = vmatmul.mubr.bf16.gmra.mrb[0].mxu0 %v989
        %v1217 = vpop.f32.mrb[0].mxu0
        %v1218 = vadd.f32 %v734, %v1217
        %v1219 = vpop.f32.mrb[0].mxu0
        %v1220 = vpop.f32.mrb[0].mxu0
        %v1221 = vadd.f32 %v734, %v1220
        %v1222 = vpop.f32.mrb[0].mxu0
        %1223 = vmatprep.mubr.bf16.mxu0 0
        %1224 = vmatmul.mubr.bf16.gmra.mrb[0].mxu0 %v992
        %v1225 = vpop.f32.mrb[0].mxu0
        %v1226 = vadd.f32 %v734, %v1225
        %v1227 = vpop.f32.mrb[0].mxu0
        %v1228 = vpop.f32.mrb[0].mxu0
        %v1229 = vadd.f32 %v734, %v1228
        %v1230 = vpop.f32.mrb[0].mxu0
        %1231 = vmatprep.mubr.bf16.mxu0 0
        %1232 = vmatmul.mubr.bf16.gmra.mrb[0].mxu0 %v995
        %v1233 = vpop.f32.mrb[0].mxu0
        %v1234 = vadd.f32 %v734, %v1233
        %v1235 = vpop.f32.mrb[0].mxu0
        %v1236 = vpop.f32.mrb[0].mxu0
        %v1237 = vadd.f32 %v734, %v1236
        %v1238 = vpop.f32.mrb[0].mxu0
        %1239 = vmatprep.mubr.bf16.mxu0 0
        %1240 = vmatmul.mubr.bf16.gmra.mrb[0].mxu0 %v998
        %v1241 = vpop.f32.mrb[0].mxu0
        %v1242 = vadd.f32 %v734, %v1241
        %v1243 = vpop.f32.mrb[0].mxu0
        %v1244 = vpop.f32.mrb[0].mxu0
        %v1245 = vadd.f32 %v734, %v1244
        %v1246 = vpop.f32.mrb[0].mxu0
        %1247 = vmatprep.mubr.bf16.mxu0 0
        %1248 = vmatmul.mubr.bf16.gmra.mrb[0].mxu0 %v1001
        %v1249 = vpop.f32.mrb[0].mxu0
        %v1250 = vadd.f32 %v734, %v1249
        %v1251 = vpop.f32.mrb[0].mxu0
        %v1252 = vpop.f32.mrb[0].mxu0
        %v1253 = vadd.f32 %v734, %v1252
        %v1254 = vpop.f32.mrb[0].mxu0
        %1255 = vmatprep.mubr.bf16.mxu0 0
        %1256 = vmatmul.mubr.bf16.gmra.mrb[0].mxu0 %v1004
        %v1257 = vpop.f32.mrb[0].mxu0
        %v1258 = vadd.f32 %v734, %v1257
        %v1259 = vpop.f32.mrb[0].mxu0
        %v1260 = vpop.f32.mrb[0].mxu0
        %v1261 = vadd.f32 %v734, %v1260
        %v1262 = vpop.f32.mrb[0].mxu0
        %1263 = vmatprep.mubr.bf16.mxu0 0
        %1264 = vmatmul.mubr.bf16.gmra.mrb[0].mxu0 %v1007
        %v1265 = vpop.f32.mrb[0].mxu0
        %v1266 = vadd.f32 %v734, %v1265
        %v1267 = vpop.f32.mrb[0].mxu0
        %v1268 = vpop.f32.mrb[0].mxu0
        %v1269 = vadd.f32 %v734, %v1268
        %v1270 = vpop.f32.mrb[0].mxu0
        %1271 = vmatprep.mubr.bf16.mxu0 0
        %1272 = vmatmul.mubr.bf16.gmra.mrb[0].mxu0 %v1010
        %v1273 = vpop.f32.mrb[0].mxu0
        %v1274 = vadd.f32 %v734, %v1273
        %v1275 = vpop.f32.mrb[0].mxu0
        %v1276 = vpop.f32.mrb[0].mxu0
        %v1277 = vadd.f32 %v734, %v1276
        %v1278 = vpop.f32.mrb[0].mxu0
        %1279 = vmatprep.mubr.bf16.mxu0 0
        %1280 = vmatmul.mubr.bf16.gmra.mrb[0].mxu0 %v1013
        %v1281 = vpop.f32.mrb[0].mxu0
        %v1282 = vadd.f32 %v734, %v1281
        %v1283 = vpop.f32.mrb[0].mxu0
        %v1284 = vpop.f32.mrb[0].mxu0
        %v1285 = vadd.f32 %v734, %v1284
        %v1286 = vpop.f32.mrb[0].mxu0
        %1287 = vmatprep.mubr.bf16.mxu0 0
        %1288 = vmatmul.mubr.bf16.gmra.mrb[0].mxu0 %v1016
        %v1289 = vpop.f32.mrb[0].mxu0
        %v1290 = vadd.f32 %v734, %v1289
        %v1291 = vpop.f32.mrb[0].mxu0
        %v1292 = vpop.f32.mrb[0].mxu0
        %v1293 = vadd.f32 %v734, %v1292
        %v1294 = vpop.f32.mrb[0].mxu0
        %1295 = vmatprep.mubr.bf16.mxu0 0
        %1296 = vmatmul.mubr.bf16.gmra.mrb[0].mxu0 %v1019
        %v1297 = vpop.f32.mrb[0].mxu0
        %v1298 = vadd.f32 %v734, %v1297
        %v1299 = vpop.f32.mrb[0].mxu0
        %v1300 = vpop.f32.mrb[0].mxu0
        %v1301 = vadd.f32 %v734, %v1300
        %v1302 = vpop.f32.mrb[0].mxu0
        %1303 = vmatprep.mubr.bf16.mxu0 0
        %1304 = vmatmul.mubr.bf16.gmra.mrb[0].mxu0 %v1022
        %v1305 = vpop.f32.mrb[0].mxu0
        %v1306 = vadd.f32 %v734, %v1305
        %v1307 = vpop.f32.mrb[0].mxu0
        %v1308 = vpop.f32.mrb[0].mxu0
        %v1309 = vadd.f32 %v734, %v1308
        %v1310 = vpop.f32.mrb[0].mxu0
        %1311 = vmatprep.mubr.bf16.mxu0 0
        %1312 = vmatmul.mubr.bf16.gmra.mrb[0].mxu0 %v1025
        %v1313 = vpop.f32.mrb[0].mxu0
        %v1314 = vadd.f32 %v734, %v1313
        %v1315 = vpop.f32.mrb[0].mxu0
        %v1316 = vpop.f32.mrb[0].mxu0
        %v1317 = vadd.f32 %v734, %v1316
        %v1318 = vpop.f32.mrb[0].mxu0
        %1319 = vmatprep.mubr.bf16.mxu0 0
        %1320 = vmatmul.mubr.bf16.gmra.mrb[0].mxu0 %v1028
        %v1321 = vpop.f32.mrb[0].mxu0
        %v1322 = vadd.f32 %v734, %v1321
        %v1323 = vpop.f32.mrb[0].mxu0
        %v1324 = vpop.f32.mrb[0].mxu0
        %v1325 = vadd.f32 %v734, %v1324
        %v1326 = vpop.f32.mrb[0].mxu0
        %1327 = vmatprep.mubr.bf16.mxu0 0
        %1328 = vmatmul.mubr.bf16.gmra.mrb[0].mxu0 %v1031
        %v1329 = vpop.f32.mrb[0].mxu0
        %v1330 = vadd.f32 %v734, %v1329
        %v1331 = vpop.f32.mrb[0].mxu0
        %v1332 = vpop.f32.mrb[0].mxu0
        %v1333 = vadd.f32 %v734, %v1332
        %v1334 = vpop.f32.mrb[0].mxu0
        %1335 = vmatprep.mubr.bf16.mxu0 0
        %1336 = vmatmul.mubr.bf16.gmra.mrb[0].mxu0 %v1034
        %v1337 = vpop.f32.mrb[0].mxu0
        %v1338 = vadd.f32 %v734, %v1337
        %v1339 = vpop.f32.mrb[0].mxu0
        %v1340 = vpop.f32.mrb[0].mxu0
        %v1341 = vadd.f32 %v734, %v1340
        %v1342 = vpop.f32.mrb[0].mxu0
        %1343 = vmatprep.mubr.bf16.mxu0 0
        %1344 = vmatmul.mubr.bf16.gmra.mrb[0].mxu0 %v1037
        %v1345 = vpop.f32.mrb[0].mxu0
        %v1346 = vadd.f32 %v734, %v1345
        %v1347 = vpop.f32.mrb[0].mxu0
        %v1348 = vpop.f32.mrb[0].mxu0
        %v1349 = vadd.f32 %v734, %v1348
        %v1350 = vpop.f32.mrb[0].mxu0
        %1351 = vmatprep.mubr.bf16.mxu0 0
        %1352 = vmatmul.mubr.bf16.gmra.mrb[0].mxu0 %v1040
        %v1353 = vpop.f32.mrb[0].mxu0
        %v1354 = vadd.f32 %v734, %v1353
        %v1355 = vpop.f32.mrb[0].mxu0
        %v1356 = vpop.f32.mrb[0].mxu0
        %v1357 = vadd.f32 %v734, %v1356
        %v1358 = vpop.f32.mrb[0].mxu0
        %1359 = vmatprep.mubr.bf16.mxu0 0
        %1360 = vmatmul.mubr.bf16.gmra.mrb[0].mxu0 %v1043
        %v1361 = vpop.f32.mrb[0].mxu0
        %v1362 = vadd.f32 %v734, %v1361
        %v1363 = vpop.f32.mrb[0].mxu0
        %v1364 = vpop.f32.mrb[0].mxu0
        %v1365 = vadd.f32 %v734, %v1364
        %v1366 = vpop.f32.mrb[0].mxu0
        %1367 = vmatprep.mubr.bf16.mxu0 0
        %1368 = vmatmul.mubr.bf16.gmra.mrb[0].mxu0 %v1046
        %v1369 = vpop.f32.mrb[0].mxu0
        %v1370 = vadd.f32 %v734, %v1369
        %v1371 = vpop.f32.mrb[0].mxu0
        %v1372 = vpop.f32.mrb[0].mxu0
        %v1373 = vadd.f32 %v734, %v1372
        %v1374 = vpop.f32.mrb[0].mxu0
        %1375 = vmatprep.mubr.bf16.mxu0 0
        %1376 = vmatmul.mubr.bf16.gmra.mrb[0].mxu0 %v1049
        %v1377 = vpop.f32.mrb[0].mxu0
        %v1378 = vadd.f32 %v734, %v1377
        %v1379 = vpop.f32.mrb[0].mxu0
        %v1380 = vpop.f32.mrb[0].mxu0
        %v1381 = vadd.f32 %v734, %v1380
        %v1382 = vpop.f32.mrb[0].mxu0
        %1383 = vmatprep.mubr.bf16.mxu0 0
        %1384 = vmatmul.mubr.bf16.gmra.mrb[0].mxu0 %v1052
        %v1385 = vpop.f32.mrb[0].mxu0
        %v1386 = vadd.f32 %v734, %v1385
        %v1387 = vpop.f32.mrb[0].mxu0
        %v1388 = vpop.f32.mrb[0].mxu0
        %v1389 = vadd.f32 %v734, %v1388
        %v1390 = vpop.f32.mrb[0].mxu0
        %1391 = vmatprep.mubr.bf16.mxu0 0
        %1392 = vmatmul.mubr.bf16.gmra.mrb[0].mxu0 %v1055
        %v1393 = vpop.f32.mrb[0].mxu0
        %v1394 = vadd.f32 %v734, %v1393
        %v1395 = vpop.f32.mrb[0].mxu0
        %v1396 = vpop.f32.mrb[0].mxu0
        %v1397 = vadd.f32 %v734, %v1396
        %v1398 = vpop.f32.mrb[0].mxu0
        %1399 = vmatprep.mubr.bf16.mxu0 0
        %1400 = vmatmul.mubr.bf16.gmra.mrb[0].mxu0 %v1058
        %v1401 = vpop.f32.mrb[0].mxu0
        %v1402 = vadd.f32 %v734, %v1401
        %v1403 = vpop.f32.mrb[0].mxu0
        %v1404 = vpop.f32.mrb[0].mxu0
        %v1405 = vadd.f32 %v734, %v1404
        %v1406 = vpop.f32.mrb[0].mxu0
        %1407 = vmatprep.mubr.bf16.mxu0 0
        %1408 = vmatmul.mubr.bf16.gmra.mrb[0].mxu0 %v1061
        %v1409 = vpop.f32.mrb[0].mxu0
        %v1410 = vadd.f32 %v734, %v1409
        %v1411 = vpop.f32.mrb[0].mxu0
        %v1412 = vpop.f32.mrb[0].mxu0
        %v1413 = vadd.f32 %v734, %v1412
        %v1414 = vpop.f32.mrb[0].mxu0
        %1415 = vdwg.mxu0
        %vm1416 = vcmask 523264
        %1417 = vst.msk [vmem:[#allocation2] sm:$0xff] %vm1416, %v1098
        %1418 = vst.msk [vmem:[#allocation2 + $0x8] sm:$0xff] %vm1416, %v1101
        %1419 = vst.msk [vmem:[#allocation2 + $0x10] sm:$0xff] %vm1416, %v1106
        %1420 = vst.msk [vmem:[#allocation2 + $0x18] sm:$0xff] %vm1416, %v1109
        %1421 = vst.msk [vmem:[#allocation2 + $0x20] sm:$0xff] %vm1416, %v1114
        %1422 = vst.msk [vmem:[#allocation2 + $0x28] sm:$0xff] %vm1416, %v1117
        %1423 = vst.msk [vmem:[#allocation2 + $0x30] sm:$0xff] %vm1416, %v1122
        %1424 = vst.msk [vmem:[#allocation2 + $0x38] sm:$0xff] %vm1416, %v1125
        %1425 = vst.msk [vmem:[#allocation2 + $0x40] sm:$0xff] %vm1416, %v1130
        %1426 = vst.msk [vmem:[#allocation2 + $0x48] sm:$0xff] %vm1416, %v1133
        %1427 = vst.msk [vmem:[#allocation2 + $0x50] sm:$0xff] %vm1416, %v1138
        %1428 = vst.msk [vmem:[#allocation2 + $0x58] sm:$0xff] %vm1416, %v1141
        %1429 = vst.msk [vmem:[#allocation2 + $0x60] sm:$0xff] %vm1416, %v1146
        %1430 = vst.msk [vmem:[#allocation2 + $0x68] sm:$0xff] %vm1416, %v1149
        %1431 = vst.msk [vmem:[#allocation2 + $0x70] sm:$0xff] %vm1416, %v1154
        %1432 = vst.msk [vmem:[#allocation2 + $0x78] sm:$0xff] %vm1416, %v1157
        %1433 = vst.msk [vmem:[#allocation2 + $0x80] sm:$0xff] %vm1416, %v1162
        %1434 = vst.msk [vmem:[#allocation2 + $0x88] sm:$0xff] %vm1416, %v1165
        %1435 = vst.msk [vmem:[#allocation2 + $0x90] sm:$0xff] %vm1416, %v1170
        %1436 = vst.msk [vmem:[#allocation2 + $0x98] sm:$0xff] %vm1416, %v1173
        %1437 = vst.msk [vmem:[#allocation2 + $0xa0] sm:$0xff] %vm1416, %v1178
        %1438 = vst.msk [vmem:[#allocation2 + $0xa8] sm:$0xff] %vm1416, %v1181
        %1439 = vst.msk [vmem:[#allocation2 + $0xb0] sm:$0xff] %vm1416, %v1186
        %1440 = vst.msk [vmem:[#allocation2 + $0xb8] sm:$0xff] %vm1416, %v1189
        %1441 = vst.msk [vmem:[#allocation2 + $0xc0] sm:$0xff] %vm1416, %v1194
        %1442 = vst.msk [vmem:[#allocation2 + $0xc8] sm:$0xff] %vm1416, %v1197
        %1443 = vst.msk [vmem:[#allocation2 + $0xd0] sm:$0xff] %vm1416, %v1202
        %1444 = vst.msk [vmem:[#allocation2 + $0xd8] sm:$0xff] %vm1416, %v1205
        %1445 = vst.msk [vmem:[#allocation2 + $0xe0] sm:$0xff] %vm1416, %v1210
        %1446 = vst.msk [vmem:[#allocation2 + $0xe8] sm:$0xff] %vm1416, %v1213
        %1447 = vst.msk [vmem:[#allocation2 + $0xf0] sm:$0xff] %vm1416, %v1218
        %1448 = vst.msk [vmem:[#allocation2 + $0xf8] sm:$0xff] %vm1416, %v1221
        %1449 = vst.msk [vmem:[#allocation2 + $0x100] sm:$0xff] %vm1416, %v1226
        %1450 = vst.msk [vmem:[#allocation2 + $0x108] sm:$0xff] %vm1416, %v1229
        %1451 = vst.msk [vmem:[#allocation2 + $0x110] sm:$0xff] %vm1416, %v1234
        %1452 = vst.msk [vmem:[#allocation2 + $0x118] sm:$0xff] %vm1416, %v1237
        %1453 = vst.msk [vmem:[#allocation2 + $0x120] sm:$0xff] %vm1416, %v1242
        %1454 = vst.msk [vmem:[#allocation2 + $0x128] sm:$0xff] %vm1416, %v1245
        %1455 = vst.msk [vmem:[#allocation2 + $0x130] sm:$0xff] %vm1416, %v1250
        %1456 = vst.msk [vmem:[#allocation2 + $0x138] sm:$0xff] %vm1416, %v1253
        %1457 = vst.msk [vmem:[#allocation2 + $0x140] sm:$0xff] %vm1416, %v1258
        %1458 = vst.msk [vmem:[#allocation2 + $0x148] sm:$0xff] %vm1416, %v1261
        %1459 = vst.msk [vmem:[#allocation2 + $0x150] sm:$0xff] %vm1416, %v1266
        %1460 = vst.msk [vmem:[#allocation2 + $0x158] sm:$0xff] %vm1416, %v1269
        %1461 = vst.msk [vmem:[#allocation2 + $0x160] sm:$0xff] %vm1416, %v1274
        %1462 = vst.msk [vmem:[#allocation2 + $0x168] sm:$0xff] %vm1416, %v1277
        %1463 = vst.msk [vmem:[#allocation2 + $0x170] sm:$0xff] %vm1416, %v1282
        %1464 = vst.msk [vmem:[#allocation2 + $0x178] sm:$0xff] %vm1416, %v1285
        %1465 = vst.msk [vmem:[#allocation2 + $0x180] sm:$0xff] %vm1416, %v1290
        %1466 = vst.msk [vmem:[#allocation2 + $0x188] sm:$0xff] %vm1416, %v1293
        %1467 = vst.msk [vmem:[#allocation2 + $0x190] sm:$0xff] %vm1416, %v1298
        %1468 = vst.msk [vmem:[#allocation2 + $0x198] sm:$0xff] %vm1416, %v1301
        %1469 = vst.msk [vmem:[#allocation2 + $0x1a0] sm:$0xff] %vm1416, %v1306
        %1470 = vst.msk [vmem:[#allocation2 + $0x1a8] sm:$0xff] %vm1416, %v1309
        %1471 = vst.msk [vmem:[#allocation2 + $0x1b0] sm:$0xff] %vm1416, %v1314
        %1472 = vst.msk [vmem:[#allocation2 + $0x1b8] sm:$0xff] %vm1416, %v1317
        %1473 = vst.msk [vmem:[#allocation2 + $0x1c0] sm:$0xff] %vm1416, %v1322
        %1474 = vst.msk [vmem:[#allocation2 + $0x1c8] sm:$0xff] %vm1416, %v1325
        %1475 = vst.msk [vmem:[#allocation2 + $0x1d0] sm:$0xff] %vm1416, %v1330
        %1476 = vst.msk [vmem:[#allocation2 + $0x1d8] sm:$0xff] %vm1416, %v1333
        %1477 = vst.msk [vmem:[#allocation2 + $0x1e0] sm:$0xff] %vm1416, %v1338
        %1478 = vst.msk [vmem:[#allocation2 + $0x1e8] sm:$0xff] %vm1416, %v1341
        %1479 = vst.msk [vmem:[#allocation2 + $0x1f0] sm:$0xff] %vm1416, %v1346
        %1480 = vst.msk [vmem:[#allocation2 + $0x1f8] sm:$0xff] %vm1416, %v1349
        %1481 = vst.msk [vmem:[#allocation2 + $0x200] sm:$0xff] %vm1416, %v1354
        %1482 = vst.msk [vmem:[#allocation2 + $0x208] sm:$0xff] %vm1416, %v1357
        %1483 = vst.msk [vmem:[#allocation2 + $0x210] sm:$0xff] %vm1416, %v1362
        %1484 = vst.msk [vmem:[#allocation2 + $0x218] sm:$0xff] %vm1416, %v1365
        %1485 = vst.msk [vmem:[#allocation2 + $0x220] sm:$0xff] %vm1416, %v1370
        %1486 = vst.msk [vmem:[#allocation2 + $0x228] sm:$0xff] %vm1416, %v1373
        %1487 = vst.msk [vmem:[#allocation2 + $0x230] sm:$0xff] %vm1416, %v1378
        %1488 = vst.msk [vmem:[#allocation2 + $0x238] sm:$0xff] %vm1416, %v1381
        %1489 = vst.msk [vmem:[#allocation2 + $0x240] sm:$0xff] %vm1416, %v1386
        %1490 = vst.msk [vmem:[#allocation2 + $0x248] sm:$0xff] %vm1416, %v1389
        %1491 = vst.msk [vmem:[#allocation2 + $0x250] sm:$0xff] %vm1416, %v1394
        %1492 = vst.msk [vmem:[#allocation2 + $0x258] sm:$0xff] %vm1416, %v1397
        %1493 = vst.msk [vmem:[#allocation2 + $0x260] sm:$0xff] %vm1416, %v1402
        %1494 = vst.msk [vmem:[#allocation2 + $0x268] sm:$0xff] %vm1416, %v1405
        %1495 = vst.msk [vmem:[#allocation2 + $0x270] sm:$0xff] %vm1416, %v1410
        %1496 = vst.msk [vmem:[#allocation2 + $0x278] sm:$0xff] %vm1416, %v1413
        %v1497 = vld [vmem:[#allocation2 + $0x80] sm:$0xff]
        %v1498 = vld [vmem:[#allocation2 + $0x88] sm:$0xff]
        %v1499 = vld [vmem:[#allocation2 + $0x90] sm:$0xff]
        %v1500 = vld [vmem:[#allocation2 + $0x98] sm:$0xff]
        %v1501 = vld [vmem:[#allocation2 + $0xa0] sm:$0xff]
        %v1502 = vld [vmem:[#allocation2 + $0xa8] sm:$0xff]
        %v1503 = vld [vmem:[#allocation2 + $0xb0] sm:$0xff]
        %v1504 = vld [vmem:[#allocation2 + $0xb8] sm:$0xff]
        %v1505 = vld [vmem:[#allocation2 + $0xc0] sm:$0xff]
        %v1506 = vld [vmem:[#allocation2 + $0xc8] sm:$0xff]
        %v1507 = vld [vmem:[#allocation2 + $0xd0] sm:$0xff]
        %v1508 = vld [vmem:[#allocation2 + $0xd8] sm:$0xff]
        %v1509 = vld [vmem:[#allocation2 + $0xe0] sm:$0xff]
        %v1510 = vld [vmem:[#allocation2 + $0xe8] sm:$0xff]
        %v1511 = vld [vmem:[#allocation2 + $0xf0] sm:$0xff]
        %v1512 = vld [vmem:[#allocation2 + $0xf8] sm:$0xff]
        %v1513 = vmul.f32 %v1497, 0.8999955
        %v1514 = vmul.f32 %v1498, 0.8999955
        %v1515 = vmul.f32 %v1499, 0.8999955
        %v1516 = vmul.f32 %v1500, 0.8999955
        %v1517 = vmul.f32 %v1501, 0.8999955
        %v1518 = vmul.f32 %v1502, 0.8999955
        %v1519 = vmul.f32 %v1503, 0.8999955
        %v1520 = vmul.f32 %v1504, 0.8999955
        %v1521 = vmul.f32 %v1505, 0.8999955
        %v1522 = vmul.f32 %v1506, 0.8999955
        %v1523 = vmul.f32 %v1507, 0.8999955
        %v1524 = vmul.f32 %v1508, 0.8999955
        %v1525 = vmul.f32 %v1509, 0.8999955
        %v1526 = vmul.f32 %v1510, 0.8999955
        %v1527 = vmul.f32 %v1511, 0.8999955
        %v1528 = vmul.f32 %v1512, 0.8999955
        %v1529 = vadd.f32 %v1513, 0.05
        %v1530 = vadd.f32 %v1514, 0.05
        %v1531 = vadd.f32 %v1515, 0.05
        %v1532 = vadd.f32 %v1516, 0.05
        %v1533 = vadd.f32 %v1517, 0.05
        %v1534 = vadd.f32 %v1518, 0.05
        %v1535 = vadd.f32 %v1519, 0.05
        %v1536 = vadd.f32 %v1520, 0.05
        %v1537 = vadd.f32 %v1521, 0.05
        %v1538 = vadd.f32 %v1522, 0.05
        %v1539 = vadd.f32 %v1523, 0.05
        %v1540 = vadd.f32 %v1524, 0.05
        %v1541 = vadd.f32 %v1525, 0.05
        %v1542 = vadd.f32 %v1526, 0.05
        %v1543 = vadd.f32 %v1527, 0.05
        %v1544 = vadd.f32 %v1528, 0.05
        %v1545 = vmax.f32 %v1529, 0.0
        %v1546 = vmax.f32 %v1530, 0.0
        %v1547 = vmax.f32 %v1531, 0.0
        %v1548 = vmax.f32 %v1532, 0.0
        %v1549 = vmax.f32 %v1533, 0.0
        %v1550 = vmax.f32 %v1534, 0.0
        %v1551 = vmax.f32 %v1535, 0.0
        %v1552 = vmax.f32 %v1536, 0.0
        %v1553 = vmax.f32 %v1537, 0.0
        %v1554 = vmax.f32 %v1538, 0.0
        %v1555 = vmax.f32 %v1539, 0.0
        %v1556 = vmax.f32 %v1540, 0.0
        %v1557 = vmax.f32 %v1541, 0.0
        %v1558 = vmax.f32 %v1542, 0.0
        %v1559 = vmax.f32 %v1543, 0.0
        %v1560 = vmax.f32 %v1544, 0.0
        %v1561 = vadd.f32 %v1497, 0.0
        %v1562 = vadd.f32 %v1498, 0.0
        %v1563 = vadd.f32 %v1499, 0.0
        %v1564 = vadd.f32 %v1500, 0.0
        %v1565 = vadd.f32 %v1501, 0.0
        %v1566 = vadd.f32 %v1502, 0.0
        %v1567 = vadd.f32 %v1503, 0.0
        %v1568 = vadd.f32 %v1504, 0.0
        %v1569 = vadd.f32 %v1505, 0.0
        %v1570 = vadd.f32 %v1506, 0.0
        %v1571 = vadd.f32 %v1507, 0.0
        %v1572 = vadd.f32 %v1508, 0.0
        %v1573 = vadd.f32 %v1509, 0.0
        %v1574 = vadd.f32 %v1510, 0.0
        %v1575 = vadd.f32 %v1511, 0.0
        %v1576 = vadd.f32 %v1512, 0.0
        %v1577 = vadd.f32 %v1545, 0.0
        %v1578 = vadd.f32 %v1546, 0.0
        %v1579 = vadd.f32 %v1547, 0.0
        %v1580 = vadd.f32 %v1548, 0.0
        %v1581 = vadd.f32 %v1549, 0.0
        %v1582 = vadd.f32 %v1550, 0.0
        %v1583 = vadd.f32 %v1551, 0.0
        %v1584 = vadd.f32 %v1552, 0.0
        %v1585 = vadd.f32 %v1553, 0.0
        %v1586 = vadd.f32 %v1554, 0.0
        %v1587 = vadd.f32 %v1555, 0.0
        %v1588 = vadd.f32 %v1556, 0.0
        %v1589 = vadd.f32 %v1557, 0.0
        %v1590 = vadd.f32 %v1558, 0.0
        %v1591 = vadd.f32 %v1559, 0.0
        %v1592 = vadd.f32 %v1560, 0.0
        %v1593 = vmul.f32 %v1545, 0.9
        %v1594 = vmul.f32 %v1546, 0.9
        %v1595 = vmul.f32 %v1547, 0.9
        %v1596 = vmul.f32 %v1548, 0.9
        %v1597 = vmul.f32 %v1549, 0.9
        %v1598 = vmul.f32 %v1550, 0.9
        %v1599 = vmul.f32 %v1551, 0.9
        %v1600 = vmul.f32 %v1552, 0.9
        %v1601 = vmul.f32 %v1553, 0.9
        %v1602 = vmul.f32 %v1554, 0.9
        %v1603 = vmul.f32 %v1555, 0.9
        %v1604 = vmul.f32 %v1556, 0.9
        %v1605 = vmul.f32 %v1557, 0.9
        %v1606 = vmul.f32 %v1558, 0.9
        %v1607 = vmul.f32 %v1559, 0.9
        %v1608 = vmul.f32 %v1560, 0.9
        %v1609 = vmul.f32 %v1497, 0.1
        %v1610 = vmul.f32 %v1498, 0.1
        %v1611 = vmul.f32 %v1499, 0.1
        %v1612 = vmul.f32 %v1500, 0.1
        %v1613 = vmul.f32 %v1501, 0.1
        %v1614 = vmul.f32 %v1502, 0.1
        %v1615 = vmul.f32 %v1503, 0.1
        %v1616 = vmul.f32 %v1504, 0.1
        %v1617 = vmul.f32 %v1505, 0.1
        %v1618 = vmul.f32 %v1506, 0.1
        %v1619 = vmul.f32 %v1507, 0.1
        %v1620 = vmul.f32 %v1508, 0.1
        %v1621 = vmul.f32 %v1509, 0.1
        %v1622 = vmul.f32 %v1510, 0.1
        %v1623 = vmul.f32 %v1511, 0.1
        %v1624 = vmul.f32 %v1512, 0.1
        %v1625 = vadd.f32 %v1593, %v1609
        %v1626 = vadd.f32 %v1594, %v1610
        %v1627 = vadd.f32 %v1595, %v1611
        %v1628 = vadd.f32 %v1596, %v1612
        %v1629 = vadd.f32 %v1597, %v1613
        %v1630 = vadd.f32 %v1598, %v1614
        %v1631 = vadd.f32 %v1599, %v1615
        %v1632 = vadd.f32 %v1600, %v1616
        %v1633 = vadd.f32 %v1601, %v1617
        %v1634 = vadd.f32 %v1602, %v1618
        %v1635 = vadd.f32 %v1603, %v1619
        %v1636 = vadd.f32 %v1604, %v1620
        %v1637 = vadd.f32 %v1605, %v1621
        %v1638 = vadd.f32 %v1606, %v1622
        %v1639 = vadd.f32 %v1607, %v1623
        %v1640 = vadd.f32 %v1608, %v1624
        %v1641 = vpack.c.bf16 %v1626, %v1625
        %v1642 = vpack.c.bf16 %v1628, %v1627
        %v1643 = vpack.c.bf16 %v1630, %v1629
        %v1644 = vpack.c.bf16 %v1632, %v1631
        %v1645 = vpack.c.bf16 %v1634, %v1633
        %v1646 = vpack.c.bf16 %v1636, %v1635
        %v1647 = vpack.c.bf16 %v1638, %v1637
        %v1648 = vpack.c.bf16 %v1640, %v1639
        %1649 = vst.msk [vmem:[#allocation3 + $0x40] sm:$0xff] %vm1416, %v1641
        %1650 = vst.msk [vmem:[#allocation3 + $0x48] sm:$0xff] %vm1416, %v1642
        %1651 = vst.msk [vmem:[#allocation3 + $0x50] sm:$0xff] %vm1416, %v1643
        %1652 = vst.msk [vmem:[#allocation3 + $0x58] sm:$0xff] %vm1416, %v1644
        %1653 = vst.msk [vmem:[#allocation3 + $0x60] sm:$0xff] %vm1416, %v1645
        %1654 = vst.msk [vmem:[#allocation3 + $0x68] sm:$0xff] %vm1416, %v1646
        %1655 = vst.msk [vmem:[#allocation3 + $0x70] sm:$0xff] %vm1416, %v1647
        %1656 = vst.msk [vmem:[#allocation3 + $0x78] sm:$0xff] %vm1416, %v1648
        %v1657 = vld [vmem:[#allocation2 + $0x100] sm:$0xff]
        %v1658 = vld [vmem:[#allocation2 + $0x108] sm:$0xff]
        %v1659 = vld [vmem:[#allocation2 + $0x110] sm:$0xff]
        %v1660 = vld [vmem:[#allocation2 + $0x118] sm:$0xff]
        %v1661 = vld [vmem:[#allocation2 + $0x120] sm:$0xff]
        %v1662 = vld [vmem:[#allocation2 + $0x128] sm:$0xff]
        %v1663 = vld [vmem:[#allocation2 + $0x130] sm:$0xff]
        %v1664 = vld [vmem:[#allocation2 + $0x138] sm:$0xff]
        %v1665 = vld [vmem:[#allocation2 + $0x140] sm:$0xff]
        %v1666 = vld [vmem:[#allocation2 + $0x148] sm:$0xff]
        %v1667 = vld [vmem:[#allocation2 + $0x150] sm:$0xff]
        %v1668 = vld [vmem:[#allocation2 + $0x158] sm:$0xff]
        %v1669 = vld [vmem:[#allocation2 + $0x160] sm:$0xff]
        %v1670 = vld [vmem:[#allocation2 + $0x168] sm:$0xff]
        %v1671 = vld [vmem:[#allocation2 + $0x170] sm:$0xff]
        %v1672 = vld [vmem:[#allocation2 + $0x178] sm:$0xff]
        %v1673 = vmul.f32 %v1657, 0.8999955
        %v1674 = vmul.f32 %v1658, 0.8999955
        %v1675 = vmul.f32 %v1659, 0.8999955
        %v1676 = vmul.f32 %v1660, 0.8999955
        %v1677 = vmul.f32 %v1661, 0.8999955
        %v1678 = vmul.f32 %v1662, 0.8999955
        %v1679 = vmul.f32 %v1663, 0.8999955
        %v1680 = vmul.f32 %v1664, 0.8999955
        %v1681 = vmul.f32 %v1665, 0.8999955
        %v1682 = vmul.f32 %v1666, 0.8999955
        %v1683 = vmul.f32 %v1667, 0.8999955
        %v1684 = vmul.f32 %v1668, 0.8999955
        %v1685 = vmul.f32 %v1669, 0.8999955
        %v1686 = vmul.f32 %v1670, 0.8999955
        %v1687 = vmul.f32 %v1671, 0.8999955
        %v1688 = vmul.f32 %v1672, 0.8999955
        %v1689 = vadd.f32 %v1673, 0.05
        %v1690 = vadd.f32 %v1674, 0.05
        %v1691 = vadd.f32 %v1675, 0.05
        %v1692 = vadd.f32 %v1676, 0.05
        %v1693 = vadd.f32 %v1677, 0.05
        %v1694 = vadd.f32 %v1678, 0.05
        %v1695 = vadd.f32 %v1679, 0.05
        %v1696 = vadd.f32 %v1680, 0.05
        %v1697 = vadd.f32 %v1681, 0.05
        %v1698 = vadd.f32 %v1682, 0.05
        %v1699 = vadd.f32 %v1683, 0.05
        %v1700 = vadd.f32 %v1684, 0.05
        %v1701 = vadd.f32 %v1685, 0.05
        %v1702 = vadd.f32 %v1686, 0.05
        %v1703 = vadd.f32 %v1687, 0.05
        %v1704 = vadd.f32 %v1688, 0.05
        %v1705 = vmax.f32 %v1689, 0.0
        %v1706 = vmax.f32 %v1690, 0.0
        %v1707 = vmax.f32 %v1691, 0.0
        %v1708 = vmax.f32 %v1692, 0.0
        %v1709 = vmax.f32 %v1693, 0.0
        %v1710 = vmax.f32 %v1694, 0.0
        %v1711 = vmax.f32 %v1695, 0.0
        %v1712 = vmax.f32 %v1696, 0.0
        %v1713 = vmax.f32 %v1697, 0.0
        %v1714 = vmax.f32 %v1698, 0.0
        %v1715 = vmax.f32 %v1699, 0.0
        %v1716 = vmax.f32 %v1700, 0.0
        %v1717 = vmax.f32 %v1701, 0.0
        %v1718 = vmax.f32 %v1702, 0.0
        %v1719 = vmax.f32 %v1703, 0.0
        %v1720 = vmax.f32 %v1704, 0.0
        %v1721 = vadd.f32 %v1561, %v1657
        %v1722 = vadd.f32 %v1562, %v1658
        %v1723 = vadd.f32 %v1563, %v1659
        %v1724 = vadd.f32 %v1564, %v1660
        %v1725 = vadd.f32 %v1565, %v1661
        %v1726 = vadd.f32 %v1566, %v1662
        %v1727 = vadd.f32 %v1567, %v1663
        %v1728 = vadd.f32 %v1568, %v1664
        %v1729 = vadd.f32 %v1569, %v1665
        %v1730 = vadd.f32 %v1570, %v1666
        %v1731 = vadd.f32 %v1571, %v1667
        %v1732 = vadd.f32 %v1572, %v1668
        %v1733 = vadd.f32 %v1573, %v1669
        %v1734 = vadd.f32 %v1574, %v1670
        %v1735 = vadd.f32 %v1575, %v1671
        %v1736 = vadd.f32 %v1576, %v1672
        %v1737 = vadd.f32 %v1577, %v1705
        %v1738 = vadd.f32 %v1578, %v1706
        %v1739 = vadd.f32 %v1579, %v1707
        %v1740 = vadd.f32 %v1580, %v1708
        %v1741 = vadd.f32 %v1581, %v1709
        %v1742 = vadd.f32 %v1582, %v1710
        %v1743 = vadd.f32 %v1583, %v1711
        %v1744 = vadd.f32 %v1584, %v1712
        %v1745 = vadd.f32 %v1585, %v1713
        %v1746 = vadd.f32 %v1586, %v1714
        %v1747 = vadd.f32 %v1587, %v1715
        %v1748 = vadd.f32 %v1588, %v1716
        %v1749 = vadd.f32 %v1589, %v1717
        %v1750 = vadd.f32 %v1590, %v1718
        %v1751 = vadd.f32 %v1591, %v1719
        %v1752 = vadd.f32 %v1592, %v1720
        %v1753 = vmul.f32 %v1705, 0.9
        %v1754 = vmul.f32 %v1706, 0.9
        %v1755 = vmul.f32 %v1707, 0.9
        %v1756 = vmul.f32 %v1708, 0.9
        %v1757 = vmul.f32 %v1709, 0.9
        %v1758 = vmul.f32 %v1710, 0.9
        %v1759 = vmul.f32 %v1711, 0.9
        %v1760 = vmul.f32 %v1712, 0.9
        %v1761 = vmul.f32 %v1713, 0.9
        %v1762 = vmul.f32 %v1714, 0.9
        %v1763 = vmul.f32 %v1715, 0.9
        %v1764 = vmul.f32 %v1716, 0.9
        %v1765 = vmul.f32 %v1717, 0.9
        %v1766 = vmul.f32 %v1718, 0.9
        %v1767 = vmul.f32 %v1719, 0.9
        %v1768 = vmul.f32 %v1720, 0.9
        %v1769 = vmul.f32 %v1657, 0.1
        %v1770 = vmul.f32 %v1658, 0.1
        %v1771 = vmul.f32 %v1659, 0.1
        %v1772 = vmul.f32 %v1660, 0.1
        %v1773 = vmul.f32 %v1661, 0.1
        %v1774 = vmul.f32 %v1662, 0.1
        %v1775 = vmul.f32 %v1663, 0.1
        %v1776 = vmul.f32 %v1664, 0.1
        %v1777 = vmul.f32 %v1665, 0.1
        %v1778 = vmul.f32 %v1666, 0.1
        %v1779 = vmul.f32 %v1667, 0.1
        %v1780 = vmul.f32 %v1668, 0.1
        %v1781 = vmul.f32 %v1669, 0.1
        %v1782 = vmul.f32 %v1670, 0.1
        %v1783 = vmul.f32 %v1671, 0.1
        %v1784 = vmul.f32 %v1672, 0.1
        %v1785 = vadd.f32 %v1753, %v1769
        %v1786 = vadd.f32 %v1754, %v1770
        %v1787 = vadd.f32 %v1755, %v1771
        %v1788 = vadd.f32 %v1756, %v1772
        %v1789 = vadd.f32 %v1757, %v1773
        %v1790 = vadd.f32 %v1758, %v1774
        %v1791 = vadd.f32 %v1759, %v1775
        %v1792 = vadd.f32 %v1760, %v1776
        %v1793 = vadd.f32 %v1761, %v1777
        %v1794 = vadd.f32 %v1762, %v1778
        %v1795 = vadd.f32 %v1763, %v1779
        %v1796 = vadd.f32 %v1764, %v1780
        %v1797 = vadd.f32 %v1765, %v1781
        %v1798 = vadd.f32 %v1766, %v1782
        %v1799 = vadd.f32 %v1767, %v1783
        %v1800 = vadd.f32 %v1768, %v1784
        %v1801 = vpack.c.bf16 %v1786, %v1785
        %v1802 = vpack.c.bf16 %v1788, %v1787
        %v1803 = vpack.c.bf16 %v1790, %v1789
        %v1804 = vpack.c.bf16 %v1792, %v1791
        %v1805 = vpack.c.bf16 %v1794, %v1793
        %v1806 = vpack.c.bf16 %v1796, %v1795
        %v1807 = vpack.c.bf16 %v1798, %v1797
        %v1808 = vpack.c.bf16 %v1800, %v1799
        %1809 = vst.msk [vmem:[#allocation3 + $0x80] sm:$0xff] %vm1416, %v1801
        %1810 = vst.msk [vmem:[#allocation3 + $0x88] sm:$0xff] %vm1416, %v1802
        %1811 = vst.msk [vmem:[#allocation3 + $0x90] sm:$0xff] %vm1416, %v1803
        %1812 = vst.msk [vmem:[#allocation3 + $0x98] sm:$0xff] %vm1416, %v1804
        %1813 = vst.msk [vmem:[#allocation3 + $0xa0] sm:$0xff] %vm1416, %v1805
        %1814 = vst.msk [vmem:[#allocation3 + $0xa8] sm:$0xff] %vm1416, %v1806
        %1815 = vst.msk [vmem:[#allocation3 + $0xb0] sm:$0xff] %vm1416, %v1807
        %1816 = vst.msk [vmem:[#allocation3 + $0xb8] sm:$0xff] %vm1416, %v1808
        %v1817 = vld [vmem:[#allocation2 + $0x180] sm:$0xff]
        %v1818 = vld [vmem:[#allocation2 + $0x188] sm:$0xff]
        %v1819 = vld [vmem:[#allocation2 + $0x190] sm:$0xff]
        %v1820 = vld [vmem:[#allocation2 + $0x198] sm:$0xff]
        %v1821 = vld [vmem:[#allocation2 + $0x1a0] sm:$0xff]
        %v1822 = vld [vmem:[#allocation2 + $0x1a8] sm:$0xff]
        %v1823 = vld [vmem:[#allocation2 + $0x1b0] sm:$0xff]
        %v1824 = vld [vmem:[#allocation2 + $0x1b8] sm:$0xff]
        %v1825 = vld [vmem:[#allocation2 + $0x1c0] sm:$0xff]
        %v1826 = vld [vmem:[#allocation2 + $0x1c8] sm:$0xff]
        %v1827 = vld [vmem:[#allocation2 + $0x1d0] sm:$0xff]
        %v1828 = vld [vmem:[#allocation2 + $0x1d8] sm:$0xff]
        %v1829 = vld [vmem:[#allocation2 + $0x1e0] sm:$0xff]
        %v1830 = vld [vmem:[#allocation2 + $0x1e8] sm:$0xff]
        %v1831 = vld [vmem:[#allocation2 + $0x1f0] sm:$0xff]
        %v1832 = vld [vmem:[#allocation2 + $0x1f8] sm:$0xff]
        %v1833 = vmul.f32 %v1817, 0.8999955
        %v1834 = vmul.f32 %v1818, 0.8999955
        %v1835 = vmul.f32 %v1819, 0.8999955
        %v1836 = vmul.f32 %v1820, 0.8999955
        %v1837 = vmul.f32 %v1821, 0.8999955
        %v1838 = vmul.f32 %v1822, 0.8999955
        %v1839 = vmul.f32 %v1823, 0.8999955
        %v1840 = vmul.f32 %v1824, 0.8999955
        %v1841 = vmul.f32 %v1825, 0.8999955
        %v1842 = vmul.f32 %v1826, 0.8999955
        %v1843 = vmul.f32 %v1827, 0.8999955
        %v1844 = vmul.f32 %v1828, 0.8999955
        %v1845 = vmul.f32 %v1829, 0.8999955
        %v1846 = vmul.f32 %v1830, 0.8999955
        %v1847 = vmul.f32 %v1831, 0.8999955
        %v1848 = vmul.f32 %v1832, 0.8999955
        %v1849 = vadd.f32 %v1833, 0.05
        %v1850 = vadd.f32 %v1834, 0.05
        %v1851 = vadd.f32 %v1835, 0.05
        %v1852 = vadd.f32 %v1836, 0.05
        %v1853 = vadd.f32 %v1837, 0.05
        %v1854 = vadd.f32 %v1838, 0.05
        %v1855 = vadd.f32 %v1839, 0.05
        %v1856 = vadd.f32 %v1840, 0.05
        %v1857 = vadd.f32 %v1841, 0.05
        %v1858 = vadd.f32 %v1842, 0.05
        %v1859 = vadd.f32 %v1843, 0.05
        %v1860 = vadd.f32 %v1844, 0.05
        %v1861 = vadd.f32 %v1845, 0.05
        %v1862 = vadd.f32 %v1846, 0.05
        %v1863 = vadd.f32 %v1847, 0.05
        %v1864 = vadd.f32 %v1848, 0.05
        %v1865 = vmax.f32 %v1849, 0.0
        %v1866 = vmax.f32 %v1850, 0.0
        %v1867 = vmax.f32 %v1851, 0.0
        %v1868 = vmax.f32 %v1852, 0.0
        %v1869 = vmax.f32 %v1853, 0.0
        %v1870 = vmax.f32 %v1854, 0.0
        %v1871 = vmax.f32 %v1855, 0.0
        %v1872 = vmax.f32 %v1856, 0.0
        %v1873 = vmax.f32 %v1857, 0.0
        %v1874 = vmax.f32 %v1858, 0.0
        %v1875 = vmax.f32 %v1859, 0.0
        %v1876 = vmax.f32 %v1860, 0.0
        %v1877 = vmax.f32 %v1861, 0.0
        %v1878 = vmax.f32 %v1862, 0.0
        %v1879 = vmax.f32 %v1863, 0.0
        %v1880 = vmax.f32 %v1864, 0.0
        %v1881 = vadd.f32 %v1721, %v1817
        %v1882 = vadd.f32 %v1722, %v1818
        %v1883 = vadd.f32 %v1723, %v1819
        %v1884 = vadd.f32 %v1724, %v1820
        %v1885 = vadd.f32 %v1725, %v1821
        %v1886 = vadd.f32 %v1726, %v1822
        %v1887 = vadd.f32 %v1727, %v1823
        %v1888 = vadd.f32 %v1728, %v1824
        %v1889 = vadd.f32 %v1729, %v1825
        %v1890 = vadd.f32 %v1730, %v1826
        %v1891 = vadd.f32 %v1731, %v1827
        %v1892 = vadd.f32 %v1732, %v1828
        %v1893 = vadd.f32 %v1733, %v1829
        %v1894 = vadd.f32 %v1734, %v1830
        %v1895 = vadd.f32 %v1735, %v1831
        %v1896 = vadd.f32 %v1736, %v1832
        %v1897 = vadd.f32 %v1737, %v1865
        %v1898 = vadd.f32 %v1738, %v1866
        %v1899 = vadd.f32 %v1739, %v1867
        %v1900 = vadd.f32 %v1740, %v1868
        %v1901 = vadd.f32 %v1741, %v1869
        %v1902 = vadd.f32 %v1742, %v1870
        %v1903 = vadd.f32 %v1743, %v1871
        %v1904 = vadd.f32 %v1744, %v1872
        %v1905 = vadd.f32 %v1745, %v1873
        %v1906 = vadd.f32 %v1746, %v1874
        %v1907 = vadd.f32 %v1747, %v1875
        %v1908 = vadd.f32 %v1748, %v1876
        %v1909 = vadd.f32 %v1749, %v1877
        %v1910 = vadd.f32 %v1750, %v1878
        %v1911 = vadd.f32 %v1751, %v1879
        %v1912 = vadd.f32 %v1752, %v1880
        %v1913 = vmul.f32 %v1865, 0.9
        %v1914 = vmul.f32 %v1866, 0.9
        %v1915 = vmul.f32 %v1867, 0.9
        %v1916 = vmul.f32 %v1868, 0.9
        %v1917 = vmul.f32 %v1869, 0.9
        %v1918 = vmul.f32 %v1870, 0.9
        %v1919 = vmul.f32 %v1871, 0.9
        %v1920 = vmul.f32 %v1872, 0.9
        %v1921 = vmul.f32 %v1873, 0.9
        %v1922 = vmul.f32 %v1874, 0.9
        %v1923 = vmul.f32 %v1875, 0.9
        %v1924 = vmul.f32 %v1876, 0.9
        %v1925 = vmul.f32 %v1877, 0.9
        %v1926 = vmul.f32 %v1878, 0.9
        %v1927 = vmul.f32 %v1879, 0.9
        %v1928 = vmul.f32 %v1880, 0.9
        %v1929 = vmul.f32 %v1817, 0.1
        %v1930 = vmul.f32 %v1818, 0.1
        %v1931 = vmul.f32 %v1819, 0.1
        %v1932 = vmul.f32 %v1820, 0.1
        %v1933 = vmul.f32 %v1821, 0.1
        %v1934 = vmul.f32 %v1822, 0.1
        %v1935 = vmul.f32 %v1823, 0.1
        %v1936 = vmul.f32 %v1824, 0.1
        %v1937 = vmul.f32 %v1825, 0.1
        %v1938 = vmul.f32 %v1826, 0.1
        %v1939 = vmul.f32 %v1827, 0.1
        %v1940 = vmul.f32 %v1828, 0.1
        %v1941 = vmul.f32 %v1829, 0.1
        %v1942 = vmul.f32 %v1830, 0.1
        %v1943 = vmul.f32 %v1831, 0.1
        %v1944 = vmul.f32 %v1832, 0.1
        %v1945 = vadd.f32 %v1913, %v1929
        %v1946 = vadd.f32 %v1914, %v1930
        %v1947 = vadd.f32 %v1915, %v1931
        %v1948 = vadd.f32 %v1916, %v1932
        %v1949 = vadd.f32 %v1917, %v1933
        %v1950 = vadd.f32 %v1918, %v1934
        %v1951 = vadd.f32 %v1919, %v1935
        %v1952 = vadd.f32 %v1920, %v1936
        %v1953 = vadd.f32 %v1921, %v1937
        %v1954 = vadd.f32 %v1922, %v1938
        %v1955 = vadd.f32 %v1923, %v1939
        %v1956 = vadd.f32 %v1924, %v1940
        %v1957 = vadd.f32 %v1925, %v1941
        %v1958 = vadd.f32 %v1926, %v1942
        %v1959 = vadd.f32 %v1927, %v1943
        %v1960 = vadd.f32 %v1928, %v1944
        %v1961 = vpack.c.bf16 %v1946, %v1945
        %v1962 = vpack.c.bf16 %v1948, %v1947
        %v1963 = vpack.c.bf16 %v1950, %v1949
        %v1964 = vpack.c.bf16 %v1952, %v1951
        %v1965 = vpack.c.bf16 %v1954, %v1953
        %v1966 = vpack.c.bf16 %v1956, %v1955
        %v1967 = vpack.c.bf16 %v1958, %v1957
        %v1968 = vpack.c.bf16 %v1960, %v1959
        %1969 = vst.msk [vmem:[#allocation3 + $0xc0] sm:$0xff] %vm1416, %v1961
        %1970 = vst.msk [vmem:[#allocation3 + $0xc8] sm:$0xff] %vm1416, %v1962
        %1971 = vst.msk [vmem:[#allocation3 + $0xd0] sm:$0xff] %vm1416, %v1963
        %1972 = vst.msk [vmem:[#allocation3 + $0xd8] sm:$0xff] %vm1416, %v1964
        %1973 = vst.msk [vmem:[#allocation3 + $0xe0] sm:$0xff] %vm1416, %v1965
        %1974 = vst.msk [vmem:[#allocation3 + $0xe8] sm:$0xff] %vm1416, %v1966
        %1975 = vst.msk [vmem:[#allocation3 + $0xf0] sm:$0xff] %vm1416, %v1967
        %1976 = vst.msk [vmem:[#allocation3 + $0xf8] sm:$0xff] %vm1416, %v1968
        %v1977 = vld [vmem:[#allocation2 + $0x200] sm:$0xff]
        %v1978 = vld [vmem:[#allocation2 + $0x208] sm:$0xff]
        %v1979 = vld [vmem:[#allocation2 + $0x210] sm:$0xff]
        %v1980 = vld [vmem:[#allocation2 + $0x218] sm:$0xff]
        %v1981 = vld [vmem:[#allocation2 + $0x220] sm:$0xff]
        %v1982 = vld [vmem:[#allocation2 + $0x228] sm:$0xff]
        %v1983 = vld [vmem:[#allocation2 + $0x230] sm:$0xff]
        %v1984 = vld [vmem:[#allocation2 + $0x238] sm:$0xff]
        %v1985 = vld [vmem:[#allocation2 + $0x240] sm:$0xff]
        %v1986 = vld [vmem:[#allocation2 + $0x248] sm:$0xff]
        %v1987 = vld [vmem:[#allocation2 + $0x250] sm:$0xff]
        %v1988 = vld [vmem:[#allocation2 + $0x258] sm:$0xff]
        %v1989 = vld [vmem:[#allocation2 + $0x260] sm:$0xff]
        %v1990 = vld [vmem:[#allocation2 + $0x268] sm:$0xff]
        %v1991 = vld [vmem:[#allocation2 + $0x270] sm:$0xff]
        %v1992 = vld [vmem:[#allocation2 + $0x278] sm:$0xff]
        %v1993 = vmul.f32 %v1977, 0.8999955
        %v1994 = vmul.f32 %v1978, 0.8999955
        %v1995 = vmul.f32 %v1979, 0.8999955
        %v1996 = vmul.f32 %v1980, 0.8999955
        %v1997 = vmul.f32 %v1981, 0.8999955
        %v1998 = vmul.f32 %v1982, 0.8999955
        %v1999 = vmul.f32 %v1983, 0.8999955
        %v2000 = vmul.f32 %v1984, 0.8999955
        %v2001 = vmul.f32 %v1985, 0.8999955
        %v2002 = vmul.f32 %v1986, 0.8999955
        %v2003 = vmul.f32 %v1987, 0.8999955
        %v2004 = vmul.f32 %v1988, 0.8999955
        %v2005 = vmul.f32 %v1989, 0.8999955
        %v2006 = vmul.f32 %v1990, 0.8999955
        %v2007 = vmul.f32 %v1991, 0.8999955
        %v2008 = vmul.f32 %v1992, 0.8999955
        %v2009 = vadd.f32 %v1993, 0.05
        %v2010 = vadd.f32 %v1994, 0.05
        %v2011 = vadd.f32 %v1995, 0.05
        %v2012 = vadd.f32 %v1996, 0.05
        %v2013 = vadd.f32 %v1997, 0.05
        %v2014 = vadd.f32 %v1998, 0.05
        %v2015 = vadd.f32 %v1999, 0.05
        %v2016 = vadd.f32 %v2000, 0.05
        %v2017 = vadd.f32 %v2001, 0.05
        %v2018 = vadd.f32 %v2002, 0.05
        %v2019 = vadd.f32 %v2003, 0.05
        %v2020 = vadd.f32 %v2004, 0.05
        %v2021 = vadd.f32 %v2005, 0.05
        %v2022 = vadd.f32 %v2006, 0.05
        %v2023 = vadd.f32 %v2007, 0.05
        %v2024 = vadd.f32 %v2008, 0.05
        %v2025 = vmax.f32 %v2009, 0.0
        %v2026 = vmax.f32 %v2010, 0.0
        %v2027 = vmax.f32 %v2011, 0.0
        %v2028 = vmax.f32 %v2012, 0.0
        %v2029 = vmax.f32 %v2013, 0.0
        %v2030 = vmax.f32 %v2014, 0.0
        %v2031 = vmax.f32 %v2015, 0.0
        %v2032 = vmax.f32 %v2016, 0.0
        %v2033 = vmax.f32 %v2017, 0.0
        %v2034 = vmax.f32 %v2018, 0.0
        %v2035 = vmax.f32 %v2019, 0.0
        %v2036 = vmax.f32 %v2020, 0.0
        %v2037 = vmax.f32 %v2021, 0.0
        %v2038 = vmax.f32 %v2022, 0.0
        %v2039 = vmax.f32 %v2023, 0.0
        %v2040 = vmax.f32 %v2024, 0.0
        %v2041 = vadd.f32 %v1881, %v1977
        %v2042 = vadd.f32 %v1882, %v1978
        %v2043 = vadd.f32 %v1883, %v1979
        %v2044 = vadd.f32 %v1884, %v1980
        %v2045 = vadd.f32 %v1885, %v1981
        %v2046 = vadd.f32 %v1886, %v1982
        %v2047 = vadd.f32 %v1887, %v1983
        %v2048 = vadd.f32 %v1888, %v1984
        %v2049 = vadd.f32 %v1889, %v1985
        %v2050 = vadd.f32 %v1890, %v1986
        %v2051 = vadd.f32 %v1891, %v1987
        %v2052 = vadd.f32 %v1892, %v1988
        %v2053 = vadd.f32 %v1893, %v1989
        %v2054 = vadd.f32 %v1894, %v1990
        %v2055 = vadd.f32 %v1895, %v1991
        %v2056 = vadd.f32 %v1896, %v1992
        %v2057 = vadd.f32 %v1897, %v2025
        %v2058 = vadd.f32 %v1898, %v2026
        %v2059 = vadd.f32 %v1899, %v2027
        %v2060 = vadd.f32 %v1900, %v2028
        %v2061 = vadd.f32 %v1901, %v2029
        %v2062 = vadd.f32 %v1902, %v2030
        %v2063 = vadd.f32 %v1903, %v2031
        %v2064 = vadd.f32 %v1904, %v2032
        %v2065 = vadd.f32 %v1905, %v2033
        %v2066 = vadd.f32 %v1906, %v2034
        %v2067 = vadd.f32 %v1907, %v2035
        %v2068 = vadd.f32 %v1908, %v2036
        %v2069 = vadd.f32 %v1909, %v2037
        %v2070 = vadd.f32 %v1910, %v2038
        %v2071 = vadd.f32 %v1911, %v2039
        %v2072 = vadd.f32 %v1912, %v2040
        %v2073 = vmul.f32 %v2025, 0.9
        %v2074 = vmul.f32 %v2026, 0.9
        %v2075 = vmul.f32 %v2027, 0.9
        %v2076 = vmul.f32 %v2028, 0.9
        %v2077 = vmul.f32 %v2029, 0.9
        %v2078 = vmul.f32 %v2030, 0.9
        %v2079 = vmul.f32 %v2031, 0.9
        %v2080 = vmul.f32 %v2032, 0.9
        %v2081 = vmul.f32 %v2033, 0.9
        %v2082 = vmul.f32 %v2034, 0.9
        %v2083 = vmul.f32 %v2035, 0.9
        %v2084 = vmul.f32 %v2036, 0.9
        %v2085 = vmul.f32 %v2037, 0.9
        %v2086 = vmul.f32 %v2038, 0.9
        %v2087 = vmul.f32 %v2039, 0.9
        %v2088 = vmul.f32 %v2040, 0.9
        %v2089 = vmul.f32 %v1977, 0.1
        %v2090 = vmul.f32 %v1978, 0.1
        %v2091 = vmul.f32 %v1979, 0.1
        %v2092 = vmul.f32 %v1980, 0.1
        %v2093 = vmul.f32 %v1981, 0.1
        %v2094 = vmul.f32 %v1982, 0.1
        %v2095 = vmul.f32 %v1983, 0.1
        %v2096 = vmul.f32 %v1984, 0.1
        %v2097 = vmul.f32 %v1985, 0.1
        %v2098 = vmul.f32 %v1986, 0.1
        %v2099 = vmul.f32 %v1987, 0.1
        %v2100 = vmul.f32 %v1988, 0.1
        %v2101 = vmul.f32 %v1989, 0.1
        %v2102 = vmul.f32 %v1990, 0.1
        %v2103 = vmul.f32 %v1991, 0.1
        %v2104 = vmul.f32 %v1992, 0.1
        %v2105 = vadd.f32 %v2073, %v2089
        %v2106 = vadd.f32 %v2074, %v2090
        %v2107 = vadd.f32 %v2075, %v2091
        %v2108 = vadd.f32 %v2076, %v2092
        %v2109 = vadd.f32 %v2077, %v2093
        %v2110 = vadd.f32 %v2078, %v2094
        %v2111 = vadd.f32 %v2079, %v2095
        %v2112 = vadd.f32 %v2080, %v2096
        %v2113 = vadd.f32 %v2081, %v2097
        %v2114 = vadd.f32 %v2082, %v2098
        %v2115 = vadd.f32 %v2083, %v2099
        %v2116 = vadd.f32 %v2084, %v2100
        %v2117 = vadd.f32 %v2085, %v2101
        %v2118 = vadd.f32 %v2086, %v2102
        %v2119 = vadd.f32 %v2087, %v2103
        %v2120 = vadd.f32 %v2088, %v2104
        %v2121 = vpack.c.bf16 %v2106, %v2105
        %v2122 = vpack.c.bf16 %v2108, %v2107
        %v2123 = vpack.c.bf16 %v2110, %v2109
        %v2124 = vpack.c.bf16 %v2112, %v2111
        %v2125 = vpack.c.bf16 %v2114, %v2113
        %v2126 = vpack.c.bf16 %v2116, %v2115
        %v2127 = vpack.c.bf16 %v2118, %v2117
        %v2128 = vpack.c.bf16 %v2120, %v2119
        %2129 = vst.msk [vmem:[#allocation3 + $0x100] sm:$0xff] %vm1416, %v2121
        %2130 = vst.msk [vmem:[#allocation3 + $0x108] sm:$0xff] %vm1416, %v2122
        %2131 = vst.msk [vmem:[#allocation3 + $0x110] sm:$0xff] %vm1416, %v2123
        %2132 = vst.msk [vmem:[#allocation3 + $0x118] sm:$0xff] %vm1416, %v2124
        %2133 = vst.msk [vmem:[#allocation3 + $0x120] sm:$0xff] %vm1416, %v2125
        %2134 = vst.msk [vmem:[#allocation3 + $0x128] sm:$0xff] %vm1416, %v2126
        %2135 = vst.msk [vmem:[#allocation3 + $0x130] sm:$0xff] %vm1416, %v2127
        %2136 = vst.msk [vmem:[#allocation3 + $0x138] sm:$0xff] %vm1416, %v2128
        %v2137 = vld [vmem:[#allocation2] sm:$0xff]
        %v2138 = vld [vmem:[#allocation2 + $0x8] sm:$0xff]
        %v2139 = vld [vmem:[#allocation2 + $0x10] sm:$0xff]
        %v2140 = vld [vmem:[#allocation2 + $0x18] sm:$0xff]
        %v2141 = vld [vmem:[#allocation2 + $0x20] sm:$0xff]
        %v2142 = vld [vmem:[#allocation2 + $0x28] sm:$0xff]
        %v2143 = vld [vmem:[#allocation2 + $0x30] sm:$0xff]
        %v2144 = vld [vmem:[#allocation2 + $0x38] sm:$0xff]
        %v2145 = vld [vmem:[#allocation2 + $0x40] sm:$0xff]
        %v2146 = vld [vmem:[#allocation2 + $0x48] sm:$0xff]
        %v2147 = vld [vmem:[#allocation2 + $0x50] sm:$0xff]
        %v2148 = vld [vmem:[#allocation2 + $0x58] sm:$0xff]
        %v2149 = vld [vmem:[#allocation2 + $0x60] sm:$0xff]
        %v2150 = vld [vmem:[#allocation2 + $0x68] sm:$0xff]
        %v2151 = vld [vmem:[#allocation2 + $0x70] sm:$0xff]
        %v2152 = vld [vmem:[#allocation2 + $0x78] sm:$0xff]
        %v2153 = vadd.f32 %v2137, %v2041
        %v2154 = vadd.f32 %v2138, %v2042
        %v2155 = vadd.f32 %v2139, %v2043
        %v2156 = vadd.f32 %v2140, %v2044
        %v2157 = vadd.f32 %v2141, %v2045
        %v2158 = vadd.f32 %v2142, %v2046
        %v2159 = vadd.f32 %v2143, %v2047
        %v2160 = vadd.f32 %v2144, %v2048
        %v2161 = vadd.f32 %v2145, %v2049
        %v2162 = vadd.f32 %v2146, %v2050
        %v2163 = vadd.f32 %v2147, %v2051
        %v2164 = vadd.f32 %v2148, %v2052
        %v2165 = vadd.f32 %v2149, %v2053
        %v2166 = vadd.f32 %v2150, %v2054
        %v2167 = vadd.f32 %v2151, %v2055
        %v2168 = vadd.f32 %v2152, %v2056
        %v2169 = vmul.f32 %v2153, 0.9
        %v2170 = vmul.f32 %v2154, 0.9
        %v2171 = vmul.f32 %v2155, 0.9
        %v2172 = vmul.f32 %v2156, 0.9
        %v2173 = vmul.f32 %v2157, 0.9
        %v2174 = vmul.f32 %v2158, 0.9
        %v2175 = vmul.f32 %v2159, 0.9
        %v2176 = vmul.f32 %v2160, 0.9
        %v2177 = vmul.f32 %v2161, 0.9
        %v2178 = vmul.f32 %v2162, 0.9
        %v2179 = vmul.f32 %v2163, 0.9
        %v2180 = vmul.f32 %v2164, 0.9
        %v2181 = vmul.f32 %v2165, 0.9
        %v2182 = vmul.f32 %v2166, 0.9
        %v2183 = vmul.f32 %v2167, 0.9
        %v2184 = vmul.f32 %v2168, 0.9
        %v2185 = vmul.f32 %v2137, 0.1
        %v2186 = vmul.f32 %v2138, 0.1
        %v2187 = vmul.f32 %v2139, 0.1
        %v2188 = vmul.f32 %v2140, 0.1
        %v2189 = vmul.f32 %v2141, 0.1
        %v2190 = vmul.f32 %v2142, 0.1
        %v2191 = vmul.f32 %v2143, 0.1
        %v2192 = vmul.f32 %v2144, 0.1
        %v2193 = vmul.f32 %v2145, 0.1
        %v2194 = vmul.f32 %v2146, 0.1
        %v2195 = vmul.f32 %v2147, 0.1
        %v2196 = vmul.f32 %v2148, 0.1
        %v2197 = vmul.f32 %v2149, 0.1
        %v2198 = vmul.f32 %v2150, 0.1
        %v2199 = vmul.f32 %v2151, 0.1
        %v2200 = vmul.f32 %v2152, 0.1
        %v2201 = vadd.f32 %v2169, %v2185
        %v2202 = vadd.f32 %v2170, %v2186
        %v2203 = vadd.f32 %v2171, %v2187
        %v2204 = vadd.f32 %v2172, %v2188
        %v2205 = vadd.f32 %v2173, %v2189
        %v2206 = vadd.f32 %v2174, %v2190
        %v2207 = vadd.f32 %v2175, %v2191
        %v2208 = vadd.f32 %v2176, %v2192
        %v2209 = vadd.f32 %v2177, %v2193
        %v2210 = vadd.f32 %v2178, %v2194
        %v2211 = vadd.f32 %v2179, %v2195
        %v2212 = vadd.f32 %v2180, %v2196
        %v2213 = vadd.f32 %v2181, %v2197
        %v2214 = vadd.f32 %v2182, %v2198
        %v2215 = vadd.f32 %v2183, %v2199
        %v2216 = vadd.f32 %v2184, %v2200
        %v2217 = vmul.f32 %v2201, 0.8999955
        %v2218 = vmul.f32 %v2202, 0.8999955
        %v2219 = vmul.f32 %v2203, 0.8999955
        %v2220 = vmul.f32 %v2204, 0.8999955
        %v2221 = vmul.f32 %v2205, 0.8999955
        %v2222 = vmul.f32 %v2206, 0.8999955
        %v2223 = vmul.f32 %v2207, 0.8999955
        %v2224 = vmul.f32 %v2208, 0.8999955
        %v2225 = vmul.f32 %v2209, 0.8999955
        %v2226 = vmul.f32 %v2210, 0.8999955
        %v2227 = vmul.f32 %v2211, 0.8999955
        %v2228 = vmul.f32 %v2212, 0.8999955
        %v2229 = vmul.f32 %v2213, 0.8999955
        %v2230 = vmul.f32 %v2214, 0.8999955
        %v2231 = vmul.f32 %v2215, 0.8999955
        %v2232 = vmul.f32 %v2216, 0.8999955
        %v2233 = vadd.f32 %v2217, 0.05
        %v2234 = vadd.f32 %v2218, 0.05
        %v2235 = vadd.f32 %v2219, 0.05
        %v2236 = vadd.f32 %v2220, 0.05
        %v2237 = vadd.f32 %v2221, 0.05
        %v2238 = vadd.f32 %v2222, 0.05
        %v2239 = vadd.f32 %v2223, 0.05
        %v2240 = vadd.f32 %v2224, 0.05
        %v2241 = vadd.f32 %v2225, 0.05
        %v2242 = vadd.f32 %v2226, 0.05
        %v2243 = vadd.f32 %v2227, 0.05
        %v2244 = vadd.f32 %v2228, 0.05
        %v2245 = vadd.f32 %v2229, 0.05
        %v2246 = vadd.f32 %v2230, 0.05
        %v2247 = vadd.f32 %v2231, 0.05
        %v2248 = vadd.f32 %v2232, 0.05
        %v2249 = vmax.f32 %v2233, 0.0
        %v2250 = vmax.f32 %v2234, 0.0
        %v2251 = vmax.f32 %v2235, 0.0
        %v2252 = vmax.f32 %v2236, 0.0
        %v2253 = vmax.f32 %v2237, 0.0
        %v2254 = vmax.f32 %v2238, 0.0
        %v2255 = vmax.f32 %v2239, 0.0
        %v2256 = vmax.f32 %v2240, 0.0
        %v2257 = vmax.f32 %v2241, 0.0
        %v2258 = vmax.f32 %v2242, 0.0
        %v2259 = vmax.f32 %v2243, 0.0
        %v2260 = vmax.f32 %v2244, 0.0
        %v2261 = vmax.f32 %v2245, 0.0
        %v2262 = vmax.f32 %v2246, 0.0
        %v2263 = vmax.f32 %v2247, 0.0
        %v2264 = vmax.f32 %v2248, 0.0
        %v2265 = vadd.f32 %v2249, %v2057
        %v2266 = vadd.f32 %v2250, %v2058
        %v2267 = vadd.f32 %v2251, %v2059
        %v2268 = vadd.f32 %v2252, %v2060
        %v2269 = vadd.f32 %v2253, %v2061
        %v2270 = vadd.f32 %v2254, %v2062
        %v2271 = vadd.f32 %v2255, %v2063
        %v2272 = vadd.f32 %v2256, %v2064
        %v2273 = vadd.f32 %v2257, %v2065
        %v2274 = vadd.f32 %v2258, %v2066
        %v2275 = vadd.f32 %v2259, %v2067
        %v2276 = vadd.f32 %v2260, %v2068
        %v2277 = vadd.f32 %v2261, %v2069
        %v2278 = vadd.f32 %v2262, %v2070
        %v2279 = vadd.f32 %v2263, %v2071
        %v2280 = vadd.f32 %v2264, %v2072
        %v2281 = vmul.f32 %v2265, 0.9
        %v2282 = vmul.f32 %v2266, 0.9
        %v2283 = vmul.f32 %v2267, 0.9
        %v2284 = vmul.f32 %v2268, 0.9
        %v2285 = vmul.f32 %v2269, 0.9
        %v2286 = vmul.f32 %v2270, 0.9
        %v2287 = vmul.f32 %v2271, 0.9
        %v2288 = vmul.f32 %v2272, 0.9
        %v2289 = vmul.f32 %v2273, 0.9
        %v2290 = vmul.f32 %v2274, 0.9
        %v2291 = vmul.f32 %v2275, 0.9
        %v2292 = vmul.f32 %v2276, 0.9
        %v2293 = vmul.f32 %v2277, 0.9
        %v2294 = vmul.f32 %v2278, 0.9
        %v2295 = vmul.f32 %v2279, 0.9
        %v2296 = vmul.f32 %v2280, 0.9
        %v2297 = vadd.f32 %v2281, %v2185
        %v2298 = vadd.f32 %v2282, %v2186
        %v2299 = vadd.f32 %v2283, %v2187
        %v2300 = vadd.f32 %v2284, %v2188
        %v2301 = vadd.f32 %v2285, %v2189
        %v2302 = vadd.f32 %v2286, %v2190
        %v2303 = vadd.f32 %v2287, %v2191
        %v2304 = vadd.f32 %v2288, %v2192
        %v2305 = vadd.f32 %v2289, %v2193
        %v2306 = vadd.f32 %v2290, %v2194
        %v2307 = vadd.f32 %v2291, %v2195
        %v2308 = vadd.f32 %v2292, %v2196
        %v2309 = vadd.f32 %v2293, %v2197
        %v2310 = vadd.f32 %v2294, %v2198
        %v2311 = vadd.f32 %v2295, %v2199
        %v2312 = vadd.f32 %v2296, %v2200
        %v2313 = vpack.c.bf16 %v2298, %v2297
        %v2314 = vpack.c.bf16 %v2300, %v2299
        %v2315 = vpack.c.bf16 %v2302, %v2301
        %v2316 = vpack.c.bf16 %v2304, %v2303
        %v2317 = vpack.c.bf16 %v2306, %v2305
        %v2318 = vpack.c.bf16 %v2308, %v2307
        %v2319 = vpack.c.bf16 %v2310, %v2309
        %v2320 = vpack.c.bf16 %v2312, %v2311
        %2321 = vst.msk [vmem:[#allocation3] sm:$0xff] %vm1416, %v2313
        %2322 = vst.msk [vmem:[#allocation3 + $0x8] sm:$0xff] %vm1416, %v2314
        %2323 = vst.msk [vmem:[#allocation3 + $0x10] sm:$0xff] %vm1416, %v2315
        %2324 = vst.msk [vmem:[#allocation3 + $0x18] sm:$0xff] %vm1416, %v2316
        %2325 = vst.msk [vmem:[#allocation3 + $0x20] sm:$0xff] %vm1416, %v2317
        %2326 = vst.msk [vmem:[#allocation3 + $0x28] sm:$0xff] %vm1416, %v2318
        %2327 = vst.msk [vmem:[#allocation3 + $0x30] sm:$0xff] %vm1416, %v2319
        %2328 = vst.msk [vmem:[#allocation3 + $0x38] sm:$0xff] %vm1416, %v2320
        %v2329 = vld [vmem:[#allocation3] sm:$0xff]
        %v2330 = vld [vmem:[#allocation3 + $0x8] sm:$0xff]
        %v2331 = vld [vmem:[#allocation3 + $0x10] sm:$0xff]
        %v2332 = vld [vmem:[#allocation3 + $0x18] sm:$0xff]
        %v2333 = vld [vmem:[#allocation3 + $0x20] sm:$0xff]
        %v2334 = vld [vmem:[#allocation3 + $0x28] sm:$0xff]
        %v2335 = vld [vmem:[#allocation3 + $0x30] sm:$0xff]
        %v2336 = vld [vmem:[#allocation3 + $0x38] sm:$0xff]
        %v2337 = vld [vmem:[#allocation3 + $0x40] sm:$0xff]
        %v2338 = vld [vmem:[#allocation3 + $0x48] sm:$0xff]
        %v2339 = vld [vmem:[#allocation3 + $0x50] sm:$0xff]
        %v2340 = vld [vmem:[#allocation3 + $0x58] sm:$0xff]
        %v2341 = vld [vmem:[#allocation3 + $0x60] sm:$0xff]
        %v2342 = vld [vmem:[#allocation3 + $0x68] sm:$0xff]
        %v2343 = vld [vmem:[#allocation3 + $0x70] sm:$0xff]
        %v2344 = vld [vmem:[#allocation3 + $0x78] sm:$0xff]
        %v2345 = vld [vmem:[#allocation3 + $0x80] sm:$0xff]
        %v2346 = vld [vmem:[#allocation3 + $0x88] sm:$0xff]
        %v2347 = vld [vmem:[#allocation3 + $0x90] sm:$0xff]
        %v2348 = vld [vmem:[#allocation3 + $0x98] sm:$0xff]
        %v2349 = vld [vmem:[#allocation3 + $0xa0] sm:$0xff]
        %v2350 = vld [vmem:[#allocation3 + $0xa8] sm:$0xff]
        %v2351 = vld [vmem:[#allocation3 + $0xb0] sm:$0xff]
        %v2352 = vld [vmem:[#allocation3 + $0xb8] sm:$0xff]
        %v2353 = vld [vmem:[#allocation3 + $0xc0] sm:$0xff]
        %v2354 = vld [vmem:[#allocation3 + $0xc8] sm:$0xff]
        %v2355 = vld [vmem:[#allocation3 + $0xd0] sm:$0xff]
        %v2356 = vld [vmem:[#allocation3 + $0xd8] sm:$0xff]
        %v2357 = vld [vmem:[#allocation3 + $0xe0] sm:$0xff]
        %v2358 = vld [vmem:[#allocation3 + $0xe8] sm:$0xff]
        %v2359 = vld [vmem:[#allocation3 + $0xf0] sm:$0xff]
        %v2360 = vld [vmem:[#allocation3 + $0xf8] sm:$0xff]
        %v2361 = vld [vmem:[#allocation3 + $0x100] sm:$0xff]
        %v2362 = vld [vmem:[#allocation3 + $0x108] sm:$0xff]
        %v2363 = vld [vmem:[#allocation3 + $0x110] sm:$0xff]
        %v2364 = vld [vmem:[#allocation3 + $0x118] sm:$0xff]
        %v2365 = vld [vmem:[#allocation3 + $0x120] sm:$0xff]
        %v2366 = vld [vmem:[#allocation3 + $0x128] sm:$0xff]
        %v2367 = vld [vmem:[#allocation3 + $0x130] sm:$0xff]
        %v2368 = vld [vmem:[#allocation3 + $0x138] sm:$0xff]
        %v2370 = vlaneseq
        %v2371 = vshrl.u32 %v2370, 7
        %v2372 = vsub.s32 0, %v2371
        %v2373 = vrot.slane %v649, %v2372
        %v2383 = vunpack.c.l.b16 %v641
        %v2384 = vunpack.c.l.b16 %v642
        %v2385 = vunpack.c.l.b16 %v643
        %v2386 = vunpack.c.l.b16 %v644
        %v2387 = vunpack.c.l.b16 %v645
        %v2388 = vunpack.c.l.b16 %v646
        %v2389 = vunpack.c.l.b16 %v647
        %v2390 = vunpack.c.l.b16 %v648
        %v2391 = vpack.c.b16 %v2384, %v2383
        %v2392 = vpack.c.b16 %v2386, %v2385
        %v2393 = vpack.c.b16 %v2388, %v2387
        %v2394 = vpack.c.b16 %v2390, %v2389
        %v2400 = vsel %vm1416, %v2329, 0
        %v2403 = vsel %vm1416, %v2330, 0
        %v2406 = vsel %vm1416, %v2331, 0
        %v2409 = vsel %vm1416, %v2332, 0
        %v2412 = vsel %vm1416, %v2333, 0
        %v2415 = vsel %vm1416, %v2334, 0
        %v2418 = vsel %vm1416, %v2335, 0
        %v2421 = vsel %vm1416, %v2336, 0
        %v2424 = vsel %vm1416, %v2337, 0
        %v2427 = vsel %vm1416, %v2338, 0
        %v2430 = vsel %vm1416, %v2339, 0
        %v2433 = vsel %vm1416, %v2340, 0
        %v2436 = vsel %vm1416, %v2341, 0
        %v2439 = vsel %vm1416, %v2342, 0
        %v2442 = vsel %vm1416, %v2343, 0
        %v2445 = vsel %vm1416, %v2344, 0
        %v2448 = vsel %vm1416, %v2345, 0
        %v2451 = vsel %vm1416, %v2346, 0
        %v2454 = vsel %vm1416, %v2347, 0
        %v2457 = vsel %vm1416, %v2348, 0
        %v2460 = vsel %vm1416, %v2349, 0
        %v2463 = vsel %vm1416, %v2350, 0
        %v2466 = vsel %vm1416, %v2351, 0
        %v2469 = vsel %vm1416, %v2352, 0
        %v2472 = vsel %vm1416, %v2353, 0
        %v2475 = vsel %vm1416, %v2354, 0
        %v2478 = vsel %vm1416, %v2355, 0
        %v2481 = vsel %vm1416, %v2356, 0
        %v2484 = vsel %vm1416, %v2357, 0
        %v2487 = vsel %vm1416, %v2358, 0
        %v2490 = vsel %vm1416, %v2359, 0
        %v2493 = vsel %vm1416, %v2360, 0
        %v2496 = vsel %vm1416, %v2361, 0
        %v2499 = vsel %vm1416, %v2362, 0
        %v2502 = vsel %vm1416, %v2363, 0
        %v2505 = vsel %vm1416, %v2364, 0
        %v2508 = vsel %vm1416, %v2365, 0
        %v2511 = vsel %vm1416, %v2366, 0
        %v2514 = vsel %vm1416, %v2367, 0
        %v2517 = vsel %vm1416, %v2368, 0
        %2519 = vmatprep.subr.bf16.mxu0 0
        %2520 = vmatpush1.bf16.msra.mxu0 %v2391
        %2521 = vmatprep.subr.bf16.mxu0 0
        %2522 = vmatpush1.bf16.msra.mxu0 %v2392
        %2523 = vmatprep.subr.bf16.mxu0 0
        %2524 = vmatpush1.bf16.msra.mxu0 %v2393
        %2525 = vmatprep.subr.bf16.mxu0 0
        %2526 = vmatpush1.bf16.msra.mxu0 %v2394
        %2527 = vmatprep.subr.bf16.mxu0 0
        %2528 = vmatpush1.bf16.msra.mxu0 0
        %2529 = vmatprep.subr.bf16.mxu0 0
        %2530 = vmatpush1.bf16.msra.mxu0 0
        %2531 = vmatprep.subr.bf16.mxu0 0
        %2532 = vmatpush1.bf16.msra.mxu0 0
        %2533 = vmatprep.subr.bf16.mxu0 0
        %2534 = vmatpush1.bf16.msra.mxu0 0
        %2535 = vmatprep.subr.bf16.mxu0 0
        %2536 = vmatpush1.bf16.msra.mxu0 0
        %2537 = vmatprep.subr.bf16.mxu0 0
        %2538 = vmatpush1.bf16.msra.mxu0 0
        %2539 = vmatprep.subr.bf16.mxu0 0
        %2540 = vmatpush1.bf16.msra.mxu0 0
        %2541 = vmatprep.subr.bf16.mxu0 0
        %2542 = vmatpush1.bf16.msra.mxu0 0
        %2543 = vmatprep.subr.bf16.mxu0 0
        %2544 = vmatpush1.bf16.msra.mxu0 0
        %2545 = vmatprep.subr.bf16.mxu0 0
        %2546 = vmatpush1.bf16.msra.mxu0 0
        %2547 = vmatprep.subr.bf16.mxu0 0
        %2548 = vmatpush1.bf16.msra.mxu0 0
        %2549 = vmatprep.subr.bf16.mxu0 0
        %2550 = vmatpush1.bf16.msra.mxu0 0
        %2551 = vmatprep.mubr.bf16.mxu0 0
        %2552 = vmatmul.mubr.bf16.gmra.mrb[0].mxu0 %v2400
        %v2553 = vpop.f32.mrb[0].mxu0
        %v2554 = vadd.f32 %v2373, %v2553
        %v2555 = vpop.f32.mrb[0].mxu0
        %v2556 = vpop.f32.mrb[0].mxu0
        %v2557 = vadd.f32 %v2373, %v2556
        %v2558 = vpop.f32.mrb[0].mxu0
        %2559 = vmatprep.mubr.bf16.mxu0 0
        %2560 = vmatmul.mubr.bf16.gmra.mrb[0].mxu0 %v2403
        %v2561 = vpop.f32.mrb[0].mxu0
        %v2562 = vadd.f32 %v2373, %v2561
        %v2563 = vpop.f32.mrb[0].mxu0
        %v2564 = vpop.f32.mrb[0].mxu0
        %v2565 = vadd.f32 %v2373, %v2564
        %v2566 = vpop.f32.mrb[0].mxu0
        %2567 = vmatprep.mubr.bf16.mxu0 0
        %2568 = vmatmul.mubr.bf16.gmra.mrb[0].mxu0 %v2406
        %v2569 = vpop.f32.mrb[0].mxu0
        %v2570 = vadd.f32 %v2373, %v2569
        %v2571 = vpop.f32.mrb[0].mxu0
        %v2572 = vpop.f32.mrb[0].mxu0
        %v2573 = vadd.f32 %v2373, %v2572
        %v2574 = vpop.f32.mrb[0].mxu0
        %2575 = vmatprep.mubr.bf16.mxu0 0
        %2576 = vmatmul.mubr.bf16.gmra.mrb[0].mxu0 %v2409
        %v2577 = vpop.f32.mrb[0].mxu0
        %v2578 = vadd.f32 %v2373, %v2577
        %v2579 = vpop.f32.mrb[0].mxu0
        %v2580 = vpop.f32.mrb[0].mxu0
        %v2581 = vadd.f32 %v2373, %v2580
        %v2582 = vpop.f32.mrb[0].mxu0
        %2583 = vmatprep.mubr.bf16.mxu0 0
        %2584 = vmatmul.mubr.bf16.gmra.mrb[0].mxu0 %v2412
        %v2585 = vpop.f32.mrb[0].mxu0
        %v2586 = vadd.f32 %v2373, %v2585
        %v2587 = vpop.f32.mrb[0].mxu0
        %v2588 = vpop.f32.mrb[0].mxu0
        %v2589 = vadd.f32 %v2373, %v2588
        %v2590 = vpop.f32.mrb[0].mxu0
        %2591 = vmatprep.mubr.bf16.mxu0 0
        %2592 = vmatmul.mubr.bf16.gmra.mrb[0].mxu0 %v2415
        %v2593 = vpop.f32.mrb[0].mxu0
        %v2594 = vadd.f32 %v2373, %v2593
        %v2595 = vpop.f32.mrb[0].mxu0
        %v2596 = vpop.f32.mrb[0].mxu0
        %v2597 = vadd.f32 %v2373, %v2596
        %v2598 = vpop.f32.mrb[0].mxu0
        %2599 = vmatprep.mubr.bf16.mxu0 0
        %2600 = vmatmul.mubr.bf16.gmra.mrb[0].mxu0 %v2418
        %v2601 = vpop.f32.mrb[0].mxu0
        %v2602 = vadd.f32 %v2373, %v2601
        %v2603 = vpop.f32.mrb[0].mxu0
        %v2604 = vpop.f32.mrb[0].mxu0
        %v2605 = vadd.f32 %v2373, %v2604
        %v2606 = vpop.f32.mrb[0].mxu0
        %2607 = vmatprep.mubr.bf16.mxu0 0
        %2608 = vmatmul.mubr.bf16.gmra.mrb[0].mxu0 %v2421
        %v2609 = vpop.f32.mrb[0].mxu0
        %v2610 = vadd.f32 %v2373, %v2609
        %v2611 = vpop.f32.mrb[0].mxu0
        %v2612 = vpop.f32.mrb[0].mxu0
        %v2613 = vadd.f32 %v2373, %v2612
        %v2614 = vpop.f32.mrb[0].mxu0
        %2615 = vmatprep.mubr.bf16.mxu0 0
        %2616 = vmatmul.mubr.bf16.gmra.mrb[0].mxu0 %v2424
        %v2617 = vpop.f32.mrb[0].mxu0
        %v2618 = vadd.f32 %v2373, %v2617
        %v2619 = vpop.f32.mrb[0].mxu0
        %v2620 = vpop.f32.mrb[0].mxu0
        %v2621 = vadd.f32 %v2373, %v2620
        %v2622 = vpop.f32.mrb[0].mxu0
        %2623 = vmatprep.mubr.bf16.mxu0 0
        %2624 = vmatmul.mubr.bf16.gmra.mrb[0].mxu0 %v2427
        %v2625 = vpop.f32.mrb[0].mxu0
        %v2626 = vadd.f32 %v2373, %v2625
        %v2627 = vpop.f32.mrb[0].mxu0
        %v2628 = vpop.f32.mrb[0].mxu0
        %v2629 = vadd.f32 %v2373, %v2628
        %v2630 = vpop.f32.mrb[0].mxu0
        %2631 = vmatprep.mubr.bf16.mxu0 0
        %2632 = vmatmul.mubr.bf16.gmra.mrb[0].mxu0 %v2430
        %v2633 = vpop.f32.mrb[0].mxu0
        %v2634 = vadd.f32 %v2373, %v2633
        %v2635 = vpop.f32.mrb[0].mxu0
        %v2636 = vpop.f32.mrb[0].mxu0
        %v2637 = vadd.f32 %v2373, %v2636
        %v2638 = vpop.f32.mrb[0].mxu0
        %2639 = vmatprep.mubr.bf16.mxu0 0
        %2640 = vmatmul.mubr.bf16.gmra.mrb[0].mxu0 %v2433
        %v2641 = vpop.f32.mrb[0].mxu0
        %v2642 = vadd.f32 %v2373, %v2641
        %v2643 = vpop.f32.mrb[0].mxu0
        %v2644 = vpop.f32.mrb[0].mxu0
        %v2645 = vadd.f32 %v2373, %v2644
        %v2646 = vpop.f32.mrb[0].mxu0
        %2647 = vmatprep.mubr.bf16.mxu0 0
        %2648 = vmatmul.mubr.bf16.gmra.mrb[0].mxu0 %v2436
        %v2649 = vpop.f32.mrb[0].mxu0
        %v2650 = vadd.f32 %v2373, %v2649
        %v2651 = vpop.f32.mrb[0].mxu0
        %v2652 = vpop.f32.mrb[0].mxu0
        %v2653 = vadd.f32 %v2373, %v2652
        %v2654 = vpop.f32.mrb[0].mxu0
        %2655 = vmatprep.mubr.bf16.mxu0 0
        %2656 = vmatmul.mubr.bf16.gmra.mrb[0].mxu0 %v2439
        %v2657 = vpop.f32.mrb[0].mxu0
        %v2658 = vadd.f32 %v2373, %v2657
        %v2659 = vpop.f32.mrb[0].mxu0
        %v2660 = vpop.f32.mrb[0].mxu0
        %v2661 = vadd.f32 %v2373, %v2660
        %v2662 = vpop.f32.mrb[0].mxu0
        %2663 = vmatprep.mubr.bf16.mxu0 0
        %2664 = vmatmul.mubr.bf16.gmra.mrb[0].mxu0 %v2442
        %v2665 = vpop.f32.mrb[0].mxu0
        %v2666 = vadd.f32 %v2373, %v2665
        %v2667 = vpop.f32.mrb[0].mxu0
        %v2668 = vpop.f32.mrb[0].mxu0
        %v2669 = vadd.f32 %v2373, %v2668
        %v2670 = vpop.f32.mrb[0].mxu0
        %2671 = vmatprep.mubr.bf16.mxu0 0
        %2672 = vmatmul.mubr.bf16.gmra.mrb[0].mxu0 %v2445
        %v2673 = vpop.f32.mrb[0].mxu0
        %v2674 = vadd.f32 %v2373, %v2673
        %v2675 = vpop.f32.mrb[0].mxu0
        %v2676 = vpop.f32.mrb[0].mxu0
        %v2677 = vadd.f32 %v2373, %v2676
        %v2678 = vpop.f32.mrb[0].mxu0
        %2679 = vmatprep.mubr.bf16.mxu0 0
        %2680 = vmatmul.mubr.bf16.gmra.mrb[0].mxu0 %v2448
        %v2681 = vpop.f32.mrb[0].mxu0
        %v2682 = vadd.f32 %v2373, %v2681
        %v2683 = vpop.f32.mrb[0].mxu0
        %v2684 = vpop.f32.mrb[0].mxu0
        %v2685 = vadd.f32 %v2373, %v2684
        %v2686 = vpop.f32.mrb[0].mxu0
        %2687 = vmatprep.mubr.bf16.mxu0 0
        %2688 = vmatmul.mubr.bf16.gmra.mrb[0].mxu0 %v2451
        %v2689 = vpop.f32.mrb[0].mxu0
        %v2690 = vadd.f32 %v2373, %v2689
        %v2691 = vpop.f32.mrb[0].mxu0
        %v2692 = vpop.f32.mrb[0].mxu0
        %v2693 = vadd.f32 %v2373, %v2692
        %v2694 = vpop.f32.mrb[0].mxu0
        %2695 = vmatprep.mubr.bf16.mxu0 0
        %2696 = vmatmul.mubr.bf16.gmra.mrb[0].mxu0 %v2454
        %v2697 = vpop.f32.mrb[0].mxu0
        %v2698 = vadd.f32 %v2373, %v2697
        %v2699 = vpop.f32.mrb[0].mxu0
        %v2700 = vpop.f32.mrb[0].mxu0
        %v2701 = vadd.f32 %v2373, %v2700
        %v2702 = vpop.f32.mrb[0].mxu0
        %2703 = vmatprep.mubr.bf16.mxu0 0
        %2704 = vmatmul.mubr.bf16.gmra.mrb[0].mxu0 %v2457
        %v2705 = vpop.f32.mrb[0].mxu0
        %v2706 = vadd.f32 %v2373, %v2705
        %v2707 = vpop.f32.mrb[0].mxu0
        %v2708 = vpop.f32.mrb[0].mxu0
        %v2709 = vadd.f32 %v2373, %v2708
        %v2710 = vpop.f32.mrb[0].mxu0
        %2711 = vmatprep.mubr.bf16.mxu0 0
        %2712 = vmatmul.mubr.bf16.gmra.mrb[0].mxu0 %v2460
        %v2713 = vpop.f32.mrb[0].mxu0
        %v2714 = vadd.f32 %v2373, %v2713
        %v2715 = vpop.f32.mrb[0].mxu0
        %v2716 = vpop.f32.mrb[0].mxu0
        %v2717 = vadd.f32 %v2373, %v2716
        %v2718 = vpop.f32.mrb[0].mxu0
        %2719 = vmatprep.mubr.bf16.mxu0 0
        %2720 = vmatmul.mubr.bf16.gmra.mrb[0].mxu0 %v2463
        %v2721 = vpop.f32.mrb[0].mxu0
        %v2722 = vadd.f32 %v2373, %v2721
        %v2723 = vpop.f32.mrb[0].mxu0
        %v2724 = vpop.f32.mrb[0].mxu0
        %v2725 = vadd.f32 %v2373, %v2724
        %v2726 = vpop.f32.mrb[0].mxu0
        %2727 = vmatprep.mubr.bf16.mxu0 0
        %2728 = vmatmul.mubr.bf16.gmra.mrb[0].mxu0 %v2466
        %v2729 = vpop.f32.mrb[0].mxu0
        %v2730 = vadd.f32 %v2373, %v2729
        %v2731 = vpop.f32.mrb[0].mxu0
        %v2732 = vpop.f32.mrb[0].mxu0
        %v2733 = vadd.f32 %v2373, %v2732
        %v2734 = vpop.f32.mrb[0].mxu0
        %2735 = vmatprep.mubr.bf16.mxu0 0
        %2736 = vmatmul.mubr.bf16.gmra.mrb[0].mxu0 %v2469
        %v2737 = vpop.f32.mrb[0].mxu0
        %v2738 = vadd.f32 %v2373, %v2737
        %v2739 = vpop.f32.mrb[0].mxu0
        %v2740 = vpop.f32.mrb[0].mxu0
        %v2741 = vadd.f32 %v2373, %v2740
        %v2742 = vpop.f32.mrb[0].mxu0
        %2743 = vmatprep.mubr.bf16.mxu0 0
        %2744 = vmatmul.mubr.bf16.gmra.mrb[0].mxu0 %v2472
        %v2745 = vpop.f32.mrb[0].mxu0
        %v2746 = vadd.f32 %v2373, %v2745
        %v2747 = vpop.f32.mrb[0].mxu0
        %v2748 = vpop.f32.mrb[0].mxu0
        %v2749 = vadd.f32 %v2373, %v2748
        %v2750 = vpop.f32.mrb[0].mxu0
        %2751 = vmatprep.mubr.bf16.mxu0 0
        %2752 = vmatmul.mubr.bf16.gmra.mrb[0].mxu0 %v2475
        %v2753 = vpop.f32.mrb[0].mxu0
        %v2754 = vadd.f32 %v2373, %v2753
        %v2755 = vpop.f32.mrb[0].mxu0
        %v2756 = vpop.f32.mrb[0].mxu0
        %v2757 = vadd.f32 %v2373, %v2756
        %v2758 = vpop.f32.mrb[0].mxu0
        %2759 = vmatprep.mubr.bf16.mxu0 0
        %2760 = vmatmul.mubr.bf16.gmra.mrb[0].mxu0 %v2478
        %v2761 = vpop.f32.mrb[0].mxu0
        %v2762 = vadd.f32 %v2373, %v2761
        %v2763 = vpop.f32.mrb[0].mxu0
        %v2764 = vpop.f32.mrb[0].mxu0
        %v2765 = vadd.f32 %v2373, %v2764
        %v2766 = vpop.f32.mrb[0].mxu0
        %2767 = vmatprep.mubr.bf16.mxu0 0
        %2768 = vmatmul.mubr.bf16.gmra.mrb[0].mxu0 %v2481
        %v2769 = vpop.f32.mrb[0].mxu0
        %v2770 = vadd.f32 %v2373, %v2769
        %v2771 = vpop.f32.mrb[0].mxu0
        %v2772 = vpop.f32.mrb[0].mxu0
        %v2773 = vadd.f32 %v2373, %v2772
        %v2774 = vpop.f32.mrb[0].mxu0
        %2775 = vmatprep.mubr.bf16.mxu0 0
        %2776 = vmatmul.mubr.bf16.gmra.mrb[0].mxu0 %v2484
        %v2777 = vpop.f32.mrb[0].mxu0
        %v2778 = vadd.f32 %v2373, %v2777
        %v2779 = vpop.f32.mrb[0].mxu0
        %v2780 = vpop.f32.mrb[0].mxu0
        %v2781 = vadd.f32 %v2373, %v2780
        %v2782 = vpop.f32.mrb[0].mxu0
        %2783 = vmatprep.mubr.bf16.mxu0 0
        %2784 = vmatmul.mubr.bf16.gmra.mrb[0].mxu0 %v2487
        %v2785 = vpop.f32.mrb[0].mxu0
        %v2786 = vadd.f32 %v2373, %v2785
        %v2787 = vpop.f32.mrb[0].mxu0
        %v2788 = vpop.f32.mrb[0].mxu0
        %v2789 = vadd.f32 %v2373, %v2788
        %v2790 = vpop.f32.mrb[0].mxu0
        %2791 = vmatprep.mubr.bf16.mxu0 0
        %2792 = vmatmul.mubr.bf16.gmra.mrb[0].mxu0 %v2490
        %v2793 = vpop.f32.mrb[0].mxu0
        %v2794 = vadd.f32 %v2373, %v2793
        %v2795 = vpop.f32.mrb[0].mxu0
        %v2796 = vpop.f32.mrb[0].mxu0
        %v2797 = vadd.f32 %v2373, %v2796
        %v2798 = vpop.f32.mrb[0].mxu0
        %2799 = vmatprep.mubr.bf16.mxu0 0
        %2800 = vmatmul.mubr.bf16.gmra.mrb[0].mxu0 %v2493
        %v2801 = vpop.f32.mrb[0].mxu0
        %v2802 = vadd.f32 %v2373, %v2801
        %v2803 = vpop.f32.mrb[0].mxu0
        %v2804 = vpop.f32.mrb[0].mxu0
        %v2805 = vadd.f32 %v2373, %v2804
        %v2806 = vpop.f32.mrb[0].mxu0
        %2807 = vmatprep.mubr.bf16.mxu0 0
        %2808 = vmatmul.mubr.bf16.gmra.mrb[0].mxu0 %v2496
        %v2809 = vpop.f32.mrb[0].mxu0
        %v2810 = vadd.f32 %v2373, %v2809
        %v2811 = vpop.f32.mrb[0].mxu0
        %v2812 = vpop.f32.mrb[0].mxu0
        %v2813 = vadd.f32 %v2373, %v2812
        %v2814 = vpop.f32.mrb[0].mxu0
        %2815 = vmatprep.mubr.bf16.mxu0 0
        %2816 = vmatmul.mubr.bf16.gmra.mrb[0].mxu0 %v2499
        %v2817 = vpop.f32.mrb[0].mxu0
        %v2818 = vadd.f32 %v2373, %v2817
        %v2819 = vpop.f32.mrb[0].mxu0
        %v2820 = vpop.f32.mrb[0].mxu0
        %v2821 = vadd.f32 %v2373, %v2820
        %v2822 = vpop.f32.mrb[0].mxu0
        %2823 = vmatprep.mubr.bf16.mxu0 0
        %2824 = vmatmul.mubr.bf16.gmra.mrb[0].mxu0 %v2502
        %v2825 = vpop.f32.mrb[0].mxu0
        %v2826 = vadd.f32 %v2373, %v2825
        %v2827 = vpop.f32.mrb[0].mxu0
        %v2828 = vpop.f32.mrb[0].mxu0
        %v2829 = vadd.f32 %v2373, %v2828
        %v2830 = vpop.f32.mrb[0].mxu0
        %2831 = vmatprep.mubr.bf16.mxu0 0
        %2832 = vmatmul.mubr.bf16.gmra.mrb[0].mxu0 %v2505
        %v2833 = vpop.f32.mrb[0].mxu0
        %v2834 = vadd.f32 %v2373, %v2833
        %v2835 = vpop.f32.mrb[0].mxu0
        %v2836 = vpop.f32.mrb[0].mxu0
        %v2837 = vadd.f32 %v2373, %v2836
        %v2838 = vpop.f32.mrb[0].mxu0
        %2839 = vmatprep.mubr.bf16.mxu0 0
        %2840 = vmatmul.mubr.bf16.gmra.mrb[0].mxu0 %v2508
        %v2841 = vpop.f32.mrb[0].mxu0
        %v2842 = vadd.f32 %v2373, %v2841
        %v2843 = vpop.f32.mrb[0].mxu0
        %v2844 = vpop.f32.mrb[0].mxu0
        %v2845 = vadd.f32 %v2373, %v2844
        %v2846 = vpop.f32.mrb[0].mxu0
        %2847 = vmatprep.mubr.bf16.mxu0 0
        %2848 = vmatmul.mubr.bf16.gmra.mrb[0].mxu0 %v2511
        %v2849 = vpop.f32.mrb[0].mxu0
        %v2850 = vadd.f32 %v2373, %v2849
        %v2851 = vpop.f32.mrb[0].mxu0
        %v2852 = vpop.f32.mrb[0].mxu0
        %v2853 = vadd.f32 %v2373, %v2852
        %v2854 = vpop.f32.mrb[0].mxu0
        %2855 = vmatprep.mubr.bf16.mxu0 0
        %2856 = vmatmul.mubr.bf16.gmra.mrb[0].mxu0 %v2514
        %v2857 = vpop.f32.mrb[0].mxu0
        %v2858 = vadd.f32 %v2373, %v2857
        %v2859 = vpop.f32.mrb[0].mxu0
        %v2860 = vpop.f32.mrb[0].mxu0
        %v2861 = vadd.f32 %v2373, %v2860
        %v2862 = vpop.f32.mrb[0].mxu0
        %2863 = vmatprep.mubr.bf16.mxu0 0
        %2864 = vmatmul.mubr.bf16.gmra.mrb[0].mxu0 %v2517
        %v2865 = vpop.f32.mrb[0].mxu0
        %v2866 = vadd.f32 %v2373, %v2865
        %v2867 = vpop.f32.mrb[0].mxu0
        %v2868 = vpop.f32.mrb[0].mxu0
        %v2869 = vadd.f32 %v2373, %v2868
        %v2870 = vpop.f32.mrb[0].mxu0
        %2871 = vdwg.mxu0
        %vm2872 = vcmask 261120
        %2873 = vst.msk [vmem:[#allocation4] sm:$0xff] %vm2872, %v2554
        %2874 = vst.msk [vmem:[#allocation4 + $0x8] sm:$0xff] %vm2872, %v2557
        %2875 = vst.msk [vmem:[#allocation4 + $0x10] sm:$0xff] %vm2872, %v2562
        %2876 = vst.msk [vmem:[#allocation4 + $0x18] sm:$0xff] %vm2872, %v2565
        %2877 = vst.msk [vmem:[#allocation4 + $0x20] sm:$0xff] %vm2872, %v2570
        %2878 = vst.msk [vmem:[#allocation4 + $0x28] sm:$0xff] %vm2872, %v2573
        %2879 = vst.msk [vmem:[#allocation4 + $0x30] sm:$0xff] %vm2872, %v2578
        %2880 = vst.msk [vmem:[#allocation4 + $0x38] sm:$0xff] %vm2872, %v2581
        %2881 = vst.msk [vmem:[#allocation4 + $0x40] sm:$0xff] %vm2872, %v2586
        %2882 = vst.msk [vmem:[#allocation4 + $0x48] sm:$0xff] %vm2872, %v2589
        %2883 = vst.msk [vmem:[#allocation4 + $0x50] sm:$0xff] %vm2872, %v2594
        %2884 = vst.msk [vmem:[#allocation4 + $0x58] sm:$0xff] %vm2872, %v2597
        %2885 = vst.msk [vmem:[#allocation4 + $0x60] sm:$0xff] %vm2872, %v2602
        %2886 = vst.msk [vmem:[#allocation4 + $0x68] sm:$0xff] %vm2872, %v2605
        %2887 = vst.msk [vmem:[#allocation4 + $0x70] sm:$0xff] %vm2872, %v2610
        %2888 = vst.msk [vmem:[#allocation4 + $0x78] sm:$0xff] %vm2872, %v2613
        %2889 = vst.msk [vmem:[#allocation4 + $0x80] sm:$0xff] %vm2872, %v2618
        %2890 = vst.msk [vmem:[#allocation4 + $0x88] sm:$0xff] %vm2872, %v2621
        %2891 = vst.msk [vmem:[#allocation4 + $0x90] sm:$0xff] %vm2872, %v2626
        %2892 = vst.msk [vmem:[#allocation4 + $0x98] sm:$0xff] %vm2872, %v2629
        %2893 = vst.msk [vmem:[#allocation4 + $0xa0] sm:$0xff] %vm2872, %v2634
        %2894 = vst.msk [vmem:[#allocation4 + $0xa8] sm:$0xff] %vm2872, %v2637
        %2895 = vst.msk [vmem:[#allocation4 + $0xb0] sm:$0xff] %vm2872, %v2642
        %2896 = vst.msk [vmem:[#allocation4 + $0xb8] sm:$0xff] %vm2872, %v2645
        %2897 = vst.msk [vmem:[#allocation4 + $0xc0] sm:$0xff] %vm2872, %v2650
        %2898 = vst.msk [vmem:[#allocation4 + $0xc8] sm:$0xff] %vm2872, %v2653
        %2899 = vst.msk [vmem:[#allocation4 + $0xd0] sm:$0xff] %vm2872, %v2658
        %2900 = vst.msk [vmem:[#allocation4 + $0xd8] sm:$0xff] %vm2872, %v2661
        %2901 = vst.msk [vmem:[#allocation4 + $0xe0] sm:$0xff] %vm2872, %v2666
        %2902 = vst.msk [vmem:[#allocation4 + $0xe8] sm:$0xff] %vm2872, %v2669
        %2903 = vst.msk [vmem:[#allocation4 + $0xf0] sm:$0xff] %vm2872, %v2674
        %2904 = vst.msk [vmem:[#allocation4 + $0xf8] sm:$0xff] %vm2872, %v2677
        %2905 = vst.msk [vmem:[#allocation4 + $0x100] sm:$0xff] %vm2872, %v2682
        %2906 = vst.msk [vmem:[#allocation4 + $0x108] sm:$0xff] %vm2872, %v2685
        %2907 = vst.msk [vmem:[#allocation4 + $0x110] sm:$0xff] %vm2872, %v2690
        %2908 = vst.msk [vmem:[#allocation4 + $0x118] sm:$0xff] %vm2872, %v2693
        %2909 = vst.msk [vmem:[#allocation4 + $0x120] sm:$0xff] %vm2872, %v2698
        %2910 = vst.msk [vmem:[#allocation4 + $0x128] sm:$0xff] %vm2872, %v2701
        %2911 = vst.msk [vmem:[#allocation4 + $0x130] sm:$0xff] %vm2872, %v2706
        %2912 = vst.msk [vmem:[#allocation4 + $0x138] sm:$0xff] %vm2872, %v2709
        %2913 = vst.msk [vmem:[#allocation4 + $0x140] sm:$0xff] %vm2872, %v2714
        %2914 = vst.msk [vmem:[#allocation4 + $0x148] sm:$0xff] %vm2872, %v2717
        %2915 = vst.msk [vmem:[#allocation4 + $0x150] sm:$0xff] %vm2872, %v2722
        %2916 = vst.msk [vmem:[#allocation4 + $0x158] sm:$0xff] %vm2872, %v2725
        %2917 = vst.msk [vmem:[#allocation4 + $0x160] sm:$0xff] %vm2872, %v2730
        %2918 = vst.msk [vmem:[#allocation4 + $0x168] sm:$0xff] %vm2872, %v2733
        %2919 = vst.msk [vmem:[#allocation4 + $0x170] sm:$0xff] %vm2872, %v2738
        %2920 = vst.msk [vmem:[#allocation4 + $0x178] sm:$0xff] %vm2872, %v2741
        %2921 = vst.msk [vmem:[#allocation4 + $0x180] sm:$0xff] %vm2872, %v2746
        %2922 = vst.msk [vmem:[#allocation4 + $0x188] sm:$0xff] %vm2872, %v2749
        %2923 = vst.msk [vmem:[#allocation4 + $0x190] sm:$0xff] %vm2872, %v2754
        %2924 = vst.msk [vmem:[#allocation4 + $0x198] sm:$0xff] %vm2872, %v2757
        %2925 = vst.msk [vmem:[#allocation4 + $0x1a0] sm:$0xff] %vm2872, %v2762
        %2926 = vst.msk [vmem:[#allocation4 + $0x1a8] sm:$0xff] %vm2872, %v2765
        %2927 = vst.msk [vmem:[#allocation4 + $0x1b0] sm:$0xff] %vm2872, %v2770
        %2928 = vst.msk [vmem:[#allocation4 + $0x1b8] sm:$0xff] %vm2872, %v2773
        %2929 = vst.msk [vmem:[#allocation4 + $0x1c0] sm:$0xff] %vm2872, %v2778
        %2930 = vst.msk [vmem:[#allocation4 + $0x1c8] sm:$0xff] %vm2872, %v2781
        %2931 = vst.msk [vmem:[#allocation4 + $0x1d0] sm:$0xff] %vm2872, %v2786
        %2932 = vst.msk [vmem:[#allocation4 + $0x1d8] sm:$0xff] %vm2872, %v2789
        %2933 = vst.msk [vmem:[#allocation4 + $0x1e0] sm:$0xff] %vm2872, %v2794
        %2934 = vst.msk [vmem:[#allocation4 + $0x1e8] sm:$0xff] %vm2872, %v2797
        %2935 = vst.msk [vmem:[#allocation4 + $0x1f0] sm:$0xff] %vm2872, %v2802
        %2936 = vst.msk [vmem:[#allocation4 + $0x1f8] sm:$0xff] %vm2872, %v2805
        %2937 = vst.msk [vmem:[#allocation4 + $0x200] sm:$0xff] %vm2872, %v2810
        %2938 = vst.msk [vmem:[#allocation4 + $0x208] sm:$0xff] %vm2872, %v2813
        %2939 = vst.msk [vmem:[#allocation4 + $0x210] sm:$0xff] %vm2872, %v2818
        %2940 = vst.msk [vmem:[#allocation4 + $0x218] sm:$0xff] %vm2872, %v2821
        %2941 = vst.msk [vmem:[#allocation4 + $0x220] sm:$0xff] %vm2872, %v2826
        %2942 = vst.msk [vmem:[#allocation4 + $0x228] sm:$0xff] %vm2872, %v2829
        %2943 = vst.msk [vmem:[#allocation4 + $0x230] sm:$0xff] %vm2872, %v2834
        %2944 = vst.msk [vmem:[#allocation4 + $0x238] sm:$0xff] %vm2872, %v2837
        %2945 = vst.msk [vmem:[#allocation4 + $0x240] sm:$0xff] %vm2872, %v2842
        %2946 = vst.msk [vmem:[#allocation4 + $0x248] sm:$0xff] %vm2872, %v2845
        %2947 = vst.msk [vmem:[#allocation4 + $0x250] sm:$0xff] %vm2872, %v2850
        %2948 = vst.msk [vmem:[#allocation4 + $0x258] sm:$0xff] %vm2872, %v2853
        %2949 = vst.msk [vmem:[#allocation4 + $0x260] sm:$0xff] %vm2872, %v2858
        %2950 = vst.msk [vmem:[#allocation4 + $0x268] sm:$0xff] %vm2872, %v2861
        %2951 = vst.msk [vmem:[#allocation4 + $0x270] sm:$0xff] %vm2872, %v2866
        %2952 = vst.msk [vmem:[#allocation4 + $0x278] sm:$0xff] %vm2872, %v2869
        %v2953 = vld [vmem:[#allocation4 + $0x80] sm:$0xff]
        %v2954 = vld [vmem:[#allocation4 + $0x88] sm:$0xff]
        %v2955 = vld [vmem:[#allocation4 + $0x90] sm:$0xff]
        %v2956 = vld [vmem:[#allocation4 + $0x98] sm:$0xff]
        %v2957 = vld [vmem:[#allocation4 + $0xa0] sm:$0xff]
        %v2958 = vld [vmem:[#allocation4 + $0xa8] sm:$0xff]
        %v2959 = vld [vmem:[#allocation4 + $0xb0] sm:$0xff]
        %v2960 = vld [vmem:[#allocation4 + $0xb8] sm:$0xff]
        %v2961 = vld [vmem:[#allocation4 + $0xc0] sm:$0xff]
        %v2962 = vld [vmem:[#allocation4 + $0xc8] sm:$0xff]
        %v2963 = vld [vmem:[#allocation4 + $0xd0] sm:$0xff]
        %v2964 = vld [vmem:[#allocation4 + $0xd8] sm:$0xff]
        %v2965 = vld [vmem:[#allocation4 + $0xe0] sm:$0xff]
        %v2966 = vld [vmem:[#allocation4 + $0xe8] sm:$0xff]
        %v2967 = vld [vmem:[#allocation4 + $0xf0] sm:$0xff]
        %v2968 = vld [vmem:[#allocation4 + $0xf8] sm:$0xff]
        %v2969 = vadd.f32 %v2953, 0.0
        %v2970 = vadd.f32 %v2954, 0.0
        %v2971 = vadd.f32 %v2955, 0.0
        %v2972 = vadd.f32 %v2956, 0.0
        %v2973 = vadd.f32 %v2957, 0.0
        %v2974 = vadd.f32 %v2958, 0.0
        %v2975 = vadd.f32 %v2959, 0.0
        %v2976 = vadd.f32 %v2960, 0.0
        %v2977 = vadd.f32 %v2961, 0.0
        %v2978 = vadd.f32 %v2962, 0.0
        %v2979 = vadd.f32 %v2963, 0.0
        %v2980 = vadd.f32 %v2964, 0.0
        %v2981 = vadd.f32 %v2965, 0.0
        %v2982 = vadd.f32 %v2966, 0.0
        %v2983 = vadd.f32 %v2967, 0.0
        %v2984 = vadd.f32 %v2968, 0.0
        %v2985 = vmul.f32 %v2953, 0.8999955
        %v2986 = vmul.f32 %v2954, 0.8999955
        %v2987 = vmul.f32 %v2955, 0.8999955
        %v2988 = vmul.f32 %v2956, 0.8999955
        %v2989 = vmul.f32 %v2957, 0.8999955
        %v2990 = vmul.f32 %v2958, 0.8999955
        %v2991 = vmul.f32 %v2959, 0.8999955
        %v2992 = vmul.f32 %v2960, 0.8999955
        %v2993 = vmul.f32 %v2961, 0.8999955
        %v2994 = vmul.f32 %v2962, 0.8999955
        %v2995 = vmul.f32 %v2963, 0.8999955
        %v2996 = vmul.f32 %v2964, 0.8999955
        %v2997 = vmul.f32 %v2965, 0.8999955
        %v2998 = vmul.f32 %v2966, 0.8999955
        %v2999 = vmul.f32 %v2967, 0.8999955
        %v3000 = vmul.f32 %v2968, 0.8999955
        %v3001 = vadd.f32 %v2985, 0.05
        %v3002 = vadd.f32 %v2986, 0.05
        %v3003 = vadd.f32 %v2987, 0.05
        %v3004 = vadd.f32 %v2988, 0.05
        %v3005 = vadd.f32 %v2989, 0.05
        %v3006 = vadd.f32 %v2990, 0.05
        %v3007 = vadd.f32 %v2991, 0.05
        %v3008 = vadd.f32 %v2992, 0.05
        %v3009 = vadd.f32 %v2993, 0.05
        %v3010 = vadd.f32 %v2994, 0.05
        %v3011 = vadd.f32 %v2995, 0.05
        %v3012 = vadd.f32 %v2996, 0.05
        %v3013 = vadd.f32 %v2997, 0.05
        %v3014 = vadd.f32 %v2998, 0.05
        %v3015 = vadd.f32 %v2999, 0.05
        %v3016 = vadd.f32 %v3000, 0.05
        %v3017 = vmax.f32 %v3001, 0.0
        %v3018 = vmax.f32 %v3002, 0.0
        %v3019 = vmax.f32 %v3003, 0.0
        %v3020 = vmax.f32 %v3004, 0.0
        %v3021 = vmax.f32 %v3005, 0.0
        %v3022 = vmax.f32 %v3006, 0.0
        %v3023 = vmax.f32 %v3007, 0.0
        %v3024 = vmax.f32 %v3008, 0.0
        %v3025 = vmax.f32 %v3009, 0.0
        %v3026 = vmax.f32 %v3010, 0.0
        %v3027 = vmax.f32 %v3011, 0.0
        %v3028 = vmax.f32 %v3012, 0.0
        %v3029 = vmax.f32 %v3013, 0.0
        %v3030 = vmax.f32 %v3014, 0.0
        %v3031 = vmax.f32 %v3015, 0.0
        %v3032 = vmax.f32 %v3016, 0.0
        %v3033 = vadd.f32 %v3017, 0.0
        %v3034 = vadd.f32 %v3018, 0.0
        %v3035 = vadd.f32 %v3019, 0.0
        %v3036 = vadd.f32 %v3020, 0.0
        %v3037 = vadd.f32 %v3021, 0.0
        %v3038 = vadd.f32 %v3022, 0.0
        %v3039 = vadd.f32 %v3023, 0.0
        %v3040 = vadd.f32 %v3024, 0.0
        %v3041 = vadd.f32 %v3025, 0.0
        %v3042 = vadd.f32 %v3026, 0.0
        %v3043 = vadd.f32 %v3027, 0.0
        %v3044 = vadd.f32 %v3028, 0.0
        %v3045 = vadd.f32 %v3029, 0.0
        %v3046 = vadd.f32 %v3030, 0.0
        %v3047 = vadd.f32 %v3031, 0.0
        %v3048 = vadd.f32 %v3032, 0.0
        %v3049 = vld [vmem:[#allocation4 + $0x100] sm:$0xff]
        %v3050 = vld [vmem:[#allocation4 + $0x108] sm:$0xff]
        %v3051 = vld [vmem:[#allocation4 + $0x110] sm:$0xff]
        %v3052 = vld [vmem:[#allocation4 + $0x118] sm:$0xff]
        %v3053 = vld [vmem:[#allocation4 + $0x120] sm:$0xff]
        %v3054 = vld [vmem:[#allocation4 + $0x128] sm:$0xff]
        %v3055 = vld [vmem:[#allocation4 + $0x130] sm:$0xff]
        %v3056 = vld [vmem:[#allocation4 + $0x138] sm:$0xff]
        %v3057 = vld [vmem:[#allocation4 + $0x140] sm:$0xff]
        %v3058 = vld [vmem:[#allocation4 + $0x148] sm:$0xff]
        %v3059 = vld [vmem:[#allocation4 + $0x150] sm:$0xff]
        %v3060 = vld [vmem:[#allocation4 + $0x158] sm:$0xff]
        %v3061 = vld [vmem:[#allocation4 + $0x160] sm:$0xff]
        %v3062 = vld [vmem:[#allocation4 + $0x168] sm:$0xff]
        %v3063 = vld [vmem:[#allocation4 + $0x170] sm:$0xff]
        %v3064 = vld [vmem:[#allocation4 + $0x178] sm:$0xff]
        %v3065 = vadd.f32 %v2969, %v3049
        %v3066 = vadd.f32 %v2970, %v3050
        %v3067 = vadd.f32 %v2971, %v3051
        %v3068 = vadd.f32 %v2972, %v3052
        %v3069 = vadd.f32 %v2973, %v3053
        %v3070 = vadd.f32 %v2974, %v3054
        %v3071 = vadd.f32 %v2975, %v3055
        %v3072 = vadd.f32 %v2976, %v3056
        %v3073 = vadd.f32 %v2977, %v3057
        %v3074 = vadd.f32 %v2978, %v3058
        %v3075 = vadd.f32 %v2979, %v3059
        %v3076 = vadd.f32 %v2980, %v3060
        %v3077 = vadd.f32 %v2981, %v3061
        %v3078 = vadd.f32 %v2982, %v3062
        %v3079 = vadd.f32 %v2983, %v3063
        %v3080 = vadd.f32 %v2984, %v3064
        %v3081 = vmul.f32 %v3049, 0.8999955
        %v3082 = vmul.f32 %v3050, 0.8999955
        %v3083 = vmul.f32 %v3051, 0.8999955
        %v3084 = vmul.f32 %v3052, 0.8999955
        %v3085 = vmul.f32 %v3053, 0.8999955
        %v3086 = vmul.f32 %v3054, 0.8999955
        %v3087 = vmul.f32 %v3055, 0.8999955
        %v3088 = vmul.f32 %v3056, 0.8999955
        %v3089 = vmul.f32 %v3057, 0.8999955
        %v3090 = vmul.f32 %v3058, 0.8999955
        %v3091 = vmul.f32 %v3059, 0.8999955
        %v3092 = vmul.f32 %v3060, 0.8999955
        %v3093 = vmul.f32 %v3061, 0.8999955
        %v3094 = vmul.f32 %v3062, 0.8999955
        %v3095 = vmul.f32 %v3063, 0.8999955
        %v3096 = vmul.f32 %v3064, 0.8999955
        %v3097 = vadd.f32 %v3081, 0.05
        %v3098 = vadd.f32 %v3082, 0.05
        %v3099 = vadd.f32 %v3083, 0.05
        %v3100 = vadd.f32 %v3084, 0.05
        %v3101 = vadd.f32 %v3085, 0.05
        %v3102 = vadd.f32 %v3086, 0.05
        %v3103 = vadd.f32 %v3087, 0.05
        %v3104 = vadd.f32 %v3088, 0.05
        %v3105 = vadd.f32 %v3089, 0.05
        %v3106 = vadd.f32 %v3090, 0.05
        %v3107 = vadd.f32 %v3091, 0.05
        %v3108 = vadd.f32 %v3092, 0.05
        %v3109 = vadd.f32 %v3093, 0.05
        %v3110 = vadd.f32 %v3094, 0.05
        %v3111 = vadd.f32 %v3095, 0.05
        %v3112 = vadd.f32 %v3096, 0.05
        %v3113 = vmax.f32 %v3097, 0.0
        %v3114 = vmax.f32 %v3098, 0.0
        %v3115 = vmax.f32 %v3099, 0.0
        %v3116 = vmax.f32 %v3100, 0.0
        %v3117 = vmax.f32 %v3101, 0.0
        %v3118 = vmax.f32 %v3102, 0.0
        %v3119 = vmax.f32 %v3103, 0.0
        %v3120 = vmax.f32 %v3104, 0.0
        %v3121 = vmax.f32 %v3105, 0.0
        %v3122 = vmax.f32 %v3106, 0.0
        %v3123 = vmax.f32 %v3107, 0.0
        %v3124 = vmax.f32 %v3108, 0.0
        %v3125 = vmax.f32 %v3109, 0.0
        %v3126 = vmax.f32 %v3110, 0.0
        %v3127 = vmax.f32 %v3111, 0.0
        %v3128 = vmax.f32 %v3112, 0.0
        %v3129 = vadd.f32 %v3033, %v3113
        %v3130 = vadd.f32 %v3034, %v3114
        %v3131 = vadd.f32 %v3035, %v3115
        %v3132 = vadd.f32 %v3036, %v3116
        %v3133 = vadd.f32 %v3037, %v3117
        %v3134 = vadd.f32 %v3038, %v3118
        %v3135 = vadd.f32 %v3039, %v3119
        %v3136 = vadd.f32 %v3040, %v3120
        %v3137 = vadd.f32 %v3041, %v3121
        %v3138 = vadd.f32 %v3042, %v3122
        %v3139 = vadd.f32 %v3043, %v3123
        %v3140 = vadd.f32 %v3044, %v3124
        %v3141 = vadd.f32 %v3045, %v3125
        %v3142 = vadd.f32 %v3046, %v3126
        %v3143 = vadd.f32 %v3047, %v3127
        %v3144 = vadd.f32 %v3048, %v3128
        %v3145 = vld [vmem:[#allocation4 + $0x180] sm:$0xff]
        %v3146 = vld [vmem:[#allocation4 + $0x188] sm:$0xff]
        %v3147 = vld [vmem:[#allocation4 + $0x190] sm:$0xff]
        %v3148 = vld [vmem:[#allocation4 + $0x198] sm:$0xff]
        %v3149 = vld [vmem:[#allocation4 + $0x1a0] sm:$0xff]
        %v3150 = vld [vmem:[#allocation4 + $0x1a8] sm:$0xff]
        %v3151 = vld [vmem:[#allocation4 + $0x1b0] sm:$0xff]
        %v3152 = vld [vmem:[#allocation4 + $0x1b8] sm:$0xff]
        %v3153 = vld [vmem:[#allocation4 + $0x1c0] sm:$0xff]
        %v3154 = vld [vmem:[#allocation4 + $0x1c8] sm:$0xff]
        %v3155 = vld [vmem:[#allocation4 + $0x1d0] sm:$0xff]
        %v3156 = vld [vmem:[#allocation4 + $0x1d8] sm:$0xff]
        %v3157 = vld [vmem:[#allocation4 + $0x1e0] sm:$0xff]
        %v3158 = vld [vmem:[#allocation4 + $0x1e8] sm:$0xff]
        %v3159 = vld [vmem:[#allocation4 + $0x1f0] sm:$0xff]
        %v3160 = vld [vmem:[#allocation4 + $0x1f8] sm:$0xff]
        %v3161 = vadd.f32 %v3065, %v3145
        %v3162 = vadd.f32 %v3066, %v3146
        %v3163 = vadd.f32 %v3067, %v3147
        %v3164 = vadd.f32 %v3068, %v3148
        %v3165 = vadd.f32 %v3069, %v3149
        %v3166 = vadd.f32 %v3070, %v3150
        %v3167 = vadd.f32 %v3071, %v3151
        %v3168 = vadd.f32 %v3072, %v3152
        %v3169 = vadd.f32 %v3073, %v3153
        %v3170 = vadd.f32 %v3074, %v3154
        %v3171 = vadd.f32 %v3075, %v3155
        %v3172 = vadd.f32 %v3076, %v3156
        %v3173 = vadd.f32 %v3077, %v3157
        %v3174 = vadd.f32 %v3078, %v3158
        %v3175 = vadd.f32 %v3079, %v3159
        %v3176 = vadd.f32 %v3080, %v3160
        %v3177 = vmul.f32 %v3145, 0.8999955
        %v3178 = vmul.f32 %v3146, 0.8999955
        %v3179 = vmul.f32 %v3147, 0.8999955
        %v3180 = vmul.f32 %v3148, 0.8999955
        %v3181 = vmul.f32 %v3149, 0.8999955
        %v3182 = vmul.f32 %v3150, 0.8999955
        %v3183 = vmul.f32 %v3151, 0.8999955
        %v3184 = vmul.f32 %v3152, 0.8999955
        %v3185 = vmul.f32 %v3153, 0.8999955
        %v3186 = vmul.f32 %v3154, 0.8999955
        %v3187 = vmul.f32 %v3155, 0.8999955
        %v3188 = vmul.f32 %v3156, 0.8999955
        %v3189 = vmul.f32 %v3157, 0.8999955
        %v3190 = vmul.f32 %v3158, 0.8999955
        %v3191 = vmul.f32 %v3159, 0.8999955
        %v3192 = vmul.f32 %v3160, 0.8999955
        %v3193 = vadd.f32 %v3177, 0.05
        %v3194 = vadd.f32 %v3178, 0.05
        %v3195 = vadd.f32 %v3179, 0.05
        %v3196 = vadd.f32 %v3180, 0.05
        %v3197 = vadd.f32 %v3181, 0.05
        %v3198 = vadd.f32 %v3182, 0.05
        %v3199 = vadd.f32 %v3183, 0.05
        %v3200 = vadd.f32 %v3184, 0.05
        %v3201 = vadd.f32 %v3185, 0.05
        %v3202 = vadd.f32 %v3186, 0.05
        %v3203 = vadd.f32 %v3187, 0.05
        %v3204 = vadd.f32 %v3188, 0.05
        %v3205 = vadd.f32 %v3189, 0.05
        %v3206 = vadd.f32 %v3190, 0.05
        %v3207 = vadd.f32 %v3191, 0.05
        %v3208 = vadd.f32 %v3192, 0.05
        %v3209 = vmax.f32 %v3193, 0.0
        %v3210 = vmax.f32 %v3194, 0.0
        %v3211 = vmax.f32 %v3195, 0.0
        %v3212 = vmax.f32 %v3196, 0.0
        %v3213 = vmax.f32 %v3197, 0.0
        %v3214 = vmax.f32 %v3198, 0.0
        %v3215 = vmax.f32 %v3199, 0.0
        %v3216 = vmax.f32 %v3200, 0.0
        %v3217 = vmax.f32 %v3201, 0.0
        %v3218 = vmax.f32 %v3202, 0.0
        %v3219 = vmax.f32 %v3203, 0.0
        %v3220 = vmax.f32 %v3204, 0.0
        %v3221 = vmax.f32 %v3205, 0.0
        %v3222 = vmax.f32 %v3206, 0.0
        %v3223 = vmax.f32 %v3207, 0.0
        %v3224 = vmax.f32 %v3208, 0.0
        %v3225 = vadd.f32 %v3129, %v3209
        %v3226 = vadd.f32 %v3130, %v3210
        %v3227 = vadd.f32 %v3131, %v3211
        %v3228 = vadd.f32 %v3132, %v3212
        %v3229 = vadd.f32 %v3133, %v3213
        %v3230 = vadd.f32 %v3134, %v3214
        %v3231 = vadd.f32 %v3135, %v3215
        %v3232 = vadd.f32 %v3136, %v3216
        %v3233 = vadd.f32 %v3137, %v3217
        %v3234 = vadd.f32 %v3138, %v3218
        %v3235 = vadd.f32 %v3139, %v3219
        %v3236 = vadd.f32 %v3140, %v3220
        %v3237 = vadd.f32 %v3141, %v3221
        %v3238 = vadd.f32 %v3142, %v3222
        %v3239 = vadd.f32 %v3143, %v3223
        %v3240 = vadd.f32 %v3144, %v3224
        %v3241 = vld [vmem:[#allocation4 + $0x200] sm:$0xff]
        %v3242 = vld [vmem:[#allocation4 + $0x208] sm:$0xff]
        %v3243 = vld [vmem:[#allocation4 + $0x210] sm:$0xff]
        %v3244 = vld [vmem:[#allocation4 + $0x218] sm:$0xff]
        %v3245 = vld [vmem:[#allocation4 + $0x220] sm:$0xff]
        %v3246 = vld [vmem:[#allocation4 + $0x228] sm:$0xff]
        %v3247 = vld [vmem:[#allocation4 + $0x230] sm:$0xff]
        %v3248 = vld [vmem:[#allocation4 + $0x238] sm:$0xff]
        %v3249 = vld [vmem:[#allocation4 + $0x240] sm:$0xff]
        %v3250 = vld [vmem:[#allocation4 + $0x248] sm:$0xff]
        %v3251 = vld [vmem:[#allocation4 + $0x250] sm:$0xff]
        %v3252 = vld [vmem:[#allocation4 + $0x258] sm:$0xff]
        %v3253 = vld [vmem:[#allocation4 + $0x260] sm:$0xff]
        %v3254 = vld [vmem:[#allocation4 + $0x268] sm:$0xff]
        %v3255 = vld [vmem:[#allocation4 + $0x270] sm:$0xff]
        %v3256 = vld [vmem:[#allocation4 + $0x278] sm:$0xff]
        %v3257 = vadd.f32 %v3161, %v3241
        %v3258 = vadd.f32 %v3162, %v3242
        %v3259 = vadd.f32 %v3163, %v3243
        %v3260 = vadd.f32 %v3164, %v3244
        %v3261 = vadd.f32 %v3165, %v3245
        %v3262 = vadd.f32 %v3166, %v3246
        %v3263 = vadd.f32 %v3167, %v3247
        %v3264 = vadd.f32 %v3168, %v3248
        %v3265 = vadd.f32 %v3169, %v3249
        %v3266 = vadd.f32 %v3170, %v3250
        %v3267 = vadd.f32 %v3171, %v3251
        %v3268 = vadd.f32 %v3172, %v3252
        %v3269 = vadd.f32 %v3173, %v3253
        %v3270 = vadd.f32 %v3174, %v3254
        %v3271 = vadd.f32 %v3175, %v3255
        %v3272 = vadd.f32 %v3176, %v3256
        %v3273 = vmul.f32 %v3241, 0.8999955
        %v3274 = vmul.f32 %v3242, 0.8999955
        %v3275 = vmul.f32 %v3243, 0.8999955
        %v3276 = vmul.f32 %v3244, 0.8999955
        %v3277 = vmul.f32 %v3245, 0.8999955
        %v3278 = vmul.f32 %v3246, 0.8999955
        %v3279 = vmul.f32 %v3247, 0.8999955
        %v3280 = vmul.f32 %v3248, 0.8999955
        %v3281 = vmul.f32 %v3249, 0.8999955
        %v3282 = vmul.f32 %v3250, 0.8999955
        %v3283 = vmul.f32 %v3251, 0.8999955
        %v3284 = vmul.f32 %v3252, 0.8999955
        %v3285 = vmul.f32 %v3253, 0.8999955
        %v3286 = vmul.f32 %v3254, 0.8999955
        %v3287 = vmul.f32 %v3255, 0.8999955
        %v3288 = vmul.f32 %v3256, 0.8999955
        %v3289 = vadd.f32 %v3273, 0.05
        %v3290 = vadd.f32 %v3274, 0.05
        %v3291 = vadd.f32 %v3275, 0.05
        %v3292 = vadd.f32 %v3276, 0.05
        %v3293 = vadd.f32 %v3277, 0.05
        %v3294 = vadd.f32 %v3278, 0.05
        %v3295 = vadd.f32 %v3279, 0.05
        %v3296 = vadd.f32 %v3280, 0.05
        %v3297 = vadd.f32 %v3281, 0.05
        %v3298 = vadd.f32 %v3282, 0.05
        %v3299 = vadd.f32 %v3283, 0.05
        %v3300 = vadd.f32 %v3284, 0.05
        %v3301 = vadd.f32 %v3285, 0.05
        %v3302 = vadd.f32 %v3286, 0.05
        %v3303 = vadd.f32 %v3287, 0.05
        %v3304 = vadd.f32 %v3288, 0.05
        %v3305 = vmax.f32 %v3289, 0.0
        %v3306 = vmax.f32 %v3290, 0.0
        %v3307 = vmax.f32 %v3291, 0.0
        %v3308 = vmax.f32 %v3292, 0.0
        %v3309 = vmax.f32 %v3293, 0.0
        %v3310 = vmax.f32 %v3294, 0.0
        %v3311 = vmax.f32 %v3295, 0.0
        %v3312 = vmax.f32 %v3296, 0.0
        %v3313 = vmax.f32 %v3297, 0.0
        %v3314 = vmax.f32 %v3298, 0.0
        %v3315 = vmax.f32 %v3299, 0.0
        %v3316 = vmax.f32 %v3300, 0.0
        %v3317 = vmax.f32 %v3301, 0.0
        %v3318 = vmax.f32 %v3302, 0.0
        %v3319 = vmax.f32 %v3303, 0.0
        %v3320 = vmax.f32 %v3304, 0.0
        %v3321 = vadd.f32 %v3225, %v3305
        %v3322 = vadd.f32 %v3226, %v3306
        %v3323 = vadd.f32 %v3227, %v3307
        %v3324 = vadd.f32 %v3228, %v3308
        %v3325 = vadd.f32 %v3229, %v3309
        %v3326 = vadd.f32 %v3230, %v3310
        %v3327 = vadd.f32 %v3231, %v3311
        %v3328 = vadd.f32 %v3232, %v3312
        %v3329 = vadd.f32 %v3233, %v3313
        %v3330 = vadd.f32 %v3234, %v3314
        %v3331 = vadd.f32 %v3235, %v3315
        %v3332 = vadd.f32 %v3236, %v3316
        %v3333 = vadd.f32 %v3237, %v3317
        %v3334 = vadd.f32 %v3238, %v3318
        %v3335 = vadd.f32 %v3239, %v3319
        %v3336 = vadd.f32 %v3240, %v3320
        %v3337 = vld [vmem:[#allocation4] sm:$0xff]
        %v3338 = vld [vmem:[#allocation4 + $0x8] sm:$0xff]
        %v3339 = vld [vmem:[#allocation4 + $0x10] sm:$0xff]
        %v3340 = vld [vmem:[#allocation4 + $0x18] sm:$0xff]
        %v3341 = vld [vmem:[#allocation4 + $0x20] sm:$0xff]
        %v3342 = vld [vmem:[#allocation4 + $0x28] sm:$0xff]
        %v3343 = vld [vmem:[#allocation4 + $0x30] sm:$0xff]
        %v3344 = vld [vmem:[#allocation4 + $0x38] sm:$0xff]
        %v3345 = vld [vmem:[#allocation4 + $0x40] sm:$0xff]
        %v3346 = vld [vmem:[#allocation4 + $0x48] sm:$0xff]
        %v3347 = vld [vmem:[#allocation4 + $0x50] sm:$0xff]
        %v3348 = vld [vmem:[#allocation4 + $0x58] sm:$0xff]
        %v3349 = vld [vmem:[#allocation4 + $0x60] sm:$0xff]
        %v3350 = vld [vmem:[#allocation4 + $0x68] sm:$0xff]
        %v3351 = vld [vmem:[#allocation4 + $0x70] sm:$0xff]
        %v3352 = vld [vmem:[#allocation4 + $0x78] sm:$0xff]
        %v3353 = vadd.f32 %v3337, %v3257
        %v3354 = vadd.f32 %v3338, %v3258
        %v3355 = vadd.f32 %v3339, %v3259
        %v3356 = vadd.f32 %v3340, %v3260
        %v3357 = vadd.f32 %v3341, %v3261
        %v3358 = vadd.f32 %v3342, %v3262
        %v3359 = vadd.f32 %v3343, %v3263
        %v3360 = vadd.f32 %v3344, %v3264
        %v3361 = vadd.f32 %v3345, %v3265
        %v3362 = vadd.f32 %v3346, %v3266
        %v3363 = vadd.f32 %v3347, %v3267
        %v3364 = vadd.f32 %v3348, %v3268
        %v3365 = vadd.f32 %v3349, %v3269
        %v3366 = vadd.f32 %v3350, %v3270
        %v3367 = vadd.f32 %v3351, %v3271
        %v3368 = vadd.f32 %v3352, %v3272
        %v3369 = vmul.f32 %v3353, 0.9
        %v3370 = vmul.f32 %v3354, 0.9
        %v3371 = vmul.f32 %v3355, 0.9
        %v3372 = vmul.f32 %v3356, 0.9
        %v3373 = vmul.f32 %v3357, 0.9
        %v3374 = vmul.f32 %v3358, 0.9
        %v3375 = vmul.f32 %v3359, 0.9
        %v3376 = vmul.f32 %v3360, 0.9
        %v3377 = vmul.f32 %v3361, 0.9
        %v3378 = vmul.f32 %v3362, 0.9
        %v3379 = vmul.f32 %v3363, 0.9
        %v3380 = vmul.f32 %v3364, 0.9
        %v3381 = vmul.f32 %v3365, 0.9
        %v3382 = vmul.f32 %v3366, 0.9
        %v3383 = vmul.f32 %v3367, 0.9
        %v3384 = vmul.f32 %v3368, 0.9
        %v3385 = vmul.f32 %v3337, 0.1
        %v3386 = vmul.f32 %v3338, 0.1
        %v3387 = vmul.f32 %v3339, 0.1
        %v3388 = vmul.f32 %v3340, 0.1
        %v3389 = vmul.f32 %v3341, 0.1
        %v3390 = vmul.f32 %v3342, 0.1
        %v3391 = vmul.f32 %v3343, 0.1
        %v3392 = vmul.f32 %v3344, 0.1
        %v3393 = vmul.f32 %v3345, 0.1
        %v3394 = vmul.f32 %v3346, 0.1
        %v3395 = vmul.f32 %v3347, 0.1
        %v3396 = vmul.f32 %v3348, 0.1
        %v3397 = vmul.f32 %v3349, 0.1
        %v3398 = vmul.f32 %v3350, 0.1
        %v3399 = vmul.f32 %v3351, 0.1
        %v3400 = vmul.f32 %v3352, 0.1
        %v3401 = vadd.f32 %v3369, %v3385
        %v3402 = vadd.f32 %v3370, %v3386
        %v3403 = vadd.f32 %v3371, %v3387
        %v3404 = vadd.f32 %v3372, %v3388
        %v3405 = vadd.f32 %v3373, %v3389
        %v3406 = vadd.f32 %v3374, %v3390
        %v3407 = vadd.f32 %v3375, %v3391
        %v3408 = vadd.f32 %v3376, %v3392
        %v3409 = vadd.f32 %v3377, %v3393
        %v3410 = vadd.f32 %v3378, %v3394
        %v3411 = vadd.f32 %v3379, %v3395
        %v3412 = vadd.f32 %v3380, %v3396
        %v3413 = vadd.f32 %v3381, %v3397
        %v3414 = vadd.f32 %v3382, %v3398
        %v3415 = vadd.f32 %v3383, %v3399
        %v3416 = vadd.f32 %v3384, %v3400
        %v3417 = vmul.f32 %v3401, 0.8999955
        %v3418 = vmul.f32 %v3402, 0.8999955
        %v3419 = vmul.f32 %v3403, 0.8999955
        %v3420 = vmul.f32 %v3404, 0.8999955
        %v3421 = vmul.f32 %v3405, 0.8999955
        %v3422 = vmul.f32 %v3406, 0.8999955
        %v3423 = vmul.f32 %v3407, 0.8999955
        %v3424 = vmul.f32 %v3408, 0.8999955
        %v3425 = vmul.f32 %v3409, 0.8999955
        %v3426 = vmul.f32 %v3410, 0.8999955
        %v3427 = vmul.f32 %v3411, 0.8999955
        %v3428 = vmul.f32 %v3412, 0.8999955
        %v3429 = vmul.f32 %v3413, 0.8999955
        %v3430 = vmul.f32 %v3414, 0.8999955
        %v3431 = vmul.f32 %v3415, 0.8999955
        %v3432 = vmul.f32 %v3416, 0.8999955
        %v3433 = vadd.f32 %v3417, 0.05
        %v3434 = vadd.f32 %v3418, 0.05
        %v3435 = vadd.f32 %v3419, 0.05
        %v3436 = vadd.f32 %v3420, 0.05
        %v3437 = vadd.f32 %v3421, 0.05
        %v3438 = vadd.f32 %v3422, 0.05
        %v3439 = vadd.f32 %v3423, 0.05
        %v3440 = vadd.f32 %v3424, 0.05
        %v3441 = vadd.f32 %v3425, 0.05
        %v3442 = vadd.f32 %v3426, 0.05
        %v3443 = vadd.f32 %v3427, 0.05
        %v3444 = vadd.f32 %v3428, 0.05
        %v3445 = vadd.f32 %v3429, 0.05
        %v3446 = vadd.f32 %v3430, 0.05
        %v3447 = vadd.f32 %v3431, 0.05
        %v3448 = vadd.f32 %v3432, 0.05
        %v3449 = vmax.f32 %v3433, 0.0
        %v3450 = vmax.f32 %v3434, 0.0
        %v3451 = vmax.f32 %v3435, 0.0
        %v3452 = vmax.f32 %v3436, 0.0
        %v3453 = vmax.f32 %v3437, 0.0
        %v3454 = vmax.f32 %v3438, 0.0
        %v3455 = vmax.f32 %v3439, 0.0
        %v3456 = vmax.f32 %v3440, 0.0
        %v3457 = vmax.f32 %v3441, 0.0
        %v3458 = vmax.f32 %v3442, 0.0
        %v3459 = vmax.f32 %v3443, 0.0
        %v3460 = vmax.f32 %v3444, 0.0
        %v3461 = vmax.f32 %v3445, 0.0
        %v3462 = vmax.f32 %v3446, 0.0
        %v3463 = vmax.f32 %v3447, 0.0
        %v3464 = vmax.f32 %v3448, 0.0
        %v3465 = vadd.f32 %v3449, %v3321
        %v3466 = vadd.f32 %v3450, %v3322
        %v3467 = vadd.f32 %v3451, %v3323
        %v3468 = vadd.f32 %v3452, %v3324
        %v3469 = vadd.f32 %v3453, %v3325
        %v3470 = vadd.f32 %v3454, %v3326
        %v3471 = vadd.f32 %v3455, %v3327
        %v3472 = vadd.f32 %v3456, %v3328
        %v3473 = vadd.f32 %v3457, %v3329
        %v3474 = vadd.f32 %v3458, %v3330
        %v3475 = vadd.f32 %v3459, %v3331
        %v3476 = vadd.f32 %v3460, %v3332
        %v3477 = vadd.f32 %v3461, %v3333
        %v3478 = vadd.f32 %v3462, %v3334
        %v3479 = vadd.f32 %v3463, %v3335
        %v3480 = vadd.f32 %v3464, %v3336
        %v3481 = vmul.f32 %v3465, 0.9
        %v3482 = vmul.f32 %v3466, 0.9
        %v3483 = vmul.f32 %v3467, 0.9
        %v3484 = vmul.f32 %v3468, 0.9
        %v3485 = vmul.f32 %v3469, 0.9
        %v3486 = vmul.f32 %v3470, 0.9
        %v3487 = vmul.f32 %v3471, 0.9
        %v3488 = vmul.f32 %v3472, 0.9
        %v3489 = vmul.f32 %v3473, 0.9
        %v3490 = vmul.f32 %v3474, 0.9
        %v3491 = vmul.f32 %v3475, 0.9
        %v3492 = vmul.f32 %v3476, 0.9
        %v3493 = vmul.f32 %v3477, 0.9
        %v3494 = vmul.f32 %v3478, 0.9
        %v3495 = vmul.f32 %v3479, 0.9
        %v3496 = vmul.f32 %v3480, 0.9
        %v3497 = vadd.f32 %v3481, %v3385
        %v3498 = vadd.f32 %v3482, %v3386
        %v3499 = vadd.f32 %v3483, %v3387
        %v3500 = vadd.f32 %v3484, %v3388
        %v3501 = vadd.f32 %v3485, %v3389
        %v3502 = vadd.f32 %v3486, %v3390
        %v3503 = vadd.f32 %v3487, %v3391
        %v3504 = vadd.f32 %v3488, %v3392
        %v3505 = vadd.f32 %v3489, %v3393
        %v3506 = vadd.f32 %v3490, %v3394
        %v3507 = vadd.f32 %v3491, %v3395
        %v3508 = vadd.f32 %v3492, %v3396
        %v3509 = vadd.f32 %v3493, %v3397
        %v3510 = vadd.f32 %v3494, %v3398
        %v3511 = vadd.f32 %v3495, %v3399
        %v3512 = vadd.f32 %v3496, %v3400
        %vm3513 = vcmp.ne.f32.partialorder %v3497, %v3497
        %vm3514 = vcmp.ne.f32.partialorder %v3498, %v3498
        %vm3515 = vcmp.ne.f32.partialorder %v3499, %v3499
        %vm3516 = vcmp.ne.f32.partialorder %v3500, %v3500
        %vm3517 = vcmp.ne.f32.partialorder %v3501, %v3501
        %vm3518 = vcmp.ne.f32.partialorder %v3502, %v3502
        %vm3519 = vcmp.ne.f32.partialorder %v3503, %v3503
        %vm3520 = vcmp.ne.f32.partialorder %v3504, %v3504
        %vm3521 = vcmp.ne.f32.partialorder %v3505, %v3505
        %vm3522 = vcmp.ne.f32.partialorder %v3506, %v3506
        %vm3523 = vcmp.ne.f32.partialorder %v3507, %v3507
        %vm3524 = vcmp.ne.f32.partialorder %v3508, %v3508
        %vm3525 = vcmp.ne.f32.partialorder %v3509, %v3509
        %vm3526 = vcmp.ne.f32.partialorder %v3510, %v3510
        %vm3527 = vcmp.ne.f32.partialorder %v3511, %v3511
        %vm3528 = vcmp.ne.f32.partialorder %v3512, %v3512
        %v3529 = vsel %vm3513, 0.0, %v3497
        %v3530 = vsel %vm3514, 0.0, %v3498
        %v3531 = vsel %vm3515, 0.0, %v3499
        %v3532 = vsel %vm3516, 0.0, %v3500
        %v3533 = vsel %vm3517, 0.0, %v3501
        %v3534 = vsel %vm3518, 0.0, %v3502
        %v3535 = vsel %vm3519, 0.0, %v3503
        %v3536 = vsel %vm3520, 0.0, %v3504
        %v3537 = vsel %vm3521, 0.0, %v3505
        %v3538 = vsel %vm3522, 0.0, %v3506
        %v3539 = vsel %vm3523, 0.0, %v3507
        %v3540 = vsel %vm3524, 0.0, %v3508
        %v3541 = vsel %vm3525, 0.0, %v3509
        %v3542 = vsel %vm3526, 0.0, %v3510
        %v3543 = vsel %vm3527, 0.0, %v3511
        %v3544 = vsel %vm3528, 0.0, %v3512
        %v3545 = vpack.c.bf16 %v3530, %v3529
        %v3546 = vpack.c.bf16 %v3532, %v3531
        %v3547 = vpack.c.bf16 %v3534, %v3533
        %v3548 = vpack.c.bf16 %v3536, %v3535
        %v3549 = vpack.c.bf16 %v3538, %v3537
        %v3550 = vpack.c.bf16 %v3540, %v3539
        %v3551 = vpack.c.bf16 %v3542, %v3541
        %v3552 = vpack.c.bf16 %v3544, %v3543
        %v3553 = vld [vmem:[%s5] sm:$0xf]
        %v3554 = vld [vmem:[%s5 + $0x4] sm:$0xf]
        %v3555 = vld [vmem:[%s5 + $0x8] sm:$0xf]
        %v3556 = vld [vmem:[%s5 + $0xc] sm:$0xf]
        %v3557 = vld [vmem:[%s6] sm:$0x1]
        %v3559 = vlaneseq
        %v3560 = vshrl.u32 %v3559, 7
        %v3561 = vsub.s32 0, %v3560
        %v3562 = vrot.slane %v3557, %v3561
        %v3568 = vunpack.c.l.b16 %v3553
        %v3569 = vunpack.c.l.b16 %v3554
        %v3570 = vunpack.c.l.b16 %v3555
        %v3571 = vunpack.c.l.b16 %v3556
        %v3572 = vpack.c.b16 %v3569, %v3568
        %v3573 = vpack.c.b16 %v3571, %v3570
        %v3577 = vsel %vm2872, %v3545, 0
        %v3580 = vsel %vm2872, %v3546, 0
        %v3583 = vsel %vm2872, %v3547, 0
        %v3586 = vsel %vm2872, %v3548, 0
        %v3589 = vsel %vm2872, %v3549, 0
        %v3592 = vsel %vm2872, %v3550, 0
        %v3595 = vsel %vm2872, %v3551, 0
        %v3598 = vsel %vm2872, %v3552, 0
        %3600 = vmatprep.subr.bf16.mxu0 0
        %3601 = vmatpush1.bf16.msra.mxu0 %v3572
        %3602 = vmatprep.subr.bf16.mxu0 0
        %3603 = vmatpush1.bf16.msra.mxu0 %v3573
        %3604 = vmatprep.subr.bf16.mxu0 0
        %3605 = vmatpush1.bf16.msra.mxu0 0
        %3606 = vmatprep.subr.bf16.mxu0 0
        %3607 = vmatpush1.bf16.msra.mxu0 0
        %3608 = vmatprep.subr.bf16.mxu0 0
        %3609 = vmatpush1.bf16.msra.mxu0 0
        %3610 = vmatprep.subr.bf16.mxu0 0
        %3611 = vmatpush1.bf16.msra.mxu0 0
        %3612 = vmatprep.subr.bf16.mxu0 0
        %3613 = vmatpush1.bf16.msra.mxu0 0
        %3614 = vmatprep.subr.bf16.mxu0 0
        %3615 = vmatpush1.bf16.msra.mxu0 0
        %3616 = vmatprep.subr.bf16.mxu0 0
        %3617 = vmatpush1.bf16.msra.mxu0 0
        %3618 = vmatprep.subr.bf16.mxu0 0
        %3619 = vmatpush1.bf16.msra.mxu0 0
        %3620 = vmatprep.subr.bf16.mxu0 0
        %3621 = vmatpush1.bf16.msra.mxu0 0
        %3622 = vmatprep.subr.bf16.mxu0 0
        %3623 = vmatpush1.bf16.msra.mxu0 0
        %3624 = vmatprep.subr.bf16.mxu0 0
        %3625 = vmatpush1.bf16.msra.mxu0 0
        %3626 = vmatprep.subr.bf16.mxu0 0
        %3627 = vmatpush1.bf16.msra.mxu0 0
        %3628 = vmatprep.subr.bf16.mxu0 0
        %3629 = vmatpush1.bf16.msra.mxu0 0
        %3630 = vmatprep.subr.bf16.mxu0 0
        %3631 = vmatpush1.bf16.msra.mxu0 0
        %3632 = vmatprep.mubr.bf16.mxu0 0
        %3633 = vmatmul.mubr.bf16.gmra.mrb[0].mxu0 %v3577
        %v3634 = vpop.f32.mrb[0].mxu0
        %v3635 = vadd.f32 %v3562, %v3634
        %v3636 = vpop.f32.mrb[0].mxu0
        %v3637 = vpop.f32.mrb[0].mxu0
        %v3638 = vadd.f32 %v3562, %v3637
        %v3639 = vpop.f32.mrb[0].mxu0
        %3640 = vmatprep.mubr.bf16.mxu0 0
        %3641 = vmatmul.mubr.bf16.gmra.mrb[0].mxu0 %v3580
        %v3642 = vpop.f32.mrb[0].mxu0
        %v3643 = vadd.f32 %v3562, %v3642
        %v3644 = vpop.f32.mrb[0].mxu0
        %v3645 = vpop.f32.mrb[0].mxu0
        %v3646 = vadd.f32 %v3562, %v3645
        %v3647 = vpop.f32.mrb[0].mxu0
        %3648 = vmatprep.mubr.bf16.mxu0 0
        %3649 = vmatmul.mubr.bf16.gmra.mrb[0].mxu0 %v3583
        %v3650 = vpop.f32.mrb[0].mxu0
        %v3651 = vadd.f32 %v3562, %v3650
        %v3652 = vpop.f32.mrb[0].mxu0
        %v3653 = vpop.f32.mrb[0].mxu0
        %v3654 = vadd.f32 %v3562, %v3653
        %v3655 = vpop.f32.mrb[0].mxu0
        %3656 = vmatprep.mubr.bf16.mxu0 0
        %3657 = vmatmul.mubr.bf16.gmra.mrb[0].mxu0 %v3586
        %v3658 = vpop.f32.mrb[0].mxu0
        %v3659 = vadd.f32 %v3562, %v3658
        %v3660 = vpop.f32.mrb[0].mxu0
        %v3661 = vpop.f32.mrb[0].mxu0
        %v3662 = vadd.f32 %v3562, %v3661
        %v3663 = vpop.f32.mrb[0].mxu0
        %3664 = vmatprep.mubr.bf16.mxu0 0
        %3665 = vmatmul.mubr.bf16.gmra.mrb[0].mxu0 %v3589
        %v3666 = vpop.f32.mrb[0].mxu0
        %v3667 = vadd.f32 %v3562, %v3666
        %v3668 = vpop.f32.mrb[0].mxu0
        %v3669 = vpop.f32.mrb[0].mxu0
        %v3670 = vadd.f32 %v3562, %v3669
        %v3671 = vpop.f32.mrb[0].mxu0
        %3672 = vmatprep.mubr.bf16.mxu0 0
        %3673 = vmatmul.mubr.bf16.gmra.mrb[0].mxu0 %v3592
        %v3674 = vpop.f32.mrb[0].mxu0
        %v3675 = vadd.f32 %v3562, %v3674
        %v3676 = vpop.f32.mrb[0].mxu0
        %v3677 = vpop.f32.mrb[0].mxu0
        %v3678 = vadd.f32 %v3562, %v3677
        %v3679 = vpop.f32.mrb[0].mxu0
        %3680 = vmatprep.mubr.bf16.mxu0 0
        %3681 = vmatmul.mubr.bf16.gmra.mrb[0].mxu0 %v3595
        %v3682 = vpop.f32.mrb[0].mxu0
        %v3683 = vadd.f32 %v3562, %v3682
        %v3684 = vpop.f32.mrb[0].mxu0
        %v3685 = vpop.f32.mrb[0].mxu0
        %v3686 = vadd.f32 %v3562, %v3685
        %v3687 = vpop.f32.mrb[0].mxu0
        %3688 = vmatprep.mubr.bf16.mxu0 0
        %3689 = vmatmul.mubr.bf16.gmra.mrb[0].mxu0 %v3598
        %v3690 = vpop.f32.mrb[0].mxu0
        %v3691 = vadd.f32 %v3562, %v3690
        %v3692 = vpop.f32.mrb[0].mxu0
        %v3693 = vpop.f32.mrb[0].mxu0
        %v3694 = vadd.f32 %v3562, %v3693
        %v3695 = vpop.f32.mrb[0].mxu0
        %3696 = vdwg.mxu0
        %v3697 = vpack.c.bf16 %v3638, %v3635
        %v3698 = vpack.c.bf16 %v3646, %v3643
        %v3699 = vpack.c.bf16 %v3654, %v3651
        %v3700 = vpack.c.bf16 %v3662, %v3659
        %v3701 = vpack.c.bf16 %v3670, %v3667
        %v3702 = vpack.c.bf16 %v3678, %v3675
        %v3703 = vpack.c.bf16 %v3686, %v3683
        %v3704 = vpack.c.bf16 %v3694, %v3691
        %v3713 = vunpack.c.l.b16 %v3697
        %v3714 = vunpack.c.h.b16 %v3697
        %v3715 = vunpack.c.l.b16 %v3698
        %v3716 = vunpack.c.h.b16 %v3698
        %v3717 = vunpack.c.l.b16 %v3699
        %v3718 = vunpack.c.h.b16 %v3699
        %v3719 = vunpack.c.l.b16 %v3700
        %v3720 = vunpack.c.h.b16 %v3700
        %v3721 = vunpack.c.l.b16 %v3701
        %v3722 = vunpack.c.h.b16 %v3701
        %v3723 = vunpack.c.l.b16 %v3702
        %v3724 = vunpack.c.h.b16 %v3702
        %v3725 = vunpack.c.l.b16 %v3703
        %v3726 = vunpack.c.h.b16 %v3703
        %v3727 = vunpack.c.l.b16 %v3704
        %v3728 = vunpack.c.h.b16 %v3704
        %v3729 = vpack.c.b16 %v3713, %v3713
        %v3730 = vpack.c.b16 %v3714, %v3714
        %v3731 = vpack.c.b16 %v3715, %v3715
        %v3732 = vpack.c.b16 %v3716, %v3716
        %v3733 = vpack.c.b16 %v3717, %v3717
        %v3734 = vpack.c.b16 %v3718, %v3718
        %v3735 = vpack.c.b16 %v3719, %v3719
        %v3736 = vpack.c.b16 %v3720, %v3720
        %v3737 = vpack.c.b16 %v3721, %v3721
        %v3738 = vpack.c.b16 %v3722, %v3722
        %v3739 = vpack.c.b16 %v3723, %v3723
        %v3740 = vpack.c.b16 %v3724, %v3724
        %v3741 = vpack.c.b16 %v3725, %v3725
        %v3742 = vpack.c.b16 %v3726, %v3726
        %v3743 = vpack.c.b16 %v3727, %v3727
        %v3744 = vpack.c.b16 %v3728, %v3728
        %3761 = vst [vmem:[%s634] sm:$0xf] %v3729
        %3762 = vst [vmem:[%s634 + $0x4] sm:$0xf] %v3730
        %3763 = vst [vmem:[%s634 + $0x8] sm:$0xf] %v3731
        %3764 = vst [vmem:[%s634 + $0xc] sm:$0xf] %v3732
        %3765 = vst [vmem:[%s634 + $0x10] sm:$0xf] %v3733
        %3766 = vst [vmem:[%s634 + $0x14] sm:$0xf] %v3734
        %3767 = vst [vmem:[%s634 + $0x18] sm:$0xf] %v3735
        %3768 = vst [vmem:[%s634 + $0x1c] sm:$0xf] %v3736
        %3769 = vst [vmem:[%s634 + $0x20] sm:$0xf] %v3737
        %3770 = vst [vmem:[%s634 + $0x24] sm:$0xf] %v3738
        %3771 = vst [vmem:[%s634 + $0x28] sm:$0xf] %v3739
        %3772 = vst [vmem:[%s634 + $0x2c] sm:$0xf] %v3740
        %3773 = vst [vmem:[%s634 + $0x30] sm:$0xf] %v3741
        %3774 = vst [vmem:[%s634 + $0x34] sm:$0xf] %v3742
        %3775 = vst [vmem:[%s634 + $0x38] sm:$0xf] %v3743
        %3776 = vst [vmem:[%s634 + $0x3c] sm:$0xf] %v3744
        %s3777 = sand.u32 %s181, 1
        %s3778 = scalar_lea.sflag [#allocation7], %s3777
        %s3779 = sand.u32 %s181, 1
        %s3780 = smul.addr %s3779, 64
        %s3781 = scalar_lea.vmem [#allocation6], %s3780
        // Predicated region
        $region90: #{tpu_custom_call.1} parent=84 // pred_check
          %p3782 = pneg %p191
        $region91: #{tpu_custom_call.1} parent=84 // pred_check_branch
          %3784 = sbr.rel (%p3782) target = $region93
        $region92: #{tpu_custom_call.1} parent=84 // pred_region
          %s3785 = smul.u32 16, %s21
          %s3787 = ssub.s32 1024, 1024
          %3788 = vsyncadd %s3778, %s3787
          %s3789 = smul.addr %s3785, 64
          %s3790 = scalar_lea.hbm %s7, %s3789
          %s3791 = sshll.u32 %s3781, 4
          %s3792 = int_to_ptr.vmem [resolvable:$true] %s3791
          %3797 = dma.vmem_to_hbm [thread:$0]  %s3792, 1024, %s3790, %s3778, 64, 64, 4
        $region93: #{tpu_custom_call.1} parent=84 // pred_fallthru
          _
      $region85: #{tpu_custom_call.1} parent=5 // pred_fallthru
        _
      %p3798 = scmp.le.s32.totalorder 2, %s16
      // Predicated region
      $region94: #{tpu_custom_call.1} parent=5 // pred_check
        %p3799 = pneg %p3798
      $region95: #{tpu_custom_call.1} parent=5 // pred_check_branch
        %3801 = sbr.rel (%p3799) target = $region97
      $region96: #{tpu_custom_call.1} parent=5 // pred_region
        %s3802 = ssub.s32 %s16, 2
        // Predicated region
        $region98: #{tpu_custom_call.1} parent=96 // pred_check
          %p3803 = pneg %p197
        $region99: #{tpu_custom_call.1} parent=96 // pred_check_branch
          %3805 = sbr.rel (%p3803) target = $region101
        $region100: #{tpu_custom_call.1} parent=96 // pred_region
          %s3806 = sand.u32 %s182, 1
          %s3807 = scalar_lea.sflag [#allocation7], %s3806
          %s3808 = sand.u32 %s182, 1
          %s3809 = smul.addr %s3808, 64
          %s3810 = scalar_lea.vmem [#allocation6], %s3809
          %3811 = dma.done %s3807, 1024
        $region101: #{tpu_custom_call.1} parent=96 // pred_fallthru
          _
      $region97: #{tpu_custom_call.1} parent=5 // pred_fallthru
        _
    $region6: #{tpu_custom_call.1} parent=1 // loop_footer
      %s20 = sadd.s32 1, %s16
    $region7: #{tpu_custom_call.1} parent=1 // loop_footer_branch
      %15 = sbr.rel target = $region3
    $region8: #{tpu_custom_call.1} parent=1 // loop_exit
      _
    %3812 = vsyncpa [#allocation7], 1
    %s3813 = scalar_lea.sflag [#allocation7], 1
    %3814 = vsyncpa %s3813, 1

</llo_original>
